<compile_context>
chip_gen: v7x
topology: tpu7x:2x2x1
jax: 0.10.0
libtpu: 0.0.40
codegen_flags: <defaults>
</compile_context>

<pallas_src>
import math

import numpy as np
import jax
import jax.numpy as jnp
from jax.experimental import pallas as pl
from jax.experimental.pallas import tpu as pltpu


# ----------------------------------------------------------------------------- kernel
def _ps_upsample_kernel(x_ref, w_ref, b_ref, g_ref, o_ref):
    # x_ref: (1, C_in, ts)      input tile (ts spatial positions = whole rows)
    # w_ref: (4, C_out, C_in)   conv weight grouped by pixel-shuffle offset q = 2*r0 + r1
    # b_ref: (4, C_out, 1)      bias (f32)
    # g_ref: (4, ts, 4*ts)      one-hot scatter matrices (f32)
    # o_ref: (1, C_out, 4*ts)   output tile, flat over the upsampled (2H, 2W) layout
    x = x_ref[0]                                                   # (C_in, ts)
    acc = None
    for q in range(4):
        # 1x1 conv for this pixel-shuffle offset, f32 accumulate on the MXU.
        y = jnp.dot(w_ref[q], x, preferred_element_type=jnp.float32)   # (C_out, ts)
        y = y + b_ref[q]
        # SiLU in f32: y * 1/(1 + exp(-y)); exp + approx reciprocal stay on the EUP.
        y = y * pl.reciprocal(1.0 + jnp.exp(-y), approx=True)
        # Fused PixelShuffle: scatter into the upsampled layout via one-hot matmul
        # (MXU is idle in this mem-bound kernel, stores stay lane-dense).
        contrib = jnp.dot(y, g_ref[q], preferred_element_type=jnp.float32)
        acc = contrib if acc is None else acc + contrib
    # Single contiguous, lane-dense store; narrow cast only here.
    o_ref[0] = acc.astype(o_ref.dtype)


# ----------------------------------------------------------------------------- host helpers
def _pick_rows_per_tile(H, W, max_positions=256):
    """Rows per spatial tile: th must divide H; prefer th*W a multiple of 128."""
    cap = max(1, min(H, max_positions // max(W, 1)))
    for th in range(cap, 0, -1):
        if H % th == 0 and (th * W) % 128 == 0:
            return th
    return H  # fall back to whole-image block (== full array dim, always legal)


def _scatter_matrices(ts, W):
    """G[q, j, m] = 1 iff input tile position j (= h*W + w) lands at output tile
    position m for pixel-shuffle offset q = 2*r0 + r1 (r0: row, r1: col)."""
    j = np.arange(ts)
    h, w = j // W, j % W
    G = np.zeros((4, ts, 4 * ts), np.float32)
    for r0 in range(2):
        for r1 in range(2):
            q = 2 * r0 + r1
            m = h * (4 * W) + r0 * (2 * W) + 2 * w + r1
            G[q, j, m] = 1.0
    return jnp.asarray(G)


def make_params(key, dim, dim_out=None):
    """Replicates PixelShuffleUpsample.__init__ / init_conv_ semantics."""
    dim_out = dim if dim_out is None else dim_out
    fan_in = dim  # i * h * w with h = w = 1
    bound = math.sqrt(2.0) * math.sqrt(3.0 / fan_in)   # kaiming_uniform_
    w_base = jax.random.uniform(
        key, (dim_out, dim), minval=-bound, maxval=bound, dtype=jnp.float32
    )
    w_full = jnp.repeat(w_base, 4, axis=0)             # 'o ... -> (o 4) ...'
    bias = jnp.zeros((4 * dim_out,), dtype=jnp.float32)
    return w_full, bias


# ----------------------------------------------------------------------------- forward
def pixel_shuffle_upsample(x_nchw, w_full, bias, *, max_tile_positions=256):
    """x: (B, C_in, H, W), w_full: (4*C_out, C_in), bias: (4*C_out,)
       -> (B, C_out, 2H, 2W), same dtype as x."""
    B, C_in, H, W = x_nchw.shape
    N = w_full.shape[0]
    assert N % 4 == 0, "conv must produce 4*C_out channels"
    C_out = N // 4
    dtype = x_nchw.dtype

    th = _pick_rows_per_tile(H, W, max_tile_positions)
    ts = th * W
    n_tiles = H // th

    # Free reshape: NCHW is already contiguous as (B, C_in, H*W).
    x3 = x_nchw.reshape(B, C_in, H * W)

    # Regroup weight/bias by pixel-shuffle offset q:
    #   conv output channel n = c*4 + q   ->   w_q[q, c, :] = w_full[c*4 + q, :]
    w_q = jnp.transpose(w_full.reshape(C_out, 4, C_in), (1, 0, 2)).astype(dtype)
    b_q = jnp.transpose(bias.reshape(C_out, 4), (1, 0)).reshape(4, C_out, 1)
    b_q = b_q.astype(jnp.float32)

    G = _scatter_matrices(ts, W)

    # VMEM budget: double-buffered streamed blocks + (conservatively doubled) constants.
    itm = x_nchw.dtype.itemsize
    est = (2 * (C_in * ts + C_out * 4 * ts) * itm
           + 2 * (4 * C_out * C_in * itm + 4 * C_out * 4 + 4 * ts * 4 * ts * 4))
    vmem_limit = int(min(max(2 * est, 32 << 20), 56 << 20))

    out3 = pl.pallas_call(
        _ps_upsample_kernel,
        out_shape=jax.ShapeDtypeStruct((B, C_out, 4 * H * W), dtype),
        grid_spec=pltpu.PrefetchScalarGridSpec(
            num_scalar_prefetch=0,
            grid=(B, n_tiles),
            in_specs=[
                pl.BlockSpec((1, C_in, ts), lambda b, t: (b, 0, t)),
                pl.BlockSpec((4, C_out, C_in), lambda b, t: (0, 0, 0)),
                pl.BlockSpec((4, C_out, 1), lambda b, t: (0, 0, 0)),
                pl.BlockSpec((4, ts, 4 * ts), lambda b, t: (0, 0, 0)),
            ],
            out_specs=pl.BlockSpec((1, C_out, 4 * ts), lambda b, t: (b, 0, t)),
        ),
        compiler_params=pltpu.CompilerParams(
            dimension_semantics=("parallel", "parallel"),
            vmem_limit_bytes=vmem_limit,
        ),
    )(x3, w_q, b_q, G)

    # Free reshape: flat upsampled spatial -> (2H, 2W).
    return out3.reshape(B, C_out, 2 * H, 2 * W)


# ----------------------------------------------------------------------------- reference
def _reference(x_nchw, w_full, bias):
    """Pure-JAX reference (conv 1x1 -> SiLU -> PixelShuffle(2))."""
    B, C_in, H, W = x_nchw.shape
    N = w_full.shape[0]
    C_out = N // 4
    y = jnp.einsum("bchw,oc->bohw", x_nchw, w_full) + bias[None, :, None, None]
    y = y * jax.nn.sigmoid(y)
    y = y.reshape(B, C_out, 2, 2, H, W)
    y = jnp.transpose(y, (0, 1, 4, 2, 5, 3))
    return y.reshape(B, C_out, 2 * H, 2 * W)


# ----------------------------------------------------------------------------- test
if __name__ == "__main__":
    key = jax.random.PRNGKey(0)
    k_w, k_x = jax.random.split(key)

    B, dim, H, W = 2, 4, 16, 16
    dim_out = 4

    x = jax.random.normal(k_x, (B, dim, H, W), dtype=jnp.float32)
    w_full, bias = make_params(k_w, dim, dim_out)

    out = jax.block_until_ready(pixel_shuffle_upsample(x, w_full, bias))
    ref = _reference(x, w_full, bias)

    assert out.shape == (B, dim_out, 2 * H, 2 * W), out.shape
    assert out.dtype == x.dtype
    # approx reciprocal in the SiLU -> allow ~1e-3-level deviation
    assert jnp.allclose(out, ref, atol=1e-2, rtol=1e-2), \
        float(jnp.max(jnp.abs(out - ref)))

    # bf16 I/O path: native-dtype output, f32 accumulate/SiLU inside.
    xb = x.astype(jnp.bfloat16)
    wb = w_full.astype(jnp.bfloat16)
    outb = jax.block_until_ready(pixel_shuffle_upsample(xb, wb, bias))
    refb = _reference(xb.astype(jnp.float32), wb.astype(jnp.float32), bias)
    assert outb.dtype == jnp.bfloat16
    assert outb.shape == (B, dim_out, 2 * H, 2 * W)
    assert jnp.allclose(outb.astype(jnp.float32), refb, atol=0.1, rtol=0.1)

    print("KERNEL_OK")
</pallas_src>

<mosaic_0001>
module attributes {stable_mosaic.version = 11 : i64} {
  func.func @_ps_upsample_kernel(%arg0: i32, %arg1: i32, %arg2: memref<1x4x256xf32, #tpu.memory_space<vmem>>, %arg3: memref<4x4x4xf32, #tpu.memory_space<vmem>>, %arg4: memref<4x4x1xf32, #tpu.memory_space<vmem>>, %arg5: memref<4x256x1024xf32, #tpu.memory_space<vmem>>, %arg6: memref<1x4x1024xf32, #tpu.memory_space<vmem>>) attributes {dimension_semantics = [#tpu.dimension_semantics<parallel>, #tpu.dimension_semantics<parallel>], iteration_bounds = array<i64: 2, 1>, scalar_prefetch = 0 : i64, scratch_operands = 0 : i64, tpu.core_type = #tpu.core_type<tc>, window_params = [{transform_indices = @transform_0, window_bounds = array<i64: 1, 4, 256>}, {pipeline_mode = #tpu.pipeline_mode<synchronous>, transform_indices = @transform_1, window_bounds = array<i64: 4, 4, 4>}, {pipeline_mode = #tpu.pipeline_mode<synchronous>, transform_indices = @transform_2, window_bounds = array<i64: 4, 4, 1>}, {pipeline_mode = #tpu.pipeline_mode<synchronous>, transform_indices = @transform_3, window_bounds = array<i64: 4, 256, 1024>}, {transform_indices = @transform_4, window_bounds = array<i64: 1, 4, 1024>}]} {
    %c0 = arith.constant 0 : index
    %c0_0 = arith.constant 0 : index
    %c0_1 = arith.constant 0 : index
    %0 = vector.load %arg2[%c0, %c0_0, %c0_1] : memref<1x4x256xf32, #tpu.memory_space<vmem>>, vector<1x4x256xf32>
    %1 = vector.shape_cast %0 : vector<1x4x256xf32> to vector<4x256xf32>
    %c0_2 = arith.constant 0 : index
    %c0_3 = arith.constant 0 : index
    %c0_4 = arith.constant 0 : index
    %2 = vector.load %arg3[%c0_2, %c0_3, %c0_4] : memref<4x4x4xf32, #tpu.memory_space<vmem>>, vector<1x4x4xf32>
    %3 = vector.shape_cast %2 : vector<1x4x4xf32> to vector<4x4xf32>
    %cst = arith.constant dense<0.000000e+00> : vector<4x256xf32>
    %4 = tpu.matmul %3, %1, %cst {dimension_numbers = #tpu.dot_dimension_numbers<[1], [0], [0], [1], [0, 0, 1, 1], [], []>} : vector<4x4xf32>, vector<4x256xf32>, vector<4x256xf32> -> vector<4x256xf32>
    %c0_5 = arith.constant 0 : index
    %c0_6 = arith.constant 0 : index
    %c0_7 = arith.constant 0 : index
    %5 = vector.load %arg4[%c0_5, %c0_6, %c0_7] : memref<4x4x1xf32, #tpu.memory_space<vmem>>, vector<1x4x1xf32>
    %6 = vector.shape_cast %5 : vector<1x4x1xf32> to vector<4x1xf32>
    %7 = vector.broadcast %6 : vector<4x1xf32> to vector<4x256xf32>
    %8 = arith.addf %4, %7 : vector<4x256xf32>
    %cst_8 = arith.constant 0.000000e+00 : f32
    %9 = vector.broadcast %cst_8 : f32 to vector<4x256xf32>
    %10 = arith.subf %9, %8 : vector<4x256xf32>
    %11 = math.exp %10 : vector<4x256xf32>
    %cst_9 = arith.constant 1.000000e+00 : f32
    %12 = vector.broadcast %cst_9 : f32 to vector<4x256xf32>
    %13 = arith.addf %12, %11 : vector<4x256xf32>
    %14 = tpu.reciprocal %13 {approx = true} : vector<4x256xf32> -> vector<4x256xf32>
    %15 = arith.mulf %8, %14 : vector<4x256xf32>
    %c0_10 = arith.constant 0 : index
    %c0_11 = arith.constant 0 : index
    %c0_12 = arith.constant 0 : index
    %16 = vector.load %arg5[%c0_10, %c0_11, %c0_12] : memref<4x256x1024xf32, #tpu.memory_space<vmem>>, vector<1x256x1024xf32>
    %17 = vector.shape_cast %16 : vector<1x256x1024xf32> to vector<256x1024xf32>
    %cst_13 = arith.constant dense<0.000000e+00> : vector<4x1024xf32>
    %18 = tpu.matmul %15, %17, %cst_13 {dimension_numbers = #tpu.dot_dimension_numbers<[1], [0], [0], [1], [0, 0, 1, 1], [], []>} : vector<4x256xf32>, vector<256x1024xf32>, vector<4x1024xf32> -> vector<4x1024xf32>
    %c1 = arith.constant 1 : index
    %c0_14 = arith.constant 0 : index
    %c0_15 = arith.constant 0 : index
    %19 = vector.load %arg3[%c1, %c0_14, %c0_15] : memref<4x4x4xf32, #tpu.memory_space<vmem>>, vector<1x4x4xf32>
    %20 = vector.shape_cast %19 : vector<1x4x4xf32> to vector<4x4xf32>
    %cst_16 = arith.constant dense<0.000000e+00> : vector<4x256xf32>
    %21 = tpu.matmul %20, %1, %cst_16 {dimension_numbers = #tpu.dot_dimension_numbers<[1], [0], [0], [1], [0, 0, 1, 1], [], []>} : vector<4x4xf32>, vector<4x256xf32>, vector<4x256xf32> -> vector<4x256xf32>
    %c1_17 = arith.constant 1 : index
    %c0_18 = arith.constant 0 : index
    %c0_19 = arith.constant 0 : index
    %22 = vector.load %arg4[%c1_17, %c0_18, %c0_19] : memref<4x4x1xf32, #tpu.memory_space<vmem>>, vector<1x4x1xf32>
    %23 = vector.shape_cast %22 : vector<1x4x1xf32> to vector<4x1xf32>
    %24 = vector.broadcast %23 : vector<4x1xf32> to vector<4x256xf32>
    %25 = arith.addf %21, %24 : vector<4x256xf32>
    %cst_20 = arith.constant 0.000000e+00 : f32
    %26 = vector.broadcast %cst_20 : f32 to vector<4x256xf32>
    %27 = arith.subf %26, %25 : vector<4x256xf32>
    %28 = math.exp %27 : vector<4x256xf32>
    %cst_21 = arith.constant 1.000000e+00 : f32
    %29 = vector.broadcast %cst_21 : f32 to vector<4x256xf32>
    %30 = arith.addf %29, %28 : vector<4x256xf32>
    %31 = tpu.reciprocal %30 {approx = true} : vector<4x256xf32> -> vector<4x256xf32>
    %32 = arith.mulf %25, %31 : vector<4x256xf32>
    %c1_22 = arith.constant 1 : index
    %c0_23 = arith.constant 0 : index
    %c0_24 = arith.constant 0 : index
    %33 = vector.load %arg5[%c1_22, %c0_23, %c0_24] : memref<4x256x1024xf32, #tpu.memory_space<vmem>>, vector<1x256x1024xf32>
    %34 = vector.shape_cast %33 : vector<1x256x1024xf32> to vector<256x1024xf32>
    %cst_25 = arith.constant dense<0.000000e+00> : vector<4x1024xf32>
    %35 = tpu.matmul %32, %34, %cst_25 {dimension_numbers = #tpu.dot_dimension_numbers<[1], [0], [0], [1], [0, 0, 1, 1], [], []>} : vector<4x256xf32>, vector<256x1024xf32>, vector<4x1024xf32> -> vector<4x1024xf32>
    %36 = arith.addf %18, %35 : vector<4x1024xf32>
    %c2 = arith.constant 2 : index
    %c0_26 = arith.constant 0 : index
    %c0_27 = arith.constant 0 : index
    %37 = vector.load %arg3[%c2, %c0_26, %c0_27] : memref<4x4x4xf32, #tpu.memory_space<vmem>>, vector<1x4x4xf32>
    %38 = vector.shape_cast %37 : vector<1x4x4xf32> to vector<4x4xf32>
    %cst_28 = arith.constant dense<0.000000e+00> : vector<4x256xf32>
    %39 = tpu.matmul %38, %1, %cst_28 {dimension_numbers = #tpu.dot_dimension_numbers<[1], [0], [0], [1], [0, 0, 1, 1], [], []>} : vector<4x4xf32>, vector<4x256xf32>, vector<4x256xf32> -> vector<4x256xf32>
    %c2_29 = arith.constant 2 : index
    %c0_30 = arith.constant 0 : index
    %c0_31 = arith.constant 0 : index
    %40 = vector.load %arg4[%c2_29, %c0_30, %c0_31] : memref<4x4x1xf32, #tpu.memory_space<vmem>>, vector<1x4x1xf32>
    %41 = vector.shape_cast %40 : vector<1x4x1xf32> to vector<4x1xf32>
    %42 = vector.broadcast %41 : vector<4x1xf32> to vector<4x256xf32>
    %43 = arith.addf %39, %42 : vector<4x256xf32>
    %cst_32 = arith.constant 0.000000e+00 : f32
    %44 = vector.broadcast %cst_32 : f32 to vector<4x256xf32>
    %45 = arith.subf %44, %43 : vector<4x256xf32>
    %46 = math.exp %45 : vector<4x256xf32>
    %cst_33 = arith.constant 1.000000e+00 : f32
    %47 = vector.broadcast %cst_33 : f32 to vector<4x256xf32>
    %48 = arith.addf %47, %46 : vector<4x256xf32>
    %49 = tpu.reciprocal %48 {approx = true} : vector<4x256xf32> -> vector<4x256xf32>
    %50 = arith.mulf %43, %49 : vector<4x256xf32>
    %c2_34 = arith.constant 2 : index
    %c0_35 = arith.constant 0 : index
    %c0_36 = arith.constant 0 : index
    %51 = vector.load %arg5[%c2_34, %c0_35, %c0_36] : memref<4x256x1024xf32, #tpu.memory_space<vmem>>, vector<1x256x1024xf32>
    %52 = vector.shape_cast %51 : vector<1x256x1024xf32> to vector<256x1024xf32>
    %cst_37 = arith.constant dense<0.000000e+00> : vector<4x1024xf32>
    %53 = tpu.matmul %50, %52, %cst_37 {dimension_numbers = #tpu.dot_dimension_numbers<[1], [0], [0], [1], [0, 0, 1, 1], [], []>} : vector<4x256xf32>, vector<256x1024xf32>, vector<4x1024xf32> -> vector<4x1024xf32>
    %54 = arith.addf %36, %53 : vector<4x1024xf32>
    %c3 = arith.constant 3 : index
    %c0_38 = arith.constant 0 : index
    %c0_39 = arith.constant 0 : index
    %55 = vector.load %arg3[%c3, %c0_38, %c0_39] : memref<4x4x4xf32, #tpu.memory_space<vmem>>, vector<1x4x4xf32>
    %56 = vector.shape_cast %55 : vector<1x4x4xf32> to vector<4x4xf32>
    %cst_40 = arith.constant dense<0.000000e+00> : vector<4x256xf32>
    %57 = tpu.matmul %56, %1, %cst_40 {dimension_numbers = #tpu.dot_dimension_numbers<[1], [0], [0], [1], [0, 0, 1, 1], [], []>} : vector<4x4xf32>, vector<4x256xf32>, vector<4x256xf32> -> vector<4x256xf32>
    %c3_41 = arith.constant 3 : index
    %c0_42 = arith.constant 0 : index
    %c0_43 = arith.constant 0 : index
    %58 = vector.load %arg4[%c3_41, %c0_42, %c0_43] : memref<4x4x1xf32, #tpu.memory_space<vmem>>, vector<1x4x1xf32>
    %59 = vector.shape_cast %58 : vector<1x4x1xf32> to vector<4x1xf32>
    %60 = vector.broadcast %59 : vector<4x1xf32> to vector<4x256xf32>
    %61 = arith.addf %57, %60 : vector<4x256xf32>
    %cst_44 = arith.constant 0.000000e+00 : f32
    %62 = vector.broadcast %cst_44 : f32 to vector<4x256xf32>
    %63 = arith.subf %62, %61 : vector<4x256xf32>
    %64 = math.exp %63 : vector<4x256xf32>
    %cst_45 = arith.constant 1.000000e+00 : f32
    %65 = vector.broadcast %cst_45 : f32 to vector<4x256xf32>
    %66 = arith.addf %65, %64 : vector<4x256xf32>
    %67 = tpu.reciprocal %66 {approx = true} : vector<4x256xf32> -> vector<4x256xf32>
    %68 = arith.mulf %61, %67 : vector<4x256xf32>
    %c3_46 = arith.constant 3 : index
    %c0_47 = arith.constant 0 : index
    %c0_48 = arith.constant 0 : index
    %69 = vector.load %arg5[%c3_46, %c0_47, %c0_48] : memref<4x256x1024xf32, #tpu.memory_space<vmem>>, vector<1x256x1024xf32>
    %70 = vector.shape_cast %69 : vector<1x256x1024xf32> to vector<256x1024xf32>
    %cst_49 = arith.constant dense<0.000000e+00> : vector<4x1024xf32>
    %71 = tpu.matmul %68, %70, %cst_49 {dimension_numbers = #tpu.dot_dimension_numbers<[1], [0], [0], [1], [0, 0, 1, 1], [], []>} : vector<4x256xf32>, vector<256x1024xf32>, vector<4x1024xf32> -> vector<4x1024xf32>
    %72 = arith.addf %54, %71 : vector<4x1024xf32>
    %c0_50 = arith.constant 0 : index
    %c0_51 = arith.constant 0 : index
    %c0_52 = arith.constant 0 : index
    %73 = vector.load %arg6[%c0_50, %c0_51, %c0_52] : memref<1x4x1024xf32, #tpu.memory_space<vmem>>, vector<1x4x1024xf32>
    %74 = vector.shape_cast %73 : vector<1x4x1024xf32> to vector<4x1024xf32>
    %75 = vector.shape_cast %72 : vector<4x1024xf32> to vector<1x4x1024xf32>
    tpu.vector_store %arg6[%c0_50, %c0_51, %c0_52], %75 {strides = array<i32>} : memref<1x4x1024xf32, #tpu.memory_space<vmem>>, vector<1x4x1024xf32>,
    return
  }
  func.func @transform_0(%arg0: i32, %arg1: i32) -> (i32, i32, i32) {
    %c0_i32 = arith.constant 0 : i32
    %c0_i32_0 = arith.constant 0 : i32
    return %arg0, %c0_i32, %arg1 : i32, i32, i32
  }
  func.func @transform_1(%arg0: i32, %arg1: i32) -> (i32, i32, i32) {
    %c0_i32 = arith.constant 0 : i32
    %c0_i32_0 = arith.constant 0 : i32
    %c0_i32_1 = arith.constant 0 : i32
    %c0_i32_2 = arith.constant 0 : i32
    return %c0_i32, %c0_i32_0, %c0_i32_1 : i32, i32, i32
  }
  func.func @transform_2(%arg0: i32, %arg1: i32) -> (i32, i32, i32) {
    %c0_i32 = arith.constant 0 : i32
    %c0_i32_0 = arith.constant 0 : i32
    %c0_i32_1 = arith.constant 0 : i32
    %c0_i32_2 = arith.constant 0 : i32
    return %c0_i32, %c0_i32_0, %c0_i32_1 : i32, i32, i32
  }
  func.func @transform_3(%arg0: i32, %arg1: i32) -> (i32, i32, i32) {
    %c0_i32 = arith.constant 0 : i32
    %c0_i32_0 = arith.constant 0 : i32
    %c0_i32_1 = arith.constant 0 : i32
    %c0_i32_2 = arith.constant 0 : i32
    return %c0_i32, %c0_i32_0, %c0_i32_1 : i32, i32, i32
  }
  func.func @transform_4(%arg0: i32, %arg1: i32) -> (i32, i32, i32) {
    %c0_i32 = arith.constant 0 : i32
    %c0_i32_0 = arith.constant 0 : i32
    return %arg0, %c0_i32, %arg1 : i32, i32, i32
  }
}

</mosaic_0001>

<llo_original>
// kernel: tpu_custom_call.1
$region0: #{tpu_custom_call.1}
  #allocation0 [shape = 'u32[]', space=smem, size = 0x4, offset = 0x4, fixed_abs, tag = 'smem constant byte address 0x4 - core index']
  #allocation1 [shape = 'u32[144,128]{1,0:T(1,128)}', space=vmem, size = 0x12000, scoped, tag = 'internal scratch']
  %s0 = inlined_call_operand.hbm [shape: f32[2,4,256], index: 0, kind: input, shape index: {}]
  %s1 = inlined_call_operand.hbm [shape: f32[4,4,4], index: 1, kind: input, shape index: {}]
  %s2 = inlined_call_operand.vmem [shape: f32[4,4,1], index: 2, kind: input, shape index: {}]
  %s3 = inlined_call_operand.hbm [shape: f32[4,256,1024], index: 3, kind: input, shape index: {}]
  %s4 = inlined_call_operand.hbm [shape: f32[2,4,1024], index: 4, kind: output, shape index: {}]
  %s5 = sld [smem:[#allocation0]]
  $region61: #{tpu_custom_call.1} parent=0
    _
  %s7 = ssub.s32 1, %s5
  %s8 = scalar_select 0, %s7, %s5
  $region1: #{tpu_custom_call.1} parent=0
    #allocation2 [shape = 'u8[8192]{0}', space=vmem, size = 0x2000, scoped, tag = 'input window, operand 0']
    #allocation3 [shape = 's32[2]{0}', space=sflag, size = 0x8, scoped, tag = 'scoped memory for tpu_custom_call.1']
    #allocation4 [shape = 's32[2]{0}', space=sflag, size = 0x8, scoped, tag = 'scoped memory for tpu_custom_call.1']
    #allocation5 [shape = 'u8[8192]{0}', space=vmem, size = 0x2000, scoped, tag = 'input window, operand 1, single buffered']
    #allocation6 [shape = 's32[1]{0}', space=sflag, size = 0x4, scoped, tag = 'scoped memory for tpu_custom_call.1']
    #allocation7 [shape = 'u8[4194304]{0}', space=vmem, size = 0x400000, scoped, tag = 'input window, operand 3, single buffered']
    #allocation8 [shape = 'u8[32768]{0}', space=vmem, size = 0x8000, scoped, tag = 'output window, operand 0']
    %9 = vsyncpa [#allocation3], 0
    %s10 = scalar_lea.sflag [#allocation3], 1
    %11 = vsyncpa %s10, 0
    %12 = vsyncpa [#allocation6], 0
    %13 = vsyncpa [#allocation4], 0
    %s14 = scalar_lea.sflag [#allocation4], 1
    %15 = vsyncpa %s14, 0
    loop: start=0, step=1, limit=4
    $region2: #{tpu_custom_call.1} parent=1 // loop_pre_header
      _
    $region3: #{tpu_custom_call.1} parent=1 // loop_header
      %s17 = sphi 0, %s21
      %p18 = scmp.ge.s32.totalorder %s17, 4
      %s24 = sphi 0, %s36
      %s25 = sphi 0, %s32
      %s26 = sphi 0, %s24
      %s27 = sphi 0, %s25
      %s28 = sphi 0, %s26
      %s29 = sphi 0, %s27
      %s41 = sphi 0, %s43
      %s44 = sphi 0, %s41
      %s45 = sphi 0, %s44
      %s61 = sphi 0, %s45
      %s65 = sphi 0, %s65
      %s67 = sphi 0, %s65
      %s68 = sphi 0, %s67
      %s82 = sphi 0, %s68
      %s86 = sphi 0, %s86
      %s88 = sphi 0, %s86
      %s89 = sphi 0, %s88
      %s103 = sphi 0, %s89
      %s107 = sphi 0, %s107
      %s109 = sphi 0, %s107
      %s110 = sphi 0, %s109
      %s124 = sphi 0, %s110
      %s132 = sphi 0, %s134
      %s135 = sphi 0, %s132
      %s136 = sphi 0, %s135
      %s152 = sphi 0, %s136
    $region4: #{tpu_custom_call.1} parent=1 // loop_header_branch
      %20 = sbr.rel (%p18) target = $region8
    $region5: #{tpu_custom_call.1} parent=1 // loop_body
      %s22 = ssub.s32 %s17, 1
      %s23 = ssub.s32 %s17, 2
      %s30 = sadd.s32 1, %s25
      %p31 = scmp.ge.s32.totalorder %s30, 1
      %s32 = scalar_select %p31, 0, %s30
      %s33 = sadd.s32 1, %s24
      %s34 = scalar_select %p31, %s33, %s24
      %p35 = scmp.ge.s32.totalorder %s34, 2
      %s36 = scalar_select %p35, 0, %s34
      %s37 = ssub.s32 %s24, %s36
      %s38 = ssub.s32 %s25, %s32
      %s39 = sor.u32 %s37, %s38
      %p40 = scmp.eq.s32.totalorder %s39, 0
      %s42 = sadd.s32 %s41, 1
      %s43 = scalar_select %p40, %s41, %s42
      %p46 = pneg %p40
      %p47 = scmp.eq.s32.totalorder %s17, 1
      %p48 = por %p46, %p47
      %p49 = scmp.ne.s32.totalorder %s41, %s44
      %p50 = scmp.eq.s32.totalorder %s17, 0
      %p51 = por %p49, %p50
      %p52 = scmp.ne.s32.totalorder %s41, %s44
      %p53 = scmp.eq.s32.totalorder %s22, 1
      %p54 = por %p52, %p53
      %p55 = scmp.ne.s32.totalorder %s44, %s45
      %p56 = scmp.eq.s32.totalorder %s22, 0
      %p57 = por %p55, %p56
      %p58 = scmp.ne.s32.totalorder %s44, %s45
      %p59 = scmp.eq.s32.totalorder %s23, 1
      %p60 = por %p58, %p59
      %p62 = scmp.ne.s32.totalorder %s45, %s61
      %p63 = scmp.eq.s32.totalorder %s23, 0
      %p64 = por %p62, %p63
      %s66 = sadd.s32 %s65, 1
      %p69 = scmp.eq.s32.totalorder %s17, 1
      %p70 = scmp.ne.s32.totalorder %s65, %s67
      %p71 = scmp.eq.s32.totalorder %s17, 0
      %p72 = por %p70, %p71
      %p73 = scmp.ne.s32.totalorder %s65, %s67
      %p74 = scmp.eq.s32.totalorder %s22, 1
      %p75 = por %p73, %p74
      %p76 = scmp.ne.s32.totalorder %s67, %s68
      %p77 = scmp.eq.s32.totalorder %s22, 0
      %p78 = por %p76, %p77
      %p79 = scmp.ne.s32.totalorder %s67, %s68
      %p80 = scmp.eq.s32.totalorder %s23, 1
      %p81 = por %p79, %p80
      %p83 = scmp.ne.s32.totalorder %s68, %s82
      %p84 = scmp.eq.s32.totalorder %s23, 0
      %p85 = por %p83, %p84
      %s87 = sadd.s32 %s86, 1
      %p90 = scmp.eq.s32.totalorder %s17, 1
      %p91 = scmp.ne.s32.totalorder %s86, %s88
      %p92 = scmp.eq.s32.totalorder %s17, 0
      %p93 = por %p91, %p92
      %p94 = scmp.ne.s32.totalorder %s86, %s88
      %p95 = scmp.eq.s32.totalorder %s22, 1
      %p96 = por %p94, %p95
      %p97 = scmp.ne.s32.totalorder %s88, %s89
      %p98 = scmp.eq.s32.totalorder %s22, 0
      %p99 = por %p97, %p98
      %p100 = scmp.ne.s32.totalorder %s88, %s89
      %p101 = scmp.eq.s32.totalorder %s23, 1
      %p102 = por %p100, %p101
      %p104 = scmp.ne.s32.totalorder %s89, %s103
      %p105 = scmp.eq.s32.totalorder %s23, 0
      %p106 = por %p104, %p105
      %s108 = sadd.s32 %s107, 1
      %p111 = scmp.eq.s32.totalorder %s17, 1
      %p112 = scmp.ne.s32.totalorder %s107, %s109
      %p113 = scmp.eq.s32.totalorder %s17, 0
      %p114 = por %p112, %p113
      %p115 = scmp.ne.s32.totalorder %s107, %s109
      %p116 = scmp.eq.s32.totalorder %s22, 1
      %p117 = por %p115, %p116
      %p118 = scmp.ne.s32.totalorder %s109, %s110
      %p119 = scmp.eq.s32.totalorder %s22, 0
      %p120 = por %p118, %p119
      %p121 = scmp.ne.s32.totalorder %s109, %s110
      %p122 = scmp.eq.s32.totalorder %s23, 1
      %p123 = por %p121, %p122
      %p125 = scmp.ne.s32.totalorder %s110, %s124
      %p126 = scmp.eq.s32.totalorder %s23, 0
      %p127 = por %p125, %p126
      %s128 = ssub.s32 %s24, %s36
      %s129 = ssub.s32 %s25, %s32
      %s130 = sor.u32 %s128, %s129
      %p131 = scmp.eq.s32.totalorder %s130, 0
      %s133 = sadd.s32 %s132, 1
      %s134 = scalar_select %p131, %s132, %s133
      %p137 = pneg %p131
      %p138 = scmp.eq.s32.totalorder %s17, 1
      %p139 = por %p137, %p138
      %p140 = scmp.ne.s32.totalorder %s132, %s135
      %p141 = scmp.eq.s32.totalorder %s17, 0
      %p142 = por %p140, %p141
      %p143 = scmp.ne.s32.totalorder %s132, %s135
      %p144 = scmp.eq.s32.totalorder %s22, 1
      %p145 = por %p143, %p144
      %p146 = scmp.ne.s32.totalorder %s135, %s136
      %p147 = scmp.eq.s32.totalorder %s22, 0
      %p148 = por %p146, %p147
      %p149 = scmp.ne.s32.totalorder %s135, %s136
      %p150 = scmp.eq.s32.totalorder %s23, 1
      %p151 = por %p149, %p150
      %p153 = scmp.ne.s32.totalorder %s136, %s152
      %p154 = scmp.eq.s32.totalorder %s23, 0
      %p155 = por %p153, %p154
      %p156 = scmp.le.s32.totalorder 1, %s17
      %p157 = scmp.lt.s32.totalorder %s17, 3
      %p158 = pnand %p156, %p157
      %p159 = pneg %p158
      // Predicated region
      $region9: #{tpu_custom_call.1} parent=5 // pred_check
        _
      $region10: #{tpu_custom_call.1} parent=5 // pred_check_branch
        %161 = sbr.rel (%p158) target = $region12
      $region11: #{tpu_custom_call.1} parent=5 // pred_region
        %s162 = ssub.s32 %s17, 1
        // Predicated region
        $region13: #{tpu_custom_call.1} parent=11 // pred_check
          %p163 = pneg %p78
        $region14: #{tpu_custom_call.1} parent=11 // pred_check_branch
          %165 = sbr.rel (%p163) target = $region16
        $region15: #{tpu_custom_call.1} parent=11 // pred_region
          %s167 = ssub.s32 256, 256
          %168 = vsyncadd [#allocation6], %s167
          %s169 = sshll.u32 [#allocation5], 4
          %s170 = int_to_ptr.vmem [resolvable:$true] %s169
          %175 = dma.hbm_to_vmem [thread:$0]  %s1, 256, %s170, [#allocation6], 64, 64, 4
        $region16: #{tpu_custom_call.1} parent=11 // pred_fallthru
          _
        // Predicated region
        $region17: #{tpu_custom_call.1} parent=11 // pred_check
          %p176 = pneg %p99
        $region18: #{tpu_custom_call.1} parent=11 // pred_check_branch
          %178 = sbr.rel (%p176) target = $region20
        $region19: #{tpu_custom_call.1} parent=11 // pred_region
          _
        $region20: #{tpu_custom_call.1} parent=11 // pred_fallthru
          _
        // Predicated region
        $region21: #{tpu_custom_call.1} parent=11 // pred_check
          %p179 = pneg %p120
        $region22: #{tpu_custom_call.1} parent=11 // pred_check_branch
          %181 = sbr.rel (%p179) target = $region24
        $region23: #{tpu_custom_call.1} parent=11 // pred_region
          %s183 = ssub.s32 131072, 131072
          %184 = vsyncadd [#allocation6], %s183
          %s185 = sshll.u32 [#allocation7], 4
          %s186 = int_to_ptr.vmem [resolvable:$true] %s185
          %191 = dma.hbm_to_vmem [thread:$0]  %s3, 131072, %s186, [#allocation6], 1024, 1024, 64
        $region24: #{tpu_custom_call.1} parent=11 // pred_fallthru
          _
      $region12: #{tpu_custom_call.1} parent=5 // pred_fallthru
        _
      %p192 = scmp.lt.s32.totalorder %s17, 2
      // Predicated region
      $region25: #{tpu_custom_call.1} parent=5 // pred_check
        %p193 = pneg %p192
      $region26: #{tpu_custom_call.1} parent=5 // pred_check_branch
        %195 = sbr.rel (%p193) target = $region28
      $region27: #{tpu_custom_call.1} parent=5 // pred_region
        // Predicated region
        $region29: #{tpu_custom_call.1} parent=27 // pred_check
          %p196 = pneg %p51
        $region30: #{tpu_custom_call.1} parent=27 // pred_check_branch
          %198 = sbr.rel (%p196) target = $region32
        $region31: #{tpu_custom_call.1} parent=27 // pred_region
          %s199 = sand.u32 %s41, 1
          %s200 = scalar_lea.sflag [#allocation3], %s199
          %s201 = sand.u32 %s41, 1
          %s202 = smul.addr %s201, 8
          %s203 = scalar_lea.vmem [#allocation2], %s202
          %s204 = smul.u32 2, %s25
          %s206 = ssub.s32 128, 128
          %207 = vsyncadd %s200, %s206
          %s208 = smul.addr %s24, 2
          %s209 = sadd.s32 %s204, %s208
          %s210 = smul.addr %s209, 64
          %s211 = scalar_lea.hbm %s0, %s210
          %s213 = sshll.u32 %s203, 4
          %s214 = int_to_ptr.vmem [resolvable:$true] %s213
          %216 = dma.hbm_to_vmem [thread:$0]  %s211, 128, %s214, %s200
        $region32: #{tpu_custom_call.1} parent=27 // pred_fallthru
          _
      $region28: #{tpu_custom_call.1} parent=5 // pred_fallthru
        _
      %p217 = scmp.le.s32.totalorder 1, %s17
      %p218 = scmp.lt.s32.totalorder %s17, 3
      %p219 = pnand %p217, %p218
      %p220 = pneg %p219
      // Predicated region
      $region33: #{tpu_custom_call.1} parent=5 // pred_check
        _
      $region34: #{tpu_custom_call.1} parent=5 // pred_check_branch
        %222 = sbr.rel (%p219) target = $region36
      $region35: #{tpu_custom_call.1} parent=5 // pred_region
        %s223 = ssub.s32 %s17, 1
        %s224 = sand.u32 %s44, 1
        %s225 = scalar_lea.sflag [#allocation3], %s224
        %s226 = sand.u32 %s44, 1
        %s227 = smul.addr %s226, 8
        %s228 = scalar_lea.vmem [#allocation2], %s227
        // Predicated region
        $region37: #{tpu_custom_call.1} parent=35 // pred_check
          %p229 = pneg %p57
        $region38: #{tpu_custom_call.1} parent=35 // pred_check_branch
          %231 = sbr.rel (%p229) target = $region40
        $region39: #{tpu_custom_call.1} parent=35 // pred_region
          %232 = dma.done %s225, 128
        $region40: #{tpu_custom_call.1} parent=35 // pred_fallthru
          _
        // Predicated region
        $region41: #{tpu_custom_call.1} parent=35 // pred_check
          %p233 = pneg %p78
        $region42: #{tpu_custom_call.1} parent=35 // pred_check_branch
          %235 = sbr.rel (%p233) target = $region44
        $region43: #{tpu_custom_call.1} parent=35 // pred_region
          %236 = dma.done [#allocation6], 256
        $region44: #{tpu_custom_call.1} parent=35 // pred_fallthru
          _
        // Predicated region
        $region45: #{tpu_custom_call.1} parent=35 // pred_check
          %p237 = pneg %p120
        $region46: #{tpu_custom_call.1} parent=35 // pred_check_branch
          %239 = sbr.rel (%p237) target = $region48
        $region47: #{tpu_custom_call.1} parent=35 // pred_region
          %240 = dma.done [#allocation6], 131072
        $region48: #{tpu_custom_call.1} parent=35 // pred_fallthru
          _
        %s241 = sand.u32 %s44, 1
        %s242 = scalar_lea.sflag [#allocation3], %s241
        %s243 = sand.u32 %s44, 1
        %s244 = smul.addr %s243, 8
        %s245 = scalar_lea.vmem [#allocation2], %s244
        %p246 = pneg %p57
        %p247 = pneg %p54
        %p248 = pneg %p78
        %p249 = pneg %p75
        %p250 = pneg %p99
        %p251 = pneg %p96
        %p252 = pneg %p120
        %p253 = pneg %p117
        %p254 = pneg %p148
        %p255 = pneg %p145
        %s256 = sand.u32 %s135, 1
        %s257 = scalar_lea.sflag [#allocation4], %s256
        %s258 = sand.u32 %s135, 1
        %s259 = smul.addr %s258, 32
        %s260 = scalar_lea.vmem [#allocation8], %s259
        %s261 = smul.u32 2, %s27
        %s262 = smul.u32 8, %s27
        %v263 = vld [vmem:[%s228] sm:$0xff]
        %v264 = vld [vmem:[#allocation5] sm:$0xf]
        %v265 = vld [vmem:[%s2] sm:$0xf]
        %267 = vset.pattern.permute.xlu0 0
        %268 = vperm.xlu0 %267, %v265
        %v269 = vpop.permute.xlu0 %268
        %v272 = vcombine.high %v263, %v263
        %vm273 = vcmask 31744
        %v275 = vsel %vm273, %v264, 0
        %vm277 = vcmask 1043456
        %v278 = vsel %vm277, %v263, 0
        %v280 = vsel %vm277, %v272, 0
        %282 = vmatprep.subr.mxu0 %v280
        %283 = vmatpush1.msra.mxu0 %v278
        %284 = vmatprep.subr.mxu0 0.0
        %285 = vmatpush1.msra.mxu0 0.0
        %286 = vmatprep.subr.mxu0 0.0
        %287 = vmatpush1.msra.mxu0 0.0
        %288 = vmatprep.subr.mxu0 0.0
        %289 = vmatpush1.msra.mxu0 0.0
        %290 = vmatprep.subr.mxu0 0.0
        %291 = vmatpush1.msra.mxu0 0.0
        %292 = vmatprep.subr.mxu0 0.0
        %293 = vmatpush1.msra.mxu0 0.0
        %294 = vmatprep.subr.mxu0 0.0
        %295 = vmatpush1.msra.mxu0 0.0
        %296 = vmatprep.subr.mxu0 0.0
        %297 = vmatpush1.msra.mxu0 0.0
        %298 = vmatprep.subr.mxu0 0.0
        %299 = vmatpush1.msra.mxu0 0.0
        %300 = vmatprep.subr.mxu0 0.0
        %301 = vmatpush1.msra.mxu0 0.0
        %302 = vmatprep.subr.mxu0 0.0
        %303 = vmatpush1.msra.mxu0 0.0
        %304 = vmatprep.subr.mxu0 0.0
        %305 = vmatpush1.msra.mxu0 0.0
        %306 = vmatprep.subr.mxu0 0.0
        %307 = vmatpush1.msra.mxu0 0.0
        %308 = vmatprep.subr.mxu0 0.0
        %309 = vmatpush1.msra.mxu0 0.0
        %310 = vmatprep.subr.mxu0 0.0
        %311 = vmatpush1.msra.mxu0 0.0
        %312 = vmatprep.subr.mxu0 0.0
        %313 = vmatpush1.msra.mxu0 0.0
        %314 = vmatprep.subr.mxu0 0.0
        %315 = vmatpush1.msra.mxu0 0.0
        %316 = vmatprep.subr.mxu0 0.0
        %317 = vmatpush1.msra.mxu0 0.0
        %318 = vmatprep.subr.mxu0 0.0
        %319 = vmatpush1.msra.mxu0 0.0
        %320 = vmatprep.subr.mxu0 0.0
        %321 = vmatpush1.msra.mxu0 0.0
        %322 = vmatprep.subr.mxu0 0.0
        %323 = vmatpush1.msra.mxu0 0.0
        %324 = vmatprep.subr.mxu0 0.0
        %325 = vmatpush1.msra.mxu0 0.0
        %326 = vmatprep.subr.mxu0 0.0
        %327 = vmatpush1.msra.mxu0 0.0
        %328 = vmatprep.subr.mxu0 0.0
        %329 = vmatpush1.msra.mxu0 0.0
        %330 = vmatprep.subr.mxu0 0.0
        %331 = vmatpush1.msra.mxu0 0.0
        %332 = vmatprep.subr.mxu0 0.0
        %333 = vmatpush1.msra.mxu0 0.0
        %334 = vmatprep.subr.mxu0 0.0
        %335 = vmatpush1.msra.mxu0 0.0
        %336 = vmatprep.subr.mxu0 0.0
        %337 = vmatpush1.msra.mxu0 0.0
        %338 = vmatprep.subr.mxu0 0.0
        %339 = vmatpush1.msra.mxu0 0.0
        %340 = vmatprep.subr.mxu0 0.0
        %341 = vmatpush1.msra.mxu0 0.0
        %342 = vmatprep.subr.mxu0 0.0
        %343 = vmatpush1.msra.mxu0 0.0
        %344 = vmatprep.subr.mxu0 0.0
        %345 = vmatpush1.msra.mxu0 0.0
        %346 = vmatprep.mubr.f32.mxu0 0.0
        %347 = vmatmul.mubr.f32.gmra.mrb[0].mxu0 %v275
        %v348 = vpop.f32.mrb[0].mxu0
        %v349 = vadd.f32 %v269, %v348
        %v350 = vpop.f32.mrb[0].mxu0
        %v351 = vadd.f32 %v269, %v350
        %352 = vdwg.mxu0
        %v353 = vsub.f32 0.0, %v349
        %v354 = vsub.f32 0.0, %v351
        %v355 = vmul.f32 %v353, 1.442695
        %v356 = vpow.pop %v355
        %v357 = vmul.f32 %v354, 1.442695
        %v358 = vpow.pop %v357
        %v359 = vadd.f32 %v356, 1.0
        %v360 = vadd.f32 %v358, 1.0
        %v361 = vrcp.pop %v359
        %v362 = vrcp.pop %v360
        %v363 = vmul.f32 %v349, %v361
        %v364 = vmul.f32 %v351, %v362
        %v365 = vld [vmem:[#allocation7] sm:$0xff]
        %v366 = vld [vmem:[#allocation7 + $0x8] sm:$0xff]
        %v367 = vld [vmem:[#allocation7 + $0x10] sm:$0xff]
        %v368 = vld [vmem:[#allocation7 + $0x18] sm:$0xff]
        %v369 = vld [vmem:[#allocation7 + $0x20] sm:$0xff]
        %v370 = vld [vmem:[#allocation7 + $0x28] sm:$0xff]
        %v371 = vld [vmem:[#allocation7 + $0x30] sm:$0xff]
        %v372 = vld [vmem:[#allocation7 + $0x38] sm:$0xff]
        %v373 = vld [vmem:[#allocation7 + $0x40] sm:$0xff]
        %v374 = vld [vmem:[#allocation7 + $0x48] sm:$0xff]
        %v375 = vld [vmem:[#allocation7 + $0x50] sm:$0xff]
        %v376 = vld [vmem:[#allocation7 + $0x58] sm:$0xff]
        %v377 = vld [vmem:[#allocation7 + $0x60] sm:$0xff]
        %v378 = vld [vmem:[#allocation7 + $0x68] sm:$0xff]
        %v379 = vld [vmem:[#allocation7 + $0x70] sm:$0xff]
        %v380 = vld [vmem:[#allocation7 + $0x78] sm:$0xff]
        %v381 = vld [vmem:[#allocation7 + $0x80] sm:$0xff]
        %v382 = vld [vmem:[#allocation7 + $0x88] sm:$0xff]
        %v383 = vld [vmem:[#allocation7 + $0x90] sm:$0xff]
        %v384 = vld [vmem:[#allocation7 + $0x98] sm:$0xff]
        %v385 = vld [vmem:[#allocation7 + $0xa0] sm:$0xff]
        %v386 = vld [vmem:[#allocation7 + $0xa8] sm:$0xff]
        %v387 = vld [vmem:[#allocation7 + $0xb0] sm:$0xff]
        %v388 = vld [vmem:[#allocation7 + $0xb8] sm:$0xff]
        %v389 = vld [vmem:[#allocation7 + $0xc0] sm:$0xff]
        %v390 = vld [vmem:[#allocation7 + $0xc8] sm:$0xff]
        %v391 = vld [vmem:[#allocation7 + $0xd0] sm:$0xff]
        %v392 = vld [vmem:[#allocation7 + $0xd8] sm:$0xff]
        %v393 = vld [vmem:[#allocation7 + $0xe0] sm:$0xff]
        %v394 = vld [vmem:[#allocation7 + $0xe8] sm:$0xff]
        %v395 = vld [vmem:[#allocation7 + $0xf0] sm:$0xff]
        %v396 = vld [vmem:[#allocation7 + $0xf8] sm:$0xff]
        %v397 = vld [vmem:[#allocation7 + $0x100] sm:$0xff]
        %v398 = vld [vmem:[#allocation7 + $0x108] sm:$0xff]
        %v399 = vld [vmem:[#allocation7 + $0x110] sm:$0xff]
        %v400 = vld [vmem:[#allocation7 + $0x118] sm:$0xff]
        %v401 = vld [vmem:[#allocation7 + $0x120] sm:$0xff]
        %v402 = vld [vmem:[#allocation7 + $0x128] sm:$0xff]
        %v403 = vld [vmem:[#allocation7 + $0x130] sm:$0xff]
        %v404 = vld [vmem:[#allocation7 + $0x138] sm:$0xff]
        %v405 = vld [vmem:[#allocation7 + $0x140] sm:$0xff]
        %v406 = vld [vmem:[#allocation7 + $0x148] sm:$0xff]
        %v407 = vld [vmem:[#allocation7 + $0x150] sm:$0xff]
        %v408 = vld [vmem:[#allocation7 + $0x158] sm:$0xff]
        %v409 = vld [vmem:[#allocation7 + $0x160] sm:$0xff]
        %v410 = vld [vmem:[#allocation7 + $0x168] sm:$0xff]
        %v411 = vld [vmem:[#allocation7 + $0x170] sm:$0xff]
        %v412 = vld [vmem:[#allocation7 + $0x178] sm:$0xff]
        %v413 = vld [vmem:[#allocation7 + $0x180] sm:$0xff]
        %v414 = vld [vmem:[#allocation7 + $0x188] sm:$0xff]
        %v415 = vld [vmem:[#allocation7 + $0x190] sm:$0xff]
        %v416 = vld [vmem:[#allocation7 + $0x198] sm:$0xff]
        %v417 = vld [vmem:[#allocation7 + $0x1a0] sm:$0xff]
        %v418 = vld [vmem:[#allocation7 + $0x1a8] sm:$0xff]
        %v419 = vld [vmem:[#allocation7 + $0x1b0] sm:$0xff]
        %v420 = vld [vmem:[#allocation7 + $0x1b8] sm:$0xff]
        %v421 = vld [vmem:[#allocation7 + $0x1c0] sm:$0xff]
        %v422 = vld [vmem:[#allocation7 + $0x1c8] sm:$0xff]
        %v423 = vld [vmem:[#allocation7 + $0x1d0] sm:$0xff]
        %v424 = vld [vmem:[#allocation7 + $0x1d8] sm:$0xff]
        %v425 = vld [vmem:[#allocation7 + $0x1e0] sm:$0xff]
        %v426 = vld [vmem:[#allocation7 + $0x1e8] sm:$0xff]
        %v427 = vld [vmem:[#allocation7 + $0x1f0] sm:$0xff]
        %v428 = vld [vmem:[#allocation7 + $0x1f8] sm:$0xff]
        %v429 = vld [vmem:[#allocation7 + $0x200] sm:$0xff]
        %v430 = vld [vmem:[#allocation7 + $0x208] sm:$0xff]
        %v431 = vld [vmem:[#allocation7 + $0x210] sm:$0xff]
        %v432 = vld [vmem:[#allocation7 + $0x218] sm:$0xff]
        %v433 = vld [vmem:[#allocation7 + $0x220] sm:$0xff]
        %v434 = vld [vmem:[#allocation7 + $0x228] sm:$0xff]
        %v435 = vld [vmem:[#allocation7 + $0x230] sm:$0xff]
        %v436 = vld [vmem:[#allocation7 + $0x238] sm:$0xff]
        %v437 = vld [vmem:[#allocation7 + $0x240] sm:$0xff]
        %v438 = vld [vmem:[#allocation7 + $0x248] sm:$0xff]
        %v439 = vld [vmem:[#allocation7 + $0x250] sm:$0xff]
        %v440 = vld [vmem:[#allocation7 + $0x258] sm:$0xff]
        %v441 = vld [vmem:[#allocation7 + $0x260] sm:$0xff]
        %v442 = vld [vmem:[#allocation7 + $0x268] sm:$0xff]
        %v443 = vld [vmem:[#allocation7 + $0x270] sm:$0xff]
        %v444 = vld [vmem:[#allocation7 + $0x278] sm:$0xff]
        %v445 = vld [vmem:[#allocation7 + $0x280] sm:$0xff]
        %v446 = vld [vmem:[#allocation7 + $0x288] sm:$0xff]
        %v447 = vld [vmem:[#allocation7 + $0x290] sm:$0xff]
        %v448 = vld [vmem:[#allocation7 + $0x298] sm:$0xff]
        %v449 = vld [vmem:[#allocation7 + $0x2a0] sm:$0xff]
        %v450 = vld [vmem:[#allocation7 + $0x2a8] sm:$0xff]
        %v451 = vld [vmem:[#allocation7 + $0x2b0] sm:$0xff]
        %v452 = vld [vmem:[#allocation7 + $0x2b8] sm:$0xff]
        %v453 = vld [vmem:[#allocation7 + $0x2c0] sm:$0xff]
        %v454 = vld [vmem:[#allocation7 + $0x2c8] sm:$0xff]
        %v455 = vld [vmem:[#allocation7 + $0x2d0] sm:$0xff]
        %v456 = vld [vmem:[#allocation7 + $0x2d8] sm:$0xff]
        %v457 = vld [vmem:[#allocation7 + $0x2e0] sm:$0xff]
        %v458 = vld [vmem:[#allocation7 + $0x2e8] sm:$0xff]
        %v459 = vld [vmem:[#allocation7 + $0x2f0] sm:$0xff]
        %v460 = vld [vmem:[#allocation7 + $0x2f8] sm:$0xff]
        %v461 = vld [vmem:[#allocation7 + $0x300] sm:$0xff]
        %v462 = vld [vmem:[#allocation7 + $0x308] sm:$0xff]
        %v463 = vld [vmem:[#allocation7 + $0x310] sm:$0xff]
        %v464 = vld [vmem:[#allocation7 + $0x318] sm:$0xff]
        %v465 = vld [vmem:[#allocation7 + $0x320] sm:$0xff]
        %v466 = vld [vmem:[#allocation7 + $0x328] sm:$0xff]
        %v467 = vld [vmem:[#allocation7 + $0x330] sm:$0xff]
        %v468 = vld [vmem:[#allocation7 + $0x338] sm:$0xff]
        %v469 = vld [vmem:[#allocation7 + $0x340] sm:$0xff]
        %v470 = vld [vmem:[#allocation7 + $0x348] sm:$0xff]
        %v471 = vld [vmem:[#allocation7 + $0x350] sm:$0xff]
        %v472 = vld [vmem:[#allocation7 + $0x358] sm:$0xff]
        %v473 = vld [vmem:[#allocation7 + $0x360] sm:$0xff]
        %v474 = vld [vmem:[#allocation7 + $0x368] sm:$0xff]
        %v475 = vld [vmem:[#allocation7 + $0x370] sm:$0xff]
        %v476 = vld [vmem:[#allocation7 + $0x378] sm:$0xff]
        %v477 = vld [vmem:[#allocation7 + $0x380] sm:$0xff]
        %v478 = vld [vmem:[#allocation7 + $0x388] sm:$0xff]
        %v479 = vld [vmem:[#allocation7 + $0x390] sm:$0xff]
        %v480 = vld [vmem:[#allocation7 + $0x398] sm:$0xff]
        %v481 = vld [vmem:[#allocation7 + $0x3a0] sm:$0xff]
        %v482 = vld [vmem:[#allocation7 + $0x3a8] sm:$0xff]
        %v483 = vld [vmem:[#allocation7 + $0x3b0] sm:$0xff]
        %v484 = vld [vmem:[#allocation7 + $0x3b8] sm:$0xff]
        %v485 = vld [vmem:[#allocation7 + $0x3c0] sm:$0xff]
        %v486 = vld [vmem:[#allocation7 + $0x3c8] sm:$0xff]
        %v487 = vld [vmem:[#allocation7 + $0x3d0] sm:$0xff]
        %v488 = vld [vmem:[#allocation7 + $0x3d8] sm:$0xff]
        %v489 = vld [vmem:[#allocation7 + $0x3e0] sm:$0xff]
        %v490 = vld [vmem:[#allocation7 + $0x3e8] sm:$0xff]
        %v491 = vld [vmem:[#allocation7 + $0x3f0] sm:$0xff]
        %v492 = vld [vmem:[#allocation7 + $0x3f8] sm:$0xff]
        %v493 = vld [vmem:[#allocation7 + $0x400] sm:$0xff]
        %v494 = vld [vmem:[#allocation7 + $0x408] sm:$0xff]
        %v495 = vld [vmem:[#allocation7 + $0x410] sm:$0xff]
        %v496 = vld [vmem:[#allocation7 + $0x418] sm:$0xff]
        %v497 = vld [vmem:[#allocation7 + $0x420] sm:$0xff]
        %v498 = vld [vmem:[#allocation7 + $0x428] sm:$0xff]
        %v499 = vld [vmem:[#allocation7 + $0x430] sm:$0xff]
        %v500 = vld [vmem:[#allocation7 + $0x438] sm:$0xff]
        %v501 = vld [vmem:[#allocation7 + $0x440] sm:$0xff]
        %v502 = vld [vmem:[#allocation7 + $0x448] sm:$0xff]
        %v503 = vld [vmem:[#allocation7 + $0x450] sm:$0xff]
        %v504 = vld [vmem:[#allocation7 + $0x458] sm:$0xff]
        %v505 = vld [vmem:[#allocation7 + $0x460] sm:$0xff]
        %v506 = vld [vmem:[#allocation7 + $0x468] sm:$0xff]
        %v507 = vld [vmem:[#allocation7 + $0x470] sm:$0xff]
        %v508 = vld [vmem:[#allocation7 + $0x478] sm:$0xff]
        %v509 = vld [vmem:[#allocation7 + $0x480] sm:$0xff]
        %v510 = vld [vmem:[#allocation7 + $0x488] sm:$0xff]
        %v511 = vld [vmem:[#allocation7 + $0x490] sm:$0xff]
        %v512 = vld [vmem:[#allocation7 + $0x498] sm:$0xff]
        %v513 = vld [vmem:[#allocation7 + $0x4a0] sm:$0xff]
        %v514 = vld [vmem:[#allocation7 + $0x4a8] sm:$0xff]
        %v515 = vld [vmem:[#allocation7 + $0x4b0] sm:$0xff]
        %v516 = vld [vmem:[#allocation7 + $0x4b8] sm:$0xff]
        %v517 = vld [vmem:[#allocation7 + $0x4c0] sm:$0xff]
        %v518 = vld [vmem:[#allocation7 + $0x4c8] sm:$0xff]
        %v519 = vld [vmem:[#allocation7 + $0x4d0] sm:$0xff]
        %v520 = vld [vmem:[#allocation7 + $0x4d8] sm:$0xff]
        %v521 = vld [vmem:[#allocation7 + $0x4e0] sm:$0xff]
        %v522 = vld [vmem:[#allocation7 + $0x4e8] sm:$0xff]
        %v523 = vld [vmem:[#allocation7 + $0x4f0] sm:$0xff]
        %v524 = vld [vmem:[#allocation7 + $0x4f8] sm:$0xff]
        %v525 = vld [vmem:[#allocation7 + $0x500] sm:$0xff]
        %v526 = vld [vmem:[#allocation7 + $0x508] sm:$0xff]
        %v527 = vld [vmem:[#allocation7 + $0x510] sm:$0xff]
        %v528 = vld [vmem:[#allocation7 + $0x518] sm:$0xff]
        %v529 = vld [vmem:[#allocation7 + $0x520] sm:$0xff]
        %v530 = vld [vmem:[#allocation7 + $0x528] sm:$0xff]
        %v531 = vld [vmem:[#allocation7 + $0x530] sm:$0xff]
        %v532 = vld [vmem:[#allocation7 + $0x538] sm:$0xff]
        %v533 = vld [vmem:[#allocation7 + $0x540] sm:$0xff]
        %v534 = vld [vmem:[#allocation7 + $0x548] sm:$0xff]
        %v535 = vld [vmem:[#allocation7 + $0x550] sm:$0xff]
        %v536 = vld [vmem:[#allocation7 + $0x558] sm:$0xff]
        %v537 = vld [vmem:[#allocation7 + $0x560] sm:$0xff]
        %v538 = vld [vmem:[#allocation7 + $0x568] sm:$0xff]
        %v539 = vld [vmem:[#allocation7 + $0x570] sm:$0xff]
        %v540 = vld [vmem:[#allocation7 + $0x578] sm:$0xff]
        %v541 = vld [vmem:[#allocation7 + $0x580] sm:$0xff]
        %v542 = vld [vmem:[#allocation7 + $0x588] sm:$0xff]
        %v543 = vld [vmem:[#allocation7 + $0x590] sm:$0xff]
        %v544 = vld [vmem:[#allocation7 + $0x598] sm:$0xff]
        %v545 = vld [vmem:[#allocation7 + $0x5a0] sm:$0xff]
        %v546 = vld [vmem:[#allocation7 + $0x5a8] sm:$0xff]
        %v547 = vld [vmem:[#allocation7 + $0x5b0] sm:$0xff]
        %v548 = vld [vmem:[#allocation7 + $0x5b8] sm:$0xff]
        %v549 = vld [vmem:[#allocation7 + $0x5c0] sm:$0xff]
        %v550 = vld [vmem:[#allocation7 + $0x5c8] sm:$0xff]
        %v551 = vld [vmem:[#allocation7 + $0x5d0] sm:$0xff]
        %v552 = vld [vmem:[#allocation7 + $0x5d8] sm:$0xff]
        %v553 = vld [vmem:[#allocation7 + $0x5e0] sm:$0xff]
        %v554 = vld [vmem:[#allocation7 + $0x5e8] sm:$0xff]
        %v555 = vld [vmem:[#allocation7 + $0x5f0] sm:$0xff]
        %v556 = vld [vmem:[#allocation7 + $0x5f8] sm:$0xff]
        %v557 = vld [vmem:[#allocation7 + $0x600] sm:$0xff]
        %v558 = vld [vmem:[#allocation7 + $0x608] sm:$0xff]
        %v559 = vld [vmem:[#allocation7 + $0x610] sm:$0xff]
        %v560 = vld [vmem:[#allocation7 + $0x618] sm:$0xff]
        %v561 = vld [vmem:[#allocation7 + $0x620] sm:$0xff]
        %v562 = vld [vmem:[#allocation7 + $0x628] sm:$0xff]
        %v563 = vld [vmem:[#allocation7 + $0x630] sm:$0xff]
        %v564 = vld [vmem:[#allocation7 + $0x638] sm:$0xff]
        %v565 = vld [vmem:[#allocation7 + $0x640] sm:$0xff]
        %v566 = vld [vmem:[#allocation7 + $0x648] sm:$0xff]
        %v567 = vld [vmem:[#allocation7 + $0x650] sm:$0xff]
        %v568 = vld [vmem:[#allocation7 + $0x658] sm:$0xff]
        %v569 = vld [vmem:[#allocation7 + $0x660] sm:$0xff]
        %v570 = vld [vmem:[#allocation7 + $0x668] sm:$0xff]
        %v571 = vld [vmem:[#allocation7 + $0x670] sm:$0xff]
        %v572 = vld [vmem:[#allocation7 + $0x678] sm:$0xff]
        %v573 = vld [vmem:[#allocation7 + $0x680] sm:$0xff]
        %v574 = vld [vmem:[#allocation7 + $0x688] sm:$0xff]
        %v575 = vld [vmem:[#allocation7 + $0x690] sm:$0xff]
        %v576 = vld [vmem:[#allocation7 + $0x698] sm:$0xff]
        %v577 = vld [vmem:[#allocation7 + $0x6a0] sm:$0xff]
        %v578 = vld [vmem:[#allocation7 + $0x6a8] sm:$0xff]
        %v579 = vld [vmem:[#allocation7 + $0x6b0] sm:$0xff]
        %v580 = vld [vmem:[#allocation7 + $0x6b8] sm:$0xff]
        %v581 = vld [vmem:[#allocation7 + $0x6c0] sm:$0xff]
        %v582 = vld [vmem:[#allocation7 + $0x6c8] sm:$0xff]
        %v583 = vld [vmem:[#allocation7 + $0x6d0] sm:$0xff]
        %v584 = vld [vmem:[#allocation7 + $0x6d8] sm:$0xff]
        %v585 = vld [vmem:[#allocation7 + $0x6e0] sm:$0xff]
        %v586 = vld [vmem:[#allocation7 + $0x6e8] sm:$0xff]
        %v587 = vld [vmem:[#allocation7 + $0x6f0] sm:$0xff]
        %v588 = vld [vmem:[#allocation7 + $0x6f8] sm:$0xff]
        %v589 = vld [vmem:[#allocation7 + $0x700] sm:$0xff]
        %v590 = vld [vmem:[#allocation7 + $0x708] sm:$0xff]
        %v591 = vld [vmem:[#allocation7 + $0x710] sm:$0xff]
        %v592 = vld [vmem:[#allocation7 + $0x718] sm:$0xff]
        %v593 = vld [vmem:[#allocation7 + $0x720] sm:$0xff]
        %v594 = vld [vmem:[#allocation7 + $0x728] sm:$0xff]
        %v595 = vld [vmem:[#allocation7 + $0x730] sm:$0xff]
        %v596 = vld [vmem:[#allocation7 + $0x738] sm:$0xff]
        %v597 = vld [vmem:[#allocation7 + $0x740] sm:$0xff]
        %v598 = vld [vmem:[#allocation7 + $0x748] sm:$0xff]
        %v599 = vld [vmem:[#allocation7 + $0x750] sm:$0xff]
        %v600 = vld [vmem:[#allocation7 + $0x758] sm:$0xff]
        %v601 = vld [vmem:[#allocation7 + $0x760] sm:$0xff]
        %v602 = vld [vmem:[#allocation7 + $0x768] sm:$0xff]
        %v603 = vld [vmem:[#allocation7 + $0x770] sm:$0xff]
        %v604 = vld [vmem:[#allocation7 + $0x778] sm:$0xff]
        %v605 = vld [vmem:[#allocation7 + $0x780] sm:$0xff]
        %v606 = vld [vmem:[#allocation7 + $0x788] sm:$0xff]
        %v607 = vld [vmem:[#allocation7 + $0x790] sm:$0xff]
        %v608 = vld [vmem:[#allocation7 + $0x798] sm:$0xff]
        %v609 = vld [vmem:[#allocation7 + $0x7a0] sm:$0xff]
        %v610 = vld [vmem:[#allocation7 + $0x7a8] sm:$0xff]
        %v611 = vld [vmem:[#allocation7 + $0x7b0] sm:$0xff]
        %v612 = vld [vmem:[#allocation7 + $0x7b8] sm:$0xff]
        %v613 = vld [vmem:[#allocation7 + $0x7c0] sm:$0xff]
        %v614 = vld [vmem:[#allocation7 + $0x7c8] sm:$0xff]
        %v615 = vld [vmem:[#allocation7 + $0x7d0] sm:$0xff]
        %v616 = vld [vmem:[#allocation7 + $0x7d8] sm:$0xff]
        %v617 = vld [vmem:[#allocation7 + $0x7e0] sm:$0xff]
        %v618 = vld [vmem:[#allocation7 + $0x7e8] sm:$0xff]
        %v619 = vld [vmem:[#allocation7 + $0x7f0] sm:$0xff]
        %v620 = vld [vmem:[#allocation7 + $0x7f8] sm:$0xff]
        %s621 = scalar_lea.vmem [#allocation5], 4
        %v622 = vld [vmem:[%s621] sm:$0xf]
        %s623 = scalar_lea.vmem %s2, 4
        %v624 = vld [vmem:[%s623] sm:$0xf]
        %626 = vset.pattern.permute.xlu0 0
        %627 = vperm.xlu0 %626, %v624
        %v628 = vpop.permute.xlu0 %627
        %v631 = vsel %vm273, %v622, 0
        %633 = vmatprep.subr.mxu0 %v280
        %634 = vmatpush1.msra.mxu0 %v278
        %635 = vmatprep.subr.mxu0 0.0
        %636 = vmatpush1.msra.mxu0 0.0
        %637 = vmatprep.subr.mxu0 0.0
        %638 = vmatpush1.msra.mxu0 0.0
        %639 = vmatprep.subr.mxu0 0.0
        %640 = vmatpush1.msra.mxu0 0.0
        %641 = vmatprep.subr.mxu0 0.0
        %642 = vmatpush1.msra.mxu0 0.0
        %643 = vmatprep.subr.mxu0 0.0
        %644 = vmatpush1.msra.mxu0 0.0
        %645 = vmatprep.subr.mxu0 0.0
        %646 = vmatpush1.msra.mxu0 0.0
        %647 = vmatprep.subr.mxu0 0.0
        %648 = vmatpush1.msra.mxu0 0.0
        %649 = vmatprep.subr.mxu0 0.0
        %650 = vmatpush1.msra.mxu0 0.0
        %651 = vmatprep.subr.mxu0 0.0
        %652 = vmatpush1.msra.mxu0 0.0
        %653 = vmatprep.subr.mxu0 0.0
        %654 = vmatpush1.msra.mxu0 0.0
        %655 = vmatprep.subr.mxu0 0.0
        %656 = vmatpush1.msra.mxu0 0.0
        %657 = vmatprep.subr.mxu0 0.0
        %658 = vmatpush1.msra.mxu0 0.0
        %659 = vmatprep.subr.mxu0 0.0
        %660 = vmatpush1.msra.mxu0 0.0
        %661 = vmatprep.subr.mxu0 0.0
        %662 = vmatpush1.msra.mxu0 0.0
        %663 = vmatprep.subr.mxu0 0.0
        %664 = vmatpush1.msra.mxu0 0.0
        %665 = vmatprep.subr.mxu0 0.0
        %666 = vmatpush1.msra.mxu0 0.0
        %667 = vmatprep.subr.mxu0 0.0
        %668 = vmatpush1.msra.mxu0 0.0
        %669 = vmatprep.subr.mxu0 0.0
        %670 = vmatpush1.msra.mxu0 0.0
        %671 = vmatprep.subr.mxu0 0.0
        %672 = vmatpush1.msra.mxu0 0.0
        %673 = vmatprep.subr.mxu0 0.0
        %674 = vmatpush1.msra.mxu0 0.0
        %675 = vmatprep.subr.mxu0 0.0
        %676 = vmatpush1.msra.mxu0 0.0
        %677 = vmatprep.subr.mxu0 0.0
        %678 = vmatpush1.msra.mxu0 0.0
        %679 = vmatprep.subr.mxu0 0.0
        %680 = vmatpush1.msra.mxu0 0.0
        %681 = vmatprep.subr.mxu0 0.0
        %682 = vmatpush1.msra.mxu0 0.0
        %683 = vmatprep.subr.mxu0 0.0
        %684 = vmatpush1.msra.mxu0 0.0
        %685 = vmatprep.subr.mxu0 0.0
        %686 = vmatpush1.msra.mxu0 0.0
        %687 = vmatprep.subr.mxu0 0.0
        %688 = vmatpush1.msra.mxu0 0.0
        %689 = vmatprep.subr.mxu0 0.0
        %690 = vmatpush1.msra.mxu0 0.0
        %691 = vmatprep.subr.mxu0 0.0
        %692 = vmatpush1.msra.mxu0 0.0
        %693 = vmatprep.subr.mxu0 0.0
        %694 = vmatpush1.msra.mxu0 0.0
        %695 = vmatprep.subr.mxu0 0.0
        %696 = vmatpush1.msra.mxu0 0.0
        %697 = vmatprep.mubr.f32.mxu0 0.0
        %698 = vmatmul.mubr.f32.gmra.mrb[0].mxu0 %v631
        %v699 = vpop.f32.mrb[0].mxu0
        %v700 = vadd.f32 %v628, %v699
        %v701 = vpop.f32.mrb[0].mxu0
        %v702 = vadd.f32 %v628, %v701
        %703 = vdwg.mxu0
        %v704 = vsub.f32 0.0, %v700
        %v705 = vsub.f32 0.0, %v702
        %v706 = vmul.f32 %v704, 1.442695
        %v707 = vpow.pop %v706
        %v708 = vmul.f32 %v705, 1.442695
        %v709 = vpow.pop %v708
        %v710 = vadd.f32 %v707, 1.0
        %v711 = vadd.f32 %v709, 1.0
        %v712 = vrcp.pop %v710
        %v713 = vrcp.pop %v711
        %v714 = vmul.f32 %v700, %v712
        %v715 = vmul.f32 %v702, %v713
        %s716 = scalar_lea.vmem [#allocation7], 2048
        %v717 = vld [vmem:[%s716] sm:$0xff]
        %v718 = vld [vmem:[%s716 + $0x8] sm:$0xff]
        %v719 = vld [vmem:[%s716 + $0x10] sm:$0xff]
        %v720 = vld [vmem:[%s716 + $0x18] sm:$0xff]
        %v721 = vld [vmem:[%s716 + $0x20] sm:$0xff]
        %v722 = vld [vmem:[%s716 + $0x28] sm:$0xff]
        %v723 = vld [vmem:[%s716 + $0x30] sm:$0xff]
        %v724 = vld [vmem:[%s716 + $0x38] sm:$0xff]
        %v725 = vld [vmem:[%s716 + $0x40] sm:$0xff]
        %v726 = vld [vmem:[%s716 + $0x48] sm:$0xff]
        %v727 = vld [vmem:[%s716 + $0x50] sm:$0xff]
        %v728 = vld [vmem:[%s716 + $0x58] sm:$0xff]
        %v729 = vld [vmem:[%s716 + $0x60] sm:$0xff]
        %v730 = vld [vmem:[%s716 + $0x68] sm:$0xff]
        %v731 = vld [vmem:[%s716 + $0x70] sm:$0xff]
        %v732 = vld [vmem:[%s716 + $0x78] sm:$0xff]
        %v733 = vld [vmem:[%s716 + $0x80] sm:$0xff]
        %v734 = vld [vmem:[%s716 + $0x88] sm:$0xff]
        %v735 = vld [vmem:[%s716 + $0x90] sm:$0xff]
        %v736 = vld [vmem:[%s716 + $0x98] sm:$0xff]
        %v737 = vld [vmem:[%s716 + $0xa0] sm:$0xff]
        %v738 = vld [vmem:[%s716 + $0xa8] sm:$0xff]
        %v739 = vld [vmem:[%s716 + $0xb0] sm:$0xff]
        %v740 = vld [vmem:[%s716 + $0xb8] sm:$0xff]
        %v741 = vld [vmem:[%s716 + $0xc0] sm:$0xff]
        %v742 = vld [vmem:[%s716 + $0xc8] sm:$0xff]
        %v743 = vld [vmem:[%s716 + $0xd0] sm:$0xff]
        %v744 = vld [vmem:[%s716 + $0xd8] sm:$0xff]
        %v745 = vld [vmem:[%s716 + $0xe0] sm:$0xff]
        %v746 = vld [vmem:[%s716 + $0xe8] sm:$0xff]
        %v747 = vld [vmem:[%s716 + $0xf0] sm:$0xff]
        %v748 = vld [vmem:[%s716 + $0xf8] sm:$0xff]
        %v749 = vld [vmem:[%s716 + $0x100] sm:$0xff]
        %v750 = vld [vmem:[%s716 + $0x108] sm:$0xff]
        %v751 = vld [vmem:[%s716 + $0x110] sm:$0xff]
        %v752 = vld [vmem:[%s716 + $0x118] sm:$0xff]
        %v753 = vld [vmem:[%s716 + $0x120] sm:$0xff]
        %v754 = vld [vmem:[%s716 + $0x128] sm:$0xff]
        %v755 = vld [vmem:[%s716 + $0x130] sm:$0xff]
        %v756 = vld [vmem:[%s716 + $0x138] sm:$0xff]
        %v757 = vld [vmem:[%s716 + $0x140] sm:$0xff]
        %v758 = vld [vmem:[%s716 + $0x148] sm:$0xff]
        %v759 = vld [vmem:[%s716 + $0x150] sm:$0xff]
        %v760 = vld [vmem:[%s716 + $0x158] sm:$0xff]
        %v761 = vld [vmem:[%s716 + $0x160] sm:$0xff]
        %v762 = vld [vmem:[%s716 + $0x168] sm:$0xff]
        %v763 = vld [vmem:[%s716 + $0x170] sm:$0xff]
        %v764 = vld [vmem:[%s716 + $0x178] sm:$0xff]
        %v765 = vld [vmem:[%s716 + $0x180] sm:$0xff]
        %v766 = vld [vmem:[%s716 + $0x188] sm:$0xff]
        %v767 = vld [vmem:[%s716 + $0x190] sm:$0xff]
        %v768 = vld [vmem:[%s716 + $0x198] sm:$0xff]
        %v769 = vld [vmem:[%s716 + $0x1a0] sm:$0xff]
        %v770 = vld [vmem:[%s716 + $0x1a8] sm:$0xff]
        %v771 = vld [vmem:[%s716 + $0x1b0] sm:$0xff]
        %v772 = vld [vmem:[%s716 + $0x1b8] sm:$0xff]
        %v773 = vld [vmem:[%s716 + $0x1c0] sm:$0xff]
        %v774 = vld [vmem:[%s716 + $0x1c8] sm:$0xff]
        %v775 = vld [vmem:[%s716 + $0x1d0] sm:$0xff]
        %v776 = vld [vmem:[%s716 + $0x1d8] sm:$0xff]
        %v777 = vld [vmem:[%s716 + $0x1e0] sm:$0xff]
        %v778 = vld [vmem:[%s716 + $0x1e8] sm:$0xff]
        %v779 = vld [vmem:[%s716 + $0x1f0] sm:$0xff]
        %v780 = vld [vmem:[%s716 + $0x1f8] sm:$0xff]
        %v781 = vld [vmem:[%s716 + $0x200] sm:$0xff]
        %v782 = vld [vmem:[%s716 + $0x208] sm:$0xff]
        %v783 = vld [vmem:[%s716 + $0x210] sm:$0xff]
        %v784 = vld [vmem:[%s716 + $0x218] sm:$0xff]
        %v785 = vld [vmem:[%s716 + $0x220] sm:$0xff]
        %v786 = vld [vmem:[%s716 + $0x228] sm:$0xff]
        %v787 = vld [vmem:[%s716 + $0x230] sm:$0xff]
        %v788 = vld [vmem:[%s716 + $0x238] sm:$0xff]
        %v789 = vld [vmem:[%s716 + $0x240] sm:$0xff]
        %v790 = vld [vmem:[%s716 + $0x248] sm:$0xff]
        %v791 = vld [vmem:[%s716 + $0x250] sm:$0xff]
        %v792 = vld [vmem:[%s716 + $0x258] sm:$0xff]
        %v793 = vld [vmem:[%s716 + $0x260] sm:$0xff]
        %v794 = vld [vmem:[%s716 + $0x268] sm:$0xff]
        %v795 = vld [vmem:[%s716 + $0x270] sm:$0xff]
        %v796 = vld [vmem:[%s716 + $0x278] sm:$0xff]
        %v797 = vld [vmem:[%s716 + $0x280] sm:$0xff]
        %v798 = vld [vmem:[%s716 + $0x288] sm:$0xff]
        %v799 = vld [vmem:[%s716 + $0x290] sm:$0xff]
        %v800 = vld [vmem:[%s716 + $0x298] sm:$0xff]
        %v801 = vld [vmem:[%s716 + $0x2a0] sm:$0xff]
        %v802 = vld [vmem:[%s716 + $0x2a8] sm:$0xff]
        %v803 = vld [vmem:[%s716 + $0x2b0] sm:$0xff]
        %v804 = vld [vmem:[%s716 + $0x2b8] sm:$0xff]
        %v805 = vld [vmem:[%s716 + $0x2c0] sm:$0xff]
        %v806 = vld [vmem:[%s716 + $0x2c8] sm:$0xff]
        %v807 = vld [vmem:[%s716 + $0x2d0] sm:$0xff]
        %v808 = vld [vmem:[%s716 + $0x2d8] sm:$0xff]
        %v809 = vld [vmem:[%s716 + $0x2e0] sm:$0xff]
        %v810 = vld [vmem:[%s716 + $0x2e8] sm:$0xff]
        %v811 = vld [vmem:[%s716 + $0x2f0] sm:$0xff]
        %v812 = vld [vmem:[%s716 + $0x2f8] sm:$0xff]
        %v813 = vld [vmem:[%s716 + $0x300] sm:$0xff]
        %v814 = vld [vmem:[%s716 + $0x308] sm:$0xff]
        %v815 = vld [vmem:[%s716 + $0x310] sm:$0xff]
        %v816 = vld [vmem:[%s716 + $0x318] sm:$0xff]
        %v817 = vld [vmem:[%s716 + $0x320] sm:$0xff]
        %v818 = vld [vmem:[%s716 + $0x328] sm:$0xff]
        %v819 = vld [vmem:[%s716 + $0x330] sm:$0xff]
        %v820 = vld [vmem:[%s716 + $0x338] sm:$0xff]
        %v821 = vld [vmem:[%s716 + $0x340] sm:$0xff]
        %v822 = vld [vmem:[%s716 + $0x348] sm:$0xff]
        %v823 = vld [vmem:[%s716 + $0x350] sm:$0xff]
        %v824 = vld [vmem:[%s716 + $0x358] sm:$0xff]
        %v825 = vld [vmem:[%s716 + $0x360] sm:$0xff]
        %v826 = vld [vmem:[%s716 + $0x368] sm:$0xff]
        %v827 = vld [vmem:[%s716 + $0x370] sm:$0xff]
        %v828 = vld [vmem:[%s716 + $0x378] sm:$0xff]
        %v829 = vld [vmem:[%s716 + $0x380] sm:$0xff]
        %v830 = vld [vmem:[%s716 + $0x388] sm:$0xff]
        %v831 = vld [vmem:[%s716 + $0x390] sm:$0xff]
        %v832 = vld [vmem:[%s716 + $0x398] sm:$0xff]
        %v833 = vld [vmem:[%s716 + $0x3a0] sm:$0xff]
        %v834 = vld [vmem:[%s716 + $0x3a8] sm:$0xff]
        %v835 = vld [vmem:[%s716 + $0x3b0] sm:$0xff]
        %v836 = vld [vmem:[%s716 + $0x3b8] sm:$0xff]
        %v837 = vld [vmem:[%s716 + $0x3c0] sm:$0xff]
        %v838 = vld [vmem:[%s716 + $0x3c8] sm:$0xff]
        %v839 = vld [vmem:[%s716 + $0x3d0] sm:$0xff]
        %v840 = vld [vmem:[%s716 + $0x3d8] sm:$0xff]
        %v841 = vld [vmem:[%s716 + $0x3e0] sm:$0xff]
        %v842 = vld [vmem:[%s716 + $0x3e8] sm:$0xff]
        %v843 = vld [vmem:[%s716 + $0x3f0] sm:$0xff]
        %v844 = vld [vmem:[%s716 + $0x3f8] sm:$0xff]
        %v845 = vld [vmem:[%s716 + $0x400] sm:$0xff]
        %v846 = vld [vmem:[%s716 + $0x408] sm:$0xff]
        %v847 = vld [vmem:[%s716 + $0x410] sm:$0xff]
        %v848 = vld [vmem:[%s716 + $0x418] sm:$0xff]
        %v849 = vld [vmem:[%s716 + $0x420] sm:$0xff]
        %v850 = vld [vmem:[%s716 + $0x428] sm:$0xff]
        %v851 = vld [vmem:[%s716 + $0x430] sm:$0xff]
        %v852 = vld [vmem:[%s716 + $0x438] sm:$0xff]
        %v853 = vld [vmem:[%s716 + $0x440] sm:$0xff]
        %v854 = vld [vmem:[%s716 + $0x448] sm:$0xff]
        %v855 = vld [vmem:[%s716 + $0x450] sm:$0xff]
        %v856 = vld [vmem:[%s716 + $0x458] sm:$0xff]
        %v857 = vld [vmem:[%s716 + $0x460] sm:$0xff]
        %v858 = vld [vmem:[%s716 + $0x468] sm:$0xff]
        %v859 = vld [vmem:[%s716 + $0x470] sm:$0xff]
        %v860 = vld [vmem:[%s716 + $0x478] sm:$0xff]
        %v861 = vld [vmem:[%s716 + $0x480] sm:$0xff]
        %v862 = vld [vmem:[%s716 + $0x488] sm:$0xff]
        %v863 = vld [vmem:[%s716 + $0x490] sm:$0xff]
        %v864 = vld [vmem:[%s716 + $0x498] sm:$0xff]
        %v865 = vld [vmem:[%s716 + $0x4a0] sm:$0xff]
        %v866 = vld [vmem:[%s716 + $0x4a8] sm:$0xff]
        %v867 = vld [vmem:[%s716 + $0x4b0] sm:$0xff]
        %v868 = vld [vmem:[%s716 + $0x4b8] sm:$0xff]
        %v869 = vld [vmem:[%s716 + $0x4c0] sm:$0xff]
        %v870 = vld [vmem:[%s716 + $0x4c8] sm:$0xff]
        %v871 = vld [vmem:[%s716 + $0x4d0] sm:$0xff]
        %v872 = vld [vmem:[%s716 + $0x4d8] sm:$0xff]
        %v873 = vld [vmem:[%s716 + $0x4e0] sm:$0xff]
        %v874 = vld [vmem:[%s716 + $0x4e8] sm:$0xff]
        %v875 = vld [vmem:[%s716 + $0x4f0] sm:$0xff]
        %v876 = vld [vmem:[%s716 + $0x4f8] sm:$0xff]
        %v877 = vld [vmem:[%s716 + $0x500] sm:$0xff]
        %v878 = vld [vmem:[%s716 + $0x508] sm:$0xff]
        %v879 = vld [vmem:[%s716 + $0x510] sm:$0xff]
        %v880 = vld [vmem:[%s716 + $0x518] sm:$0xff]
        %v881 = vld [vmem:[%s716 + $0x520] sm:$0xff]
        %v882 = vld [vmem:[%s716 + $0x528] sm:$0xff]
        %v883 = vld [vmem:[%s716 + $0x530] sm:$0xff]
        %v884 = vld [vmem:[%s716 + $0x538] sm:$0xff]
        %v885 = vld [vmem:[%s716 + $0x540] sm:$0xff]
        %v886 = vld [vmem:[%s716 + $0x548] sm:$0xff]
        %v887 = vld [vmem:[%s716 + $0x550] sm:$0xff]
        %v888 = vld [vmem:[%s716 + $0x558] sm:$0xff]
        %v889 = vld [vmem:[%s716 + $0x560] sm:$0xff]
        %v890 = vld [vmem:[%s716 + $0x568] sm:$0xff]
        %v891 = vld [vmem:[%s716 + $0x570] sm:$0xff]
        %v892 = vld [vmem:[%s716 + $0x578] sm:$0xff]
        %v893 = vld [vmem:[%s716 + $0x580] sm:$0xff]
        %v894 = vld [vmem:[%s716 + $0x588] sm:$0xff]
        %v895 = vld [vmem:[%s716 + $0x590] sm:$0xff]
        %v896 = vld [vmem:[%s716 + $0x598] sm:$0xff]
        %v897 = vld [vmem:[%s716 + $0x5a0] sm:$0xff]
        %v898 = vld [vmem:[%s716 + $0x5a8] sm:$0xff]
        %v899 = vld [vmem:[%s716 + $0x5b0] sm:$0xff]
        %v900 = vld [vmem:[%s716 + $0x5b8] sm:$0xff]
        %v901 = vld [vmem:[%s716 + $0x5c0] sm:$0xff]
        %v902 = vld [vmem:[%s716 + $0x5c8] sm:$0xff]
        %v903 = vld [vmem:[%s716 + $0x5d0] sm:$0xff]
        %v904 = vld [vmem:[%s716 + $0x5d8] sm:$0xff]
        %v905 = vld [vmem:[%s716 + $0x5e0] sm:$0xff]
        %v906 = vld [vmem:[%s716 + $0x5e8] sm:$0xff]
        %v907 = vld [vmem:[%s716 + $0x5f0] sm:$0xff]
        %v908 = vld [vmem:[%s716 + $0x5f8] sm:$0xff]
        %v909 = vld [vmem:[%s716 + $0x600] sm:$0xff]
        %v910 = vld [vmem:[%s716 + $0x608] sm:$0xff]
        %v911 = vld [vmem:[%s716 + $0x610] sm:$0xff]
        %v912 = vld [vmem:[%s716 + $0x618] sm:$0xff]
        %v913 = vld [vmem:[%s716 + $0x620] sm:$0xff]
        %v914 = vld [vmem:[%s716 + $0x628] sm:$0xff]
        %v915 = vld [vmem:[%s716 + $0x630] sm:$0xff]
        %v916 = vld [vmem:[%s716 + $0x638] sm:$0xff]
        %v917 = vld [vmem:[%s716 + $0x640] sm:$0xff]
        %v918 = vld [vmem:[%s716 + $0x648] sm:$0xff]
        %v919 = vld [vmem:[%s716 + $0x650] sm:$0xff]
        %v920 = vld [vmem:[%s716 + $0x658] sm:$0xff]
        %v921 = vld [vmem:[%s716 + $0x660] sm:$0xff]
        %v922 = vld [vmem:[%s716 + $0x668] sm:$0xff]
        %v923 = vld [vmem:[%s716 + $0x670] sm:$0xff]
        %v924 = vld [vmem:[%s716 + $0x678] sm:$0xff]
        %v925 = vld [vmem:[%s716 + $0x680] sm:$0xff]
        %v926 = vld [vmem:[%s716 + $0x688] sm:$0xff]
        %v927 = vld [vmem:[%s716 + $0x690] sm:$0xff]
        %v928 = vld [vmem:[%s716 + $0x698] sm:$0xff]
        %v929 = vld [vmem:[%s716 + $0x6a0] sm:$0xff]
        %v930 = vld [vmem:[%s716 + $0x6a8] sm:$0xff]
        %v931 = vld [vmem:[%s716 + $0x6b0] sm:$0xff]
        %v932 = vld [vmem:[%s716 + $0x6b8] sm:$0xff]
        %v933 = vld [vmem:[%s716 + $0x6c0] sm:$0xff]
        %v934 = vld [vmem:[%s716 + $0x6c8] sm:$0xff]
        %v935 = vld [vmem:[%s716 + $0x6d0] sm:$0xff]
        %v936 = vld [vmem:[%s716 + $0x6d8] sm:$0xff]
        %v937 = vld [vmem:[%s716 + $0x6e0] sm:$0xff]
        %v938 = vld [vmem:[%s716 + $0x6e8] sm:$0xff]
        %v939 = vld [vmem:[%s716 + $0x6f0] sm:$0xff]
        %v940 = vld [vmem:[%s716 + $0x6f8] sm:$0xff]
        %v941 = vld [vmem:[%s716 + $0x700] sm:$0xff]
        %v942 = vld [vmem:[%s716 + $0x708] sm:$0xff]
        %v943 = vld [vmem:[%s716 + $0x710] sm:$0xff]
        %v944 = vld [vmem:[%s716 + $0x718] sm:$0xff]
        %v945 = vld [vmem:[%s716 + $0x720] sm:$0xff]
        %v946 = vld [vmem:[%s716 + $0x728] sm:$0xff]
        %v947 = vld [vmem:[%s716 + $0x730] sm:$0xff]
        %v948 = vld [vmem:[%s716 + $0x738] sm:$0xff]
        %v949 = vld [vmem:[%s716 + $0x740] sm:$0xff]
        %v950 = vld [vmem:[%s716 + $0x748] sm:$0xff]
        %v951 = vld [vmem:[%s716 + $0x750] sm:$0xff]
        %v952 = vld [vmem:[%s716 + $0x758] sm:$0xff]
        %v953 = vld [vmem:[%s716 + $0x760] sm:$0xff]
        %v954 = vld [vmem:[%s716 + $0x768] sm:$0xff]
        %v955 = vld [vmem:[%s716 + $0x770] sm:$0xff]
        %v956 = vld [vmem:[%s716 + $0x778] sm:$0xff]
        %v957 = vld [vmem:[%s716 + $0x780] sm:$0xff]
        %v958 = vld [vmem:[%s716 + $0x788] sm:$0xff]
        %v959 = vld [vmem:[%s716 + $0x790] sm:$0xff]
        %v960 = vld [vmem:[%s716 + $0x798] sm:$0xff]
        %v961 = vld [vmem:[%s716 + $0x7a0] sm:$0xff]
        %v962 = vld [vmem:[%s716 + $0x7a8] sm:$0xff]
        %v963 = vld [vmem:[%s716 + $0x7b0] sm:$0xff]
        %v964 = vld [vmem:[%s716 + $0x7b8] sm:$0xff]
        %v965 = vld [vmem:[%s716 + $0x7c0] sm:$0xff]
        %v966 = vld [vmem:[%s716 + $0x7c8] sm:$0xff]
        %v967 = vld [vmem:[%s716 + $0x7d0] sm:$0xff]
        %v968 = vld [vmem:[%s716 + $0x7d8] sm:$0xff]
        %v969 = vld [vmem:[%s716 + $0x7e0] sm:$0xff]
        %v970 = vld [vmem:[%s716 + $0x7e8] sm:$0xff]
        %v971 = vld [vmem:[%s716 + $0x7f0] sm:$0xff]
        %v972 = vld [vmem:[%s716 + $0x7f8] sm:$0xff]
        %973 = vmatprep.subr.mxu0 %v718
        %974 = vmatpush1.msra.mxu0 %v717
        %975 = vmatprep.subr.mxu0 %v726
        %976 = vmatpush1.msra.mxu0 %v725
        %977 = vmatprep.subr.mxu0 %v734
        %978 = vmatpush1.msra.mxu0 %v733
        %979 = vmatprep.subr.mxu0 %v742
        %980 = vmatpush1.msra.mxu0 %v741
        %981 = vmatprep.subr.mxu0 %v750
        %982 = vmatpush1.msra.mxu0 %v749
        %983 = vmatprep.subr.mxu0 %v758
        %984 = vmatpush1.msra.mxu0 %v757
        %985 = vmatprep.subr.mxu0 %v766
        %986 = vmatpush1.msra.mxu0 %v765
        %987 = vmatprep.subr.mxu0 %v774
        %988 = vmatpush1.msra.mxu0 %v773
        %989 = vmatprep.subr.mxu0 %v782
        %990 = vmatpush1.msra.mxu0 %v781
        %991 = vmatprep.subr.mxu0 %v790
        %992 = vmatpush1.msra.mxu0 %v789
        %993 = vmatprep.subr.mxu0 %v798
        %994 = vmatpush1.msra.mxu0 %v797
        %995 = vmatprep.subr.mxu0 %v806
        %996 = vmatpush1.msra.mxu0 %v805
        %997 = vmatprep.subr.mxu0 %v814
        %998 = vmatpush1.msra.mxu0 %v813
        %999 = vmatprep.subr.mxu0 %v822
        %1000 = vmatpush1.msra.mxu0 %v821
        %1001 = vmatprep.subr.mxu0 %v830
        %1002 = vmatpush1.msra.mxu0 %v829
        %1003 = vmatprep.subr.mxu0 %v838
        %1004 = vmatpush1.msra.mxu0 %v837
        %1005 = vmatprep.subr.mxu0 %v846
        %1006 = vmatpush1.msra.mxu0 %v845
        %1007 = vmatprep.subr.mxu0 %v854
        %1008 = vmatpush1.msra.mxu0 %v853
        %1009 = vmatprep.subr.mxu0 %v862
        %1010 = vmatpush1.msra.mxu0 %v861
        %1011 = vmatprep.subr.mxu0 %v870
        %1012 = vmatpush1.msra.mxu0 %v869
        %1013 = vmatprep.subr.mxu0 %v878
        %1014 = vmatpush1.msra.mxu0 %v877
        %1015 = vmatprep.subr.mxu0 %v886
        %1016 = vmatpush1.msra.mxu0 %v885
        %1017 = vmatprep.subr.mxu0 %v894
        %1018 = vmatpush1.msra.mxu0 %v893
        %1019 = vmatprep.subr.mxu0 %v902
        %1020 = vmatpush1.msra.mxu0 %v901
        %1021 = vmatprep.subr.mxu0 %v910
        %1022 = vmatpush1.msra.mxu0 %v909
        %1023 = vmatprep.subr.mxu0 %v918
        %1024 = vmatpush1.msra.mxu0 %v917
        %1025 = vmatprep.subr.mxu0 %v926
        %1026 = vmatpush1.msra.mxu0 %v925
        %1027 = vmatprep.subr.mxu0 %v934
        %1028 = vmatpush1.msra.mxu0 %v933
        %1029 = vmatprep.subr.mxu0 %v942
        %1030 = vmatpush1.msra.mxu0 %v941
        %1031 = vmatprep.subr.mxu0 %v950
        %1032 = vmatpush1.msra.mxu0 %v949
        %1033 = vmatprep.subr.mxu0 %v958
        %1034 = vmatpush1.msra.mxu0 %v957
        %1035 = vmatprep.subr.mxu0 %v966
        %1036 = vmatpush1.msra.mxu0 %v965
        %1037 = vmatprep.mubr.f32.mxu0 %v715
        %1038 = vmatmul.mubr.f32.gmra.mrb[0].mxu0 %v714
        %v1039 = vpop.f32.mrb[0].mxu0
        %v1040 = vadd.f32 0.0, %v1039
        %v1041 = vpop.f32.mrb[0].mxu0
        %v1042 = vadd.f32 0.0, %v1041
        %1043 = vdwg.mxu0
        %1044 = vmatprep.subr.mxu0 %v720
        %1045 = vmatpush1.msra.mxu0 %v719
        %1046 = vmatprep.subr.mxu0 %v728
        %1047 = vmatpush1.msra.mxu0 %v727
        %1048 = vmatprep.subr.mxu0 %v736
        %1049 = vmatpush1.msra.mxu0 %v735
        %1050 = vmatprep.subr.mxu0 %v744
        %1051 = vmatpush1.msra.mxu0 %v743
        %1052 = vmatprep.subr.mxu0 %v752
        %1053 = vmatpush1.msra.mxu0 %v751
        %1054 = vmatprep.subr.mxu0 %v760
        %1055 = vmatpush1.msra.mxu0 %v759
        %1056 = vmatprep.subr.mxu0 %v768
        %1057 = vmatpush1.msra.mxu0 %v767
        %1058 = vmatprep.subr.mxu0 %v776
        %1059 = vmatpush1.msra.mxu0 %v775
        %1060 = vmatprep.subr.mxu0 %v784
        %1061 = vmatpush1.msra.mxu0 %v783
        %1062 = vmatprep.subr.mxu0 %v792
        %1063 = vmatpush1.msra.mxu0 %v791
        %1064 = vmatprep.subr.mxu0 %v800
        %1065 = vmatpush1.msra.mxu0 %v799
        %1066 = vmatprep.subr.mxu0 %v808
        %1067 = vmatpush1.msra.mxu0 %v807
        %1068 = vmatprep.subr.mxu0 %v816
        %1069 = vmatpush1.msra.mxu0 %v815
        %1070 = vmatprep.subr.mxu0 %v824
        %1071 = vmatpush1.msra.mxu0 %v823
        %1072 = vmatprep.subr.mxu0 %v832
        %1073 = vmatpush1.msra.mxu0 %v831
        %1074 = vmatprep.subr.mxu0 %v840
        %1075 = vmatpush1.msra.mxu0 %v839
        %1076 = vmatprep.subr.mxu0 %v848
        %1077 = vmatpush1.msra.mxu0 %v847
        %1078 = vmatprep.subr.mxu0 %v856
        %1079 = vmatpush1.msra.mxu0 %v855
        %1080 = vmatprep.subr.mxu0 %v864
        %1081 = vmatpush1.msra.mxu0 %v863
        %1082 = vmatprep.subr.mxu0 %v872
        %1083 = vmatpush1.msra.mxu0 %v871
        %1084 = vmatprep.subr.mxu0 %v880
        %1085 = vmatpush1.msra.mxu0 %v879
        %1086 = vmatprep.subr.mxu0 %v888
        %1087 = vmatpush1.msra.mxu0 %v887
        %1088 = vmatprep.subr.mxu0 %v896
        %1089 = vmatpush1.msra.mxu0 %v895
        %1090 = vmatprep.subr.mxu0 %v904
        %1091 = vmatpush1.msra.mxu0 %v903
        %1092 = vmatprep.subr.mxu0 %v912
        %1093 = vmatpush1.msra.mxu0 %v911
        %1094 = vmatprep.subr.mxu0 %v920
        %1095 = vmatpush1.msra.mxu0 %v919
        %1096 = vmatprep.subr.mxu0 %v928
        %1097 = vmatpush1.msra.mxu0 %v927
        %1098 = vmatprep.subr.mxu0 %v936
        %1099 = vmatpush1.msra.mxu0 %v935
        %1100 = vmatprep.subr.mxu0 %v944
        %1101 = vmatpush1.msra.mxu0 %v943
        %1102 = vmatprep.subr.mxu0 %v952
        %1103 = vmatpush1.msra.mxu0 %v951
        %1104 = vmatprep.subr.mxu0 %v960
        %1105 = vmatpush1.msra.mxu0 %v959
        %1106 = vmatprep.subr.mxu0 %v968
        %1107 = vmatpush1.msra.mxu0 %v967
        %1108 = vmatprep.mubr.f32.mxu0 %v715
        %1109 = vmatmul.mubr.f32.gmra.mrb[0].mxu0 %v714
        %v1110 = vpop.f32.mrb[0].mxu0
        %v1111 = vadd.f32 0.0, %v1110
        %v1112 = vpop.f32.mrb[0].mxu0
        %v1113 = vadd.f32 0.0, %v1112
        %1114 = vdwg.mxu0
        %1115 = vmatprep.subr.mxu0 %v722
        %1116 = vmatpush1.msra.mxu0 %v721
        %1117 = vmatprep.subr.mxu0 %v730
        %1118 = vmatpush1.msra.mxu0 %v729
        %1119 = vmatprep.subr.mxu0 %v738
        %1120 = vmatpush1.msra.mxu0 %v737
        %1121 = vmatprep.subr.mxu0 %v746
        %1122 = vmatpush1.msra.mxu0 %v745
        %1123 = vmatprep.subr.mxu0 %v754
        %1124 = vmatpush1.msra.mxu0 %v753
        %1125 = vmatprep.subr.mxu0 %v762
        %1126 = vmatpush1.msra.mxu0 %v761
        %1127 = vmatprep.subr.mxu0 %v770
        %1128 = vmatpush1.msra.mxu0 %v769
        %1129 = vmatprep.subr.mxu0 %v778
        %1130 = vmatpush1.msra.mxu0 %v777
        %1131 = vmatprep.subr.mxu0 %v786
        %1132 = vmatpush1.msra.mxu0 %v785
        %1133 = vmatprep.subr.mxu0 %v794
        %1134 = vmatpush1.msra.mxu0 %v793
        %1135 = vmatprep.subr.mxu0 %v802
        %1136 = vmatpush1.msra.mxu0 %v801
        %1137 = vmatprep.subr.mxu0 %v810
        %1138 = vmatpush1.msra.mxu0 %v809
        %1139 = vmatprep.subr.mxu0 %v818
        %1140 = vmatpush1.msra.mxu0 %v817
        %1141 = vmatprep.subr.mxu0 %v826
        %1142 = vmatpush1.msra.mxu0 %v825
        %1143 = vmatprep.subr.mxu0 %v834
        %1144 = vmatpush1.msra.mxu0 %v833
        %1145 = vmatprep.subr.mxu0 %v842
        %1146 = vmatpush1.msra.mxu0 %v841
        %1147 = vmatprep.subr.mxu0 %v850
        %1148 = vmatpush1.msra.mxu0 %v849
        %1149 = vmatprep.subr.mxu0 %v858
        %1150 = vmatpush1.msra.mxu0 %v857
        %1151 = vmatprep.subr.mxu0 %v866
        %1152 = vmatpush1.msra.mxu0 %v865
        %1153 = vmatprep.subr.mxu0 %v874
        %1154 = vmatpush1.msra.mxu0 %v873
        %1155 = vmatprep.subr.mxu0 %v882
        %1156 = vmatpush1.msra.mxu0 %v881
        %1157 = vmatprep.subr.mxu0 %v890
        %1158 = vmatpush1.msra.mxu0 %v889
        %1159 = vmatprep.subr.mxu0 %v898
        %1160 = vmatpush1.msra.mxu0 %v897
        %1161 = vmatprep.subr.mxu0 %v906
        %1162 = vmatpush1.msra.mxu0 %v905
        %1163 = vmatprep.subr.mxu0 %v914
        %1164 = vmatpush1.msra.mxu0 %v913
        %1165 = vmatprep.subr.mxu0 %v922
        %1166 = vmatpush1.msra.mxu0 %v921
        %1167 = vmatprep.subr.mxu0 %v930
        %1168 = vmatpush1.msra.mxu0 %v929
        %1169 = vmatprep.subr.mxu0 %v938
        %1170 = vmatpush1.msra.mxu0 %v937
        %1171 = vmatprep.subr.mxu0 %v946
        %1172 = vmatpush1.msra.mxu0 %v945
        %1173 = vmatprep.subr.mxu0 %v954
        %1174 = vmatpush1.msra.mxu0 %v953
        %1175 = vmatprep.subr.mxu0 %v962
        %1176 = vmatpush1.msra.mxu0 %v961
        %1177 = vmatprep.subr.mxu0 %v970
        %1178 = vmatpush1.msra.mxu0 %v969
        %1179 = vmatprep.mubr.f32.mxu0 %v715
        %1180 = vmatmul.mubr.f32.gmra.mrb[0].mxu0 %v714
        %v1181 = vpop.f32.mrb[0].mxu0
        %v1182 = vadd.f32 0.0, %v1181
        %v1183 = vpop.f32.mrb[0].mxu0
        %v1184 = vadd.f32 0.0, %v1183
        %1185 = vdwg.mxu0
        %1186 = vmatprep.subr.mxu0 %v724
        %1187 = vmatpush1.msra.mxu0 %v723
        %1188 = vmatprep.subr.mxu0 %v732
        %1189 = vmatpush1.msra.mxu0 %v731
        %1190 = vmatprep.subr.mxu0 %v740
        %1191 = vmatpush1.msra.mxu0 %v739
        %1192 = vmatprep.subr.mxu0 %v748
        %1193 = vmatpush1.msra.mxu0 %v747
        %1194 = vmatprep.subr.mxu0 %v756
        %1195 = vmatpush1.msra.mxu0 %v755
        %1196 = vmatprep.subr.mxu0 %v764
        %1197 = vmatpush1.msra.mxu0 %v763
        %1198 = vmatprep.subr.mxu0 %v772
        %1199 = vmatpush1.msra.mxu0 %v771
        %1200 = vmatprep.subr.mxu0 %v780
        %1201 = vmatpush1.msra.mxu0 %v779
        %1202 = vmatprep.subr.mxu0 %v788
        %1203 = vmatpush1.msra.mxu0 %v787
        %1204 = vmatprep.subr.mxu0 %v796
        %1205 = vmatpush1.msra.mxu0 %v795
        %1206 = vmatprep.subr.mxu0 %v804
        %1207 = vmatpush1.msra.mxu0 %v803
        %1208 = vmatprep.subr.mxu0 %v812
        %1209 = vmatpush1.msra.mxu0 %v811
        %1210 = vmatprep.subr.mxu0 %v820
        %1211 = vmatpush1.msra.mxu0 %v819
        %1212 = vmatprep.subr.mxu0 %v828
        %1213 = vmatpush1.msra.mxu0 %v827
        %1214 = vmatprep.subr.mxu0 %v836
        %1215 = vmatpush1.msra.mxu0 %v835
        %1216 = vmatprep.subr.mxu0 %v844
        %1217 = vmatpush1.msra.mxu0 %v843
        %1218 = vmatprep.subr.mxu0 %v852
        %1219 = vmatpush1.msra.mxu0 %v851
        %1220 = vmatprep.subr.mxu0 %v860
        %1221 = vmatpush1.msra.mxu0 %v859
        %1222 = vmatprep.subr.mxu0 %v868
        %1223 = vmatpush1.msra.mxu0 %v867
        %1224 = vmatprep.subr.mxu0 %v876
        %1225 = vmatpush1.msra.mxu0 %v875
        %1226 = vmatprep.subr.mxu0 %v884
        %1227 = vmatpush1.msra.mxu0 %v883
        %1228 = vmatprep.subr.mxu0 %v892
        %1229 = vmatpush1.msra.mxu0 %v891
        %1230 = vmatprep.subr.mxu0 %v900
        %1231 = vmatpush1.msra.mxu0 %v899
        %1232 = vmatprep.subr.mxu0 %v908
        %1233 = vmatpush1.msra.mxu0 %v907
        %1234 = vmatprep.subr.mxu0 %v916
        %1235 = vmatpush1.msra.mxu0 %v915
        %1236 = vmatprep.subr.mxu0 %v924
        %1237 = vmatpush1.msra.mxu0 %v923
        %1238 = vmatprep.subr.mxu0 %v932
        %1239 = vmatpush1.msra.mxu0 %v931
        %1240 = vmatprep.subr.mxu0 %v940
        %1241 = vmatpush1.msra.mxu0 %v939
        %1242 = vmatprep.subr.mxu0 %v948
        %1243 = vmatpush1.msra.mxu0 %v947
        %1244 = vmatprep.subr.mxu0 %v956
        %1245 = vmatpush1.msra.mxu0 %v955
        %1246 = vmatprep.subr.mxu0 %v964
        %1247 = vmatpush1.msra.mxu0 %v963
        %1248 = vmatprep.subr.mxu0 %v972
        %1249 = vmatpush1.msra.mxu0 %v971
        %1250 = vmatprep.mubr.f32.mxu0 %v715
        %1251 = vmatmul.mubr.f32.gmra.mrb[0].mxu0 %v714
        %v1252 = vpop.f32.mrb[0].mxu0
        %v1253 = vadd.f32 0.0, %v1252
        %v1254 = vpop.f32.mrb[0].mxu0
        %v1255 = vadd.f32 0.0, %v1254
        %1256 = vdwg.mxu0
        %1257 = vmatprep.subr.mxu0 %v366
        %1258 = vmatpush1.msra.mxu0 %v365
        %1259 = vmatprep.subr.mxu0 %v374
        %1260 = vmatpush1.msra.mxu0 %v373
        %1261 = vmatprep.subr.mxu0 %v382
        %1262 = vmatpush1.msra.mxu0 %v381
        %1263 = vmatprep.subr.mxu0 %v390
        %1264 = vmatpush1.msra.mxu0 %v389
        %1265 = vmatprep.subr.mxu0 %v398
        %1266 = vmatpush1.msra.mxu0 %v397
        %1267 = vmatprep.subr.mxu0 %v406
        %1268 = vmatpush1.msra.mxu0 %v405
        %1269 = vmatprep.subr.mxu0 %v414
        %1270 = vmatpush1.msra.mxu0 %v413
        %1271 = vmatprep.subr.mxu0 %v422
        %1272 = vmatpush1.msra.mxu0 %v421
        %1273 = vmatprep.subr.mxu0 %v430
        %1274 = vmatpush1.msra.mxu0 %v429
        %1275 = vmatprep.subr.mxu0 %v438
        %1276 = vmatpush1.msra.mxu0 %v437
        %1277 = vmatprep.subr.mxu0 %v446
        %1278 = vmatpush1.msra.mxu0 %v445
        %1279 = vmatprep.subr.mxu0 %v454
        %1280 = vmatpush1.msra.mxu0 %v453
        %1281 = vmatprep.subr.mxu0 %v462
        %1282 = vmatpush1.msra.mxu0 %v461
        %1283 = vmatprep.subr.mxu0 %v470
        %1284 = vmatpush1.msra.mxu0 %v469
        %1285 = vmatprep.subr.mxu0 %v478
        %1286 = vmatpush1.msra.mxu0 %v477
        %1287 = vmatprep.subr.mxu0 %v486
        %1288 = vmatpush1.msra.mxu0 %v485
        %1289 = vmatprep.subr.mxu0 %v494
        %1290 = vmatpush1.msra.mxu0 %v493
        %1291 = vmatprep.subr.mxu0 %v502
        %1292 = vmatpush1.msra.mxu0 %v501
        %1293 = vmatprep.subr.mxu0 %v510
        %1294 = vmatpush1.msra.mxu0 %v509
        %1295 = vmatprep.subr.mxu0 %v518
        %1296 = vmatpush1.msra.mxu0 %v517
        %1297 = vmatprep.subr.mxu0 %v526
        %1298 = vmatpush1.msra.mxu0 %v525
        %1299 = vmatprep.subr.mxu0 %v534
        %1300 = vmatpush1.msra.mxu0 %v533
        %1301 = vmatprep.subr.mxu0 %v542
        %1302 = vmatpush1.msra.mxu0 %v541
        %1303 = vmatprep.subr.mxu0 %v550
        %1304 = vmatpush1.msra.mxu0 %v549
        %1305 = vmatprep.subr.mxu0 %v558
        %1306 = vmatpush1.msra.mxu0 %v557
        %1307 = vmatprep.subr.mxu0 %v566
        %1308 = vmatpush1.msra.mxu0 %v565
        %1309 = vmatprep.subr.mxu0 %v574
        %1310 = vmatpush1.msra.mxu0 %v573
        %1311 = vmatprep.subr.mxu0 %v582
        %1312 = vmatpush1.msra.mxu0 %v581
        %1313 = vmatprep.subr.mxu0 %v590
        %1314 = vmatpush1.msra.mxu0 %v589
        %1315 = vmatprep.subr.mxu0 %v598
        %1316 = vmatpush1.msra.mxu0 %v597
        %1317 = vmatprep.subr.mxu0 %v606
        %1318 = vmatpush1.msra.mxu0 %v605
        %1319 = vmatprep.subr.mxu0 %v614
        %1320 = vmatpush1.msra.mxu0 %v613
        %1321 = vmatprep.mubr.f32.mxu0 %v364
        %1322 = vmatmul.mubr.f32.gmra.mrb[0].mxu0 %v363
        %v1323 = vpop.f32.mrb[0].mxu0
        %v1324 = vadd.f32 %v1040, %v1323
        %v1325 = vpop.f32.mrb[0].mxu0
        %v1326 = vadd.f32 %v1042, %v1325
        %1327 = vdwg.mxu0
        %1328 = vmatprep.subr.mxu0 %v368
        %1329 = vmatpush1.msra.mxu0 %v367
        %1330 = vmatprep.subr.mxu0 %v376
        %1331 = vmatpush1.msra.mxu0 %v375
        %1332 = vmatprep.subr.mxu0 %v384
        %1333 = vmatpush1.msra.mxu0 %v383
        %1334 = vmatprep.subr.mxu0 %v392
        %1335 = vmatpush1.msra.mxu0 %v391
        %1336 = vmatprep.subr.mxu0 %v400
        %1337 = vmatpush1.msra.mxu0 %v399
        %1338 = vmatprep.subr.mxu0 %v408
        %1339 = vmatpush1.msra.mxu0 %v407
        %1340 = vmatprep.subr.mxu0 %v416
        %1341 = vmatpush1.msra.mxu0 %v415
        %1342 = vmatprep.subr.mxu0 %v424
        %1343 = vmatpush1.msra.mxu0 %v423
        %1344 = vmatprep.subr.mxu0 %v432
        %1345 = vmatpush1.msra.mxu0 %v431
        %1346 = vmatprep.subr.mxu0 %v440
        %1347 = vmatpush1.msra.mxu0 %v439
        %1348 = vmatprep.subr.mxu0 %v448
        %1349 = vmatpush1.msra.mxu0 %v447
        %1350 = vmatprep.subr.mxu0 %v456
        %1351 = vmatpush1.msra.mxu0 %v455
        %1352 = vmatprep.subr.mxu0 %v464
        %1353 = vmatpush1.msra.mxu0 %v463
        %1354 = vmatprep.subr.mxu0 %v472
        %1355 = vmatpush1.msra.mxu0 %v471
        %1356 = vmatprep.subr.mxu0 %v480
        %1357 = vmatpush1.msra.mxu0 %v479
        %1358 = vmatprep.subr.mxu0 %v488
        %1359 = vmatpush1.msra.mxu0 %v487
        %1360 = vmatprep.subr.mxu0 %v496
        %1361 = vmatpush1.msra.mxu0 %v495
        %1362 = vmatprep.subr.mxu0 %v504
        %1363 = vmatpush1.msra.mxu0 %v503
        %1364 = vmatprep.subr.mxu0 %v512
        %1365 = vmatpush1.msra.mxu0 %v511
        %1366 = vmatprep.subr.mxu0 %v520
        %1367 = vmatpush1.msra.mxu0 %v519
        %1368 = vmatprep.subr.mxu0 %v528
        %1369 = vmatpush1.msra.mxu0 %v527
        %1370 = vmatprep.subr.mxu0 %v536
        %1371 = vmatpush1.msra.mxu0 %v535
        %1372 = vmatprep.subr.mxu0 %v544
        %1373 = vmatpush1.msra.mxu0 %v543
        %1374 = vmatprep.subr.mxu0 %v552
        %1375 = vmatpush1.msra.mxu0 %v551
        %1376 = vmatprep.subr.mxu0 %v560
        %1377 = vmatpush1.msra.mxu0 %v559
        %1378 = vmatprep.subr.mxu0 %v568
        %1379 = vmatpush1.msra.mxu0 %v567
        %1380 = vmatprep.subr.mxu0 %v576
        %1381 = vmatpush1.msra.mxu0 %v575
        %1382 = vmatprep.subr.mxu0 %v584
        %1383 = vmatpush1.msra.mxu0 %v583
        %1384 = vmatprep.subr.mxu0 %v592
        %1385 = vmatpush1.msra.mxu0 %v591
        %1386 = vmatprep.subr.mxu0 %v600
        %1387 = vmatpush1.msra.mxu0 %v599
        %1388 = vmatprep.subr.mxu0 %v608
        %1389 = vmatpush1.msra.mxu0 %v607
        %1390 = vmatprep.subr.mxu0 %v616
        %1391 = vmatpush1.msra.mxu0 %v615
        %1392 = vmatprep.mubr.f32.mxu0 %v364
        %1393 = vmatmul.mubr.f32.gmra.mrb[0].mxu0 %v363
        %v1394 = vpop.f32.mrb[0].mxu0
        %v1395 = vadd.f32 %v1111, %v1394
        %v1396 = vpop.f32.mrb[0].mxu0
        %v1397 = vadd.f32 %v1113, %v1396
        %1398 = vdwg.mxu0
        %1399 = vmatprep.subr.mxu0 %v370
        %1400 = vmatpush1.msra.mxu0 %v369
        %1401 = vmatprep.subr.mxu0 %v378
        %1402 = vmatpush1.msra.mxu0 %v377
        %1403 = vmatprep.subr.mxu0 %v386
        %1404 = vmatpush1.msra.mxu0 %v385
        %1405 = vmatprep.subr.mxu0 %v394
        %1406 = vmatpush1.msra.mxu0 %v393
        %1407 = vmatprep.subr.mxu0 %v402
        %1408 = vmatpush1.msra.mxu0 %v401
        %1409 = vmatprep.subr.mxu0 %v410
        %1410 = vmatpush1.msra.mxu0 %v409
        %1411 = vmatprep.subr.mxu0 %v418
        %1412 = vmatpush1.msra.mxu0 %v417
        %1413 = vmatprep.subr.mxu0 %v426
        %1414 = vmatpush1.msra.mxu0 %v425
        %1415 = vmatprep.subr.mxu0 %v434
        %1416 = vmatpush1.msra.mxu0 %v433
        %1417 = vmatprep.subr.mxu0 %v442
        %1418 = vmatpush1.msra.mxu0 %v441
        %1419 = vmatprep.subr.mxu0 %v450
        %1420 = vmatpush1.msra.mxu0 %v449
        %1421 = vmatprep.subr.mxu0 %v458
        %1422 = vmatpush1.msra.mxu0 %v457
        %1423 = vmatprep.subr.mxu0 %v466
        %1424 = vmatpush1.msra.mxu0 %v465
        %1425 = vmatprep.subr.mxu0 %v474
        %1426 = vmatpush1.msra.mxu0 %v473
        %1427 = vmatprep.subr.mxu0 %v482
        %1428 = vmatpush1.msra.mxu0 %v481
        %1429 = vmatprep.subr.mxu0 %v490
        %1430 = vmatpush1.msra.mxu0 %v489
        %1431 = vmatprep.subr.mxu0 %v498
        %1432 = vmatpush1.msra.mxu0 %v497
        %1433 = vmatprep.subr.mxu0 %v506
        %1434 = vmatpush1.msra.mxu0 %v505
        %1435 = vmatprep.subr.mxu0 %v514
        %1436 = vmatpush1.msra.mxu0 %v513
        %1437 = vmatprep.subr.mxu0 %v522
        %1438 = vmatpush1.msra.mxu0 %v521
        %1439 = vmatprep.subr.mxu0 %v530
        %1440 = vmatpush1.msra.mxu0 %v529
        %1441 = vmatprep.subr.mxu0 %v538
        %1442 = vmatpush1.msra.mxu0 %v537
        %1443 = vmatprep.subr.mxu0 %v546
        %1444 = vmatpush1.msra.mxu0 %v545
        %1445 = vmatprep.subr.mxu0 %v554
        %1446 = vmatpush1.msra.mxu0 %v553
        %1447 = vmatprep.subr.mxu0 %v562
        %1448 = vmatpush1.msra.mxu0 %v561
        %1449 = vmatprep.subr.mxu0 %v570
        %1450 = vmatpush1.msra.mxu0 %v569
        %1451 = vmatprep.subr.mxu0 %v578
        %1452 = vmatpush1.msra.mxu0 %v577
        %1453 = vmatprep.subr.mxu0 %v586
        %1454 = vmatpush1.msra.mxu0 %v585
        %1455 = vmatprep.subr.mxu0 %v594
        %1456 = vmatpush1.msra.mxu0 %v593
        %1457 = vmatprep.subr.mxu0 %v602
        %1458 = vmatpush1.msra.mxu0 %v601
        %1459 = vmatprep.subr.mxu0 %v610
        %1460 = vmatpush1.msra.mxu0 %v609
        %1461 = vmatprep.subr.mxu0 %v618
        %1462 = vmatpush1.msra.mxu0 %v617
        %1463 = vmatprep.mubr.f32.mxu0 %v364
        %1464 = vmatmul.mubr.f32.gmra.mrb[0].mxu0 %v363
        %v1465 = vpop.f32.mrb[0].mxu0
        %v1466 = vadd.f32 %v1182, %v1465
        %v1467 = vpop.f32.mrb[0].mxu0
        %v1468 = vadd.f32 %v1184, %v1467
        %1469 = vdwg.mxu0
        %1470 = vmatprep.subr.mxu0 %v372
        %1471 = vmatpush1.msra.mxu0 %v371
        %1472 = vmatprep.subr.mxu0 %v380
        %1473 = vmatpush1.msra.mxu0 %v379
        %1474 = vmatprep.subr.mxu0 %v388
        %1475 = vmatpush1.msra.mxu0 %v387
        %1476 = vmatprep.subr.mxu0 %v396
        %1477 = vmatpush1.msra.mxu0 %v395
        %1478 = vmatprep.subr.mxu0 %v404
        %1479 = vmatpush1.msra.mxu0 %v403
        %1480 = vmatprep.subr.mxu0 %v412
        %1481 = vmatpush1.msra.mxu0 %v411
        %1482 = vmatprep.subr.mxu0 %v420
        %1483 = vmatpush1.msra.mxu0 %v419
        %1484 = vmatprep.subr.mxu0 %v428
        %1485 = vmatpush1.msra.mxu0 %v427
        %1486 = vmatprep.subr.mxu0 %v436
        %1487 = vmatpush1.msra.mxu0 %v435
        %1488 = vmatprep.subr.mxu0 %v444
        %1489 = vmatpush1.msra.mxu0 %v443
        %1490 = vmatprep.subr.mxu0 %v452
        %1491 = vmatpush1.msra.mxu0 %v451
        %1492 = vmatprep.subr.mxu0 %v460
        %1493 = vmatpush1.msra.mxu0 %v459
        %1494 = vmatprep.subr.mxu0 %v468
        %1495 = vmatpush1.msra.mxu0 %v467
        %1496 = vmatprep.subr.mxu0 %v476
        %1497 = vmatpush1.msra.mxu0 %v475
        %1498 = vmatprep.subr.mxu0 %v484
        %1499 = vmatpush1.msra.mxu0 %v483
        %1500 = vmatprep.subr.mxu0 %v492
        %1501 = vmatpush1.msra.mxu0 %v491
        %1502 = vmatprep.subr.mxu0 %v500
        %1503 = vmatpush1.msra.mxu0 %v499
        %1504 = vmatprep.subr.mxu0 %v508
        %1505 = vmatpush1.msra.mxu0 %v507
        %1506 = vmatprep.subr.mxu0 %v516
        %1507 = vmatpush1.msra.mxu0 %v515
        %1508 = vmatprep.subr.mxu0 %v524
        %1509 = vmatpush1.msra.mxu0 %v523
        %1510 = vmatprep.subr.mxu0 %v532
        %1511 = vmatpush1.msra.mxu0 %v531
        %1512 = vmatprep.subr.mxu0 %v540
        %1513 = vmatpush1.msra.mxu0 %v539
        %1514 = vmatprep.subr.mxu0 %v548
        %1515 = vmatpush1.msra.mxu0 %v547
        %1516 = vmatprep.subr.mxu0 %v556
        %1517 = vmatpush1.msra.mxu0 %v555
        %1518 = vmatprep.subr.mxu0 %v564
        %1519 = vmatpush1.msra.mxu0 %v563
        %1520 = vmatprep.subr.mxu0 %v572
        %1521 = vmatpush1.msra.mxu0 %v571
        %1522 = vmatprep.subr.mxu0 %v580
        %1523 = vmatpush1.msra.mxu0 %v579
        %1524 = vmatprep.subr.mxu0 %v588
        %1525 = vmatpush1.msra.mxu0 %v587
        %1526 = vmatprep.subr.mxu0 %v596
        %1527 = vmatpush1.msra.mxu0 %v595
        %1528 = vmatprep.subr.mxu0 %v604
        %1529 = vmatpush1.msra.mxu0 %v603
        %1530 = vmatprep.subr.mxu0 %v612
        %1531 = vmatpush1.msra.mxu0 %v611
        %1532 = vmatprep.subr.mxu0 %v620
        %1533 = vmatpush1.msra.mxu0 %v619
        %1534 = vmatprep.mubr.f32.mxu0 %v364
        %1535 = vmatmul.mubr.f32.gmra.mrb[0].mxu0 %v363
        %v1536 = vpop.f32.mrb[0].mxu0
        %v1537 = vadd.f32 %v1253, %v1536
        %v1538 = vpop.f32.mrb[0].mxu0
        %v1539 = vadd.f32 %v1255, %v1538
        %1540 = vdwg.mxu0
        %s1541 = scalar_lea.vmem [#allocation5], 8
        %v1542 = vld [vmem:[%s1541] sm:$0xf]
        %s1543 = scalar_lea.vmem %s2, 8
        %v1544 = vld [vmem:[%s1543] sm:$0xf]
        %1546 = vset.pattern.permute.xlu0 0
        %1547 = vperm.xlu0 %1546, %v1544
        %v1548 = vpop.permute.xlu0 %1547
        %v1551 = vsel %vm273, %v1542, 0
        %1553 = vmatprep.subr.mxu0 %v280
        %1554 = vmatpush1.msra.mxu0 %v278
        %1555 = vmatprep.subr.mxu0 0.0
        %1556 = vmatpush1.msra.mxu0 0.0
        %1557 = vmatprep.subr.mxu0 0.0
        %1558 = vmatpush1.msra.mxu0 0.0
        %1559 = vmatprep.subr.mxu0 0.0
        %1560 = vmatpush1.msra.mxu0 0.0
        %1561 = vmatprep.subr.mxu0 0.0
        %1562 = vmatpush1.msra.mxu0 0.0
        %1563 = vmatprep.subr.mxu0 0.0
        %1564 = vmatpush1.msra.mxu0 0.0
        %1565 = vmatprep.subr.mxu0 0.0
        %1566 = vmatpush1.msra.mxu0 0.0
        %1567 = vmatprep.subr.mxu0 0.0
        %1568 = vmatpush1.msra.mxu0 0.0
        %1569 = vmatprep.subr.mxu0 0.0
        %1570 = vmatpush1.msra.mxu0 0.0
        %1571 = vmatprep.subr.mxu0 0.0
        %1572 = vmatpush1.msra.mxu0 0.0
        %1573 = vmatprep.subr.mxu0 0.0
        %1574 = vmatpush1.msra.mxu0 0.0
        %1575 = vmatprep.subr.mxu0 0.0
        %1576 = vmatpush1.msra.mxu0 0.0
        %1577 = vmatprep.subr.mxu0 0.0
        %1578 = vmatpush1.msra.mxu0 0.0
        %1579 = vmatprep.subr.mxu0 0.0
        %1580 = vmatpush1.msra.mxu0 0.0
        %1581 = vmatprep.subr.mxu0 0.0
        %1582 = vmatpush1.msra.mxu0 0.0
        %1583 = vmatprep.subr.mxu0 0.0
        %1584 = vmatpush1.msra.mxu0 0.0
        %1585 = vmatprep.subr.mxu0 0.0
        %1586 = vmatpush1.msra.mxu0 0.0
        %1587 = vmatprep.subr.mxu0 0.0
        %1588 = vmatpush1.msra.mxu0 0.0
        %1589 = vmatprep.subr.mxu0 0.0
        %1590 = vmatpush1.msra.mxu0 0.0
        %1591 = vmatprep.subr.mxu0 0.0
        %1592 = vmatpush1.msra.mxu0 0.0
        %1593 = vmatprep.subr.mxu0 0.0
        %1594 = vmatpush1.msra.mxu0 0.0
        %1595 = vmatprep.subr.mxu0 0.0
        %1596 = vmatpush1.msra.mxu0 0.0
        %1597 = vmatprep.subr.mxu0 0.0
        %1598 = vmatpush1.msra.mxu0 0.0
        %1599 = vmatprep.subr.mxu0 0.0
        %1600 = vmatpush1.msra.mxu0 0.0
        %1601 = vmatprep.subr.mxu0 0.0
        %1602 = vmatpush1.msra.mxu0 0.0
        %1603 = vmatprep.subr.mxu0 0.0
        %1604 = vmatpush1.msra.mxu0 0.0
        %1605 = vmatprep.subr.mxu0 0.0
        %1606 = vmatpush1.msra.mxu0 0.0
        %1607 = vmatprep.subr.mxu0 0.0
        %1608 = vmatpush1.msra.mxu0 0.0
        %1609 = vmatprep.subr.mxu0 0.0
        %1610 = vmatpush1.msra.mxu0 0.0
        %1611 = vmatprep.subr.mxu0 0.0
        %1612 = vmatpush1.msra.mxu0 0.0
        %1613 = vmatprep.subr.mxu0 0.0
        %1614 = vmatpush1.msra.mxu0 0.0
        %1615 = vmatprep.subr.mxu0 0.0
        %1616 = vmatpush1.msra.mxu0 0.0
        %1617 = vmatprep.mubr.f32.mxu0 0.0
        %1618 = vmatmul.mubr.f32.gmra.mrb[0].mxu0 %v1551
        %v1619 = vpop.f32.mrb[0].mxu0
        %v1620 = vadd.f32 %v1548, %v1619
        %v1621 = vpop.f32.mrb[0].mxu0
        %v1622 = vadd.f32 %v1548, %v1621
        %1623 = vdwg.mxu0
        %v1624 = vsub.f32 0.0, %v1620
        %v1625 = vsub.f32 0.0, %v1622
        %v1626 = vmul.f32 %v1624, 1.442695
        %v1627 = vpow.pop %v1626
        %v1628 = vmul.f32 %v1625, 1.442695
        %v1629 = vpow.pop %v1628
        %v1630 = vadd.f32 %v1627, 1.0
        %v1631 = vadd.f32 %v1629, 1.0
        %v1632 = vrcp.pop %v1630
        %v1633 = vrcp.pop %v1631
        %v1634 = vmul.f32 %v1620, %v1632
        %v1635 = vmul.f32 %v1622, %v1633
        %s1636 = scalar_lea.vmem [#allocation7], 4096
        %v1637 = vld [vmem:[%s1636] sm:$0xff]
        %v1638 = vld [vmem:[%s1636 + $0x8] sm:$0xff]
        %v1639 = vld [vmem:[%s1636 + $0x10] sm:$0xff]
        %v1640 = vld [vmem:[%s1636 + $0x18] sm:$0xff]
        %v1641 = vld [vmem:[%s1636 + $0x20] sm:$0xff]
        %v1642 = vld [vmem:[%s1636 + $0x28] sm:$0xff]
        %v1643 = vld [vmem:[%s1636 + $0x30] sm:$0xff]
        %v1644 = vld [vmem:[%s1636 + $0x38] sm:$0xff]
        %v1645 = vld [vmem:[%s1636 + $0x40] sm:$0xff]
        %v1646 = vld [vmem:[%s1636 + $0x48] sm:$0xff]
        %v1647 = vld [vmem:[%s1636 + $0x50] sm:$0xff]
        %v1648 = vld [vmem:[%s1636 + $0x58] sm:$0xff]
        %v1649 = vld [vmem:[%s1636 + $0x60] sm:$0xff]
        %v1650 = vld [vmem:[%s1636 + $0x68] sm:$0xff]
        %v1651 = vld [vmem:[%s1636 + $0x70] sm:$0xff]
        %v1652 = vld [vmem:[%s1636 + $0x78] sm:$0xff]
        %v1653 = vld [vmem:[%s1636 + $0x80] sm:$0xff]
        %v1654 = vld [vmem:[%s1636 + $0x88] sm:$0xff]
        %v1655 = vld [vmem:[%s1636 + $0x90] sm:$0xff]
        %v1656 = vld [vmem:[%s1636 + $0x98] sm:$0xff]
        %v1657 = vld [vmem:[%s1636 + $0xa0] sm:$0xff]
        %v1658 = vld [vmem:[%s1636 + $0xa8] sm:$0xff]
        %v1659 = vld [vmem:[%s1636 + $0xb0] sm:$0xff]
        %v1660 = vld [vmem:[%s1636 + $0xb8] sm:$0xff]
        %v1661 = vld [vmem:[%s1636 + $0xc0] sm:$0xff]
        %v1662 = vld [vmem:[%s1636 + $0xc8] sm:$0xff]
        %v1663 = vld [vmem:[%s1636 + $0xd0] sm:$0xff]
        %v1664 = vld [vmem:[%s1636 + $0xd8] sm:$0xff]
        %v1665 = vld [vmem:[%s1636 + $0xe0] sm:$0xff]
        %v1666 = vld [vmem:[%s1636 + $0xe8] sm:$0xff]
        %v1667 = vld [vmem:[%s1636 + $0xf0] sm:$0xff]
        %v1668 = vld [vmem:[%s1636 + $0xf8] sm:$0xff]
        %v1669 = vld [vmem:[%s1636 + $0x100] sm:$0xff]
        %v1670 = vld [vmem:[%s1636 + $0x108] sm:$0xff]
        %v1671 = vld [vmem:[%s1636 + $0x110] sm:$0xff]
        %v1672 = vld [vmem:[%s1636 + $0x118] sm:$0xff]
        %v1673 = vld [vmem:[%s1636 + $0x120] sm:$0xff]
        %v1674 = vld [vmem:[%s1636 + $0x128] sm:$0xff]
        %v1675 = vld [vmem:[%s1636 + $0x130] sm:$0xff]
        %v1676 = vld [vmem:[%s1636 + $0x138] sm:$0xff]
        %v1677 = vld [vmem:[%s1636 + $0x140] sm:$0xff]
        %v1678 = vld [vmem:[%s1636 + $0x148] sm:$0xff]
        %v1679 = vld [vmem:[%s1636 + $0x150] sm:$0xff]
        %v1680 = vld [vmem:[%s1636 + $0x158] sm:$0xff]
        %v1681 = vld [vmem:[%s1636 + $0x160] sm:$0xff]
        %v1682 = vld [vmem:[%s1636 + $0x168] sm:$0xff]
        %v1683 = vld [vmem:[%s1636 + $0x170] sm:$0xff]
        %v1684 = vld [vmem:[%s1636 + $0x178] sm:$0xff]
        %v1685 = vld [vmem:[%s1636 + $0x180] sm:$0xff]
        %v1686 = vld [vmem:[%s1636 + $0x188] sm:$0xff]
        %v1687 = vld [vmem:[%s1636 + $0x190] sm:$0xff]
        %v1688 = vld [vmem:[%s1636 + $0x198] sm:$0xff]
        %v1689 = vld [vmem:[%s1636 + $0x1a0] sm:$0xff]
        %v1690 = vld [vmem:[%s1636 + $0x1a8] sm:$0xff]
        %v1691 = vld [vmem:[%s1636 + $0x1b0] sm:$0xff]
        %v1692 = vld [vmem:[%s1636 + $0x1b8] sm:$0xff]
        %v1693 = vld [vmem:[%s1636 + $0x1c0] sm:$0xff]
        %v1694 = vld [vmem:[%s1636 + $0x1c8] sm:$0xff]
        %v1695 = vld [vmem:[%s1636 + $0x1d0] sm:$0xff]
        %v1696 = vld [vmem:[%s1636 + $0x1d8] sm:$0xff]
        %v1697 = vld [vmem:[%s1636 + $0x1e0] sm:$0xff]
        %v1698 = vld [vmem:[%s1636 + $0x1e8] sm:$0xff]
        %v1699 = vld [vmem:[%s1636 + $0x1f0] sm:$0xff]
        %v1700 = vld [vmem:[%s1636 + $0x1f8] sm:$0xff]
        %v1701 = vld [vmem:[%s1636 + $0x200] sm:$0xff]
        %v1702 = vld [vmem:[%s1636 + $0x208] sm:$0xff]
        %v1703 = vld [vmem:[%s1636 + $0x210] sm:$0xff]
        %v1704 = vld [vmem:[%s1636 + $0x218] sm:$0xff]
        %v1705 = vld [vmem:[%s1636 + $0x220] sm:$0xff]
        %v1706 = vld [vmem:[%s1636 + $0x228] sm:$0xff]
        %v1707 = vld [vmem:[%s1636 + $0x230] sm:$0xff]
        %v1708 = vld [vmem:[%s1636 + $0x238] sm:$0xff]
        %v1709 = vld [vmem:[%s1636 + $0x240] sm:$0xff]
        %v1710 = vld [vmem:[%s1636 + $0x248] sm:$0xff]
        %v1711 = vld [vmem:[%s1636 + $0x250] sm:$0xff]
        %v1712 = vld [vmem:[%s1636 + $0x258] sm:$0xff]
        %v1713 = vld [vmem:[%s1636 + $0x260] sm:$0xff]
        %v1714 = vld [vmem:[%s1636 + $0x268] sm:$0xff]
        %v1715 = vld [vmem:[%s1636 + $0x270] sm:$0xff]
        %v1716 = vld [vmem:[%s1636 + $0x278] sm:$0xff]
        %v1717 = vld [vmem:[%s1636 + $0x280] sm:$0xff]
        %v1718 = vld [vmem:[%s1636 + $0x288] sm:$0xff]
        %v1719 = vld [vmem:[%s1636 + $0x290] sm:$0xff]
        %v1720 = vld [vmem:[%s1636 + $0x298] sm:$0xff]
        %v1721 = vld [vmem:[%s1636 + $0x2a0] sm:$0xff]
        %v1722 = vld [vmem:[%s1636 + $0x2a8] sm:$0xff]
        %v1723 = vld [vmem:[%s1636 + $0x2b0] sm:$0xff]
        %v1724 = vld [vmem:[%s1636 + $0x2b8] sm:$0xff]
        %v1725 = vld [vmem:[%s1636 + $0x2c0] sm:$0xff]
        %v1726 = vld [vmem:[%s1636 + $0x2c8] sm:$0xff]
        %v1727 = vld [vmem:[%s1636 + $0x2d0] sm:$0xff]
        %v1728 = vld [vmem:[%s1636 + $0x2d8] sm:$0xff]
        %v1729 = vld [vmem:[%s1636 + $0x2e0] sm:$0xff]
        %v1730 = vld [vmem:[%s1636 + $0x2e8] sm:$0xff]
        %v1731 = vld [vmem:[%s1636 + $0x2f0] sm:$0xff]
        %v1732 = vld [vmem:[%s1636 + $0x2f8] sm:$0xff]
        %v1733 = vld [vmem:[%s1636 + $0x300] sm:$0xff]
        %v1734 = vld [vmem:[%s1636 + $0x308] sm:$0xff]
        %v1735 = vld [vmem:[%s1636 + $0x310] sm:$0xff]
        %v1736 = vld [vmem:[%s1636 + $0x318] sm:$0xff]
        %v1737 = vld [vmem:[%s1636 + $0x320] sm:$0xff]
        %v1738 = vld [vmem:[%s1636 + $0x328] sm:$0xff]
        %v1739 = vld [vmem:[%s1636 + $0x330] sm:$0xff]
        %v1740 = vld [vmem:[%s1636 + $0x338] sm:$0xff]
        %v1741 = vld [vmem:[%s1636 + $0x340] sm:$0xff]
        %v1742 = vld [vmem:[%s1636 + $0x348] sm:$0xff]
        %v1743 = vld [vmem:[%s1636 + $0x350] sm:$0xff]
        %v1744 = vld [vmem:[%s1636 + $0x358] sm:$0xff]
        %v1745 = vld [vmem:[%s1636 + $0x360] sm:$0xff]
        %v1746 = vld [vmem:[%s1636 + $0x368] sm:$0xff]
        %v1747 = vld [vmem:[%s1636 + $0x370] sm:$0xff]
        %v1748 = vld [vmem:[%s1636 + $0x378] sm:$0xff]
        %v1749 = vld [vmem:[%s1636 + $0x380] sm:$0xff]
        %v1750 = vld [vmem:[%s1636 + $0x388] sm:$0xff]
        %v1751 = vld [vmem:[%s1636 + $0x390] sm:$0xff]
        %v1752 = vld [vmem:[%s1636 + $0x398] sm:$0xff]
        %v1753 = vld [vmem:[%s1636 + $0x3a0] sm:$0xff]
        %v1754 = vld [vmem:[%s1636 + $0x3a8] sm:$0xff]
        %v1755 = vld [vmem:[%s1636 + $0x3b0] sm:$0xff]
        %v1756 = vld [vmem:[%s1636 + $0x3b8] sm:$0xff]
        %v1757 = vld [vmem:[%s1636 + $0x3c0] sm:$0xff]
        %v1758 = vld [vmem:[%s1636 + $0x3c8] sm:$0xff]
        %v1759 = vld [vmem:[%s1636 + $0x3d0] sm:$0xff]
        %v1760 = vld [vmem:[%s1636 + $0x3d8] sm:$0xff]
        %v1761 = vld [vmem:[%s1636 + $0x3e0] sm:$0xff]
        %v1762 = vld [vmem:[%s1636 + $0x3e8] sm:$0xff]
        %v1763 = vld [vmem:[%s1636 + $0x3f0] sm:$0xff]
        %v1764 = vld [vmem:[%s1636 + $0x3f8] sm:$0xff]
        %v1765 = vld [vmem:[%s1636 + $0x400] sm:$0xff]
        %v1766 = vld [vmem:[%s1636 + $0x408] sm:$0xff]
        %v1767 = vld [vmem:[%s1636 + $0x410] sm:$0xff]
        %v1768 = vld [vmem:[%s1636 + $0x418] sm:$0xff]
        %v1769 = vld [vmem:[%s1636 + $0x420] sm:$0xff]
        %v1770 = vld [vmem:[%s1636 + $0x428] sm:$0xff]
        %v1771 = vld [vmem:[%s1636 + $0x430] sm:$0xff]
        %v1772 = vld [vmem:[%s1636 + $0x438] sm:$0xff]
        %v1773 = vld [vmem:[%s1636 + $0x440] sm:$0xff]
        %v1774 = vld [vmem:[%s1636 + $0x448] sm:$0xff]
        %v1775 = vld [vmem:[%s1636 + $0x450] sm:$0xff]
        %v1776 = vld [vmem:[%s1636 + $0x458] sm:$0xff]
        %v1777 = vld [vmem:[%s1636 + $0x460] sm:$0xff]
        %v1778 = vld [vmem:[%s1636 + $0x468] sm:$0xff]
        %v1779 = vld [vmem:[%s1636 + $0x470] sm:$0xff]
        %v1780 = vld [vmem:[%s1636 + $0x478] sm:$0xff]
        %v1781 = vld [vmem:[%s1636 + $0x480] sm:$0xff]
        %v1782 = vld [vmem:[%s1636 + $0x488] sm:$0xff]
        %v1783 = vld [vmem:[%s1636 + $0x490] sm:$0xff]
        %v1784 = vld [vmem:[%s1636 + $0x498] sm:$0xff]
        %v1785 = vld [vmem:[%s1636 + $0x4a0] sm:$0xff]
        %v1786 = vld [vmem:[%s1636 + $0x4a8] sm:$0xff]
        %v1787 = vld [vmem:[%s1636 + $0x4b0] sm:$0xff]
        %v1788 = vld [vmem:[%s1636 + $0x4b8] sm:$0xff]
        %v1789 = vld [vmem:[%s1636 + $0x4c0] sm:$0xff]
        %v1790 = vld [vmem:[%s1636 + $0x4c8] sm:$0xff]
        %v1791 = vld [vmem:[%s1636 + $0x4d0] sm:$0xff]
        %v1792 = vld [vmem:[%s1636 + $0x4d8] sm:$0xff]
        %v1793 = vld [vmem:[%s1636 + $0x4e0] sm:$0xff]
        %v1794 = vld [vmem:[%s1636 + $0x4e8] sm:$0xff]
        %v1795 = vld [vmem:[%s1636 + $0x4f0] sm:$0xff]
        %v1796 = vld [vmem:[%s1636 + $0x4f8] sm:$0xff]
        %v1797 = vld [vmem:[%s1636 + $0x500] sm:$0xff]
        %v1798 = vld [vmem:[%s1636 + $0x508] sm:$0xff]
        %v1799 = vld [vmem:[%s1636 + $0x510] sm:$0xff]
        %v1800 = vld [vmem:[%s1636 + $0x518] sm:$0xff]
        %v1801 = vld [vmem:[%s1636 + $0x520] sm:$0xff]
        %v1802 = vld [vmem:[%s1636 + $0x528] sm:$0xff]
        %v1803 = vld [vmem:[%s1636 + $0x530] sm:$0xff]
        %v1804 = vld [vmem:[%s1636 + $0x538] sm:$0xff]
        %v1805 = vld [vmem:[%s1636 + $0x540] sm:$0xff]
        %v1806 = vld [vmem:[%s1636 + $0x548] sm:$0xff]
        %v1807 = vld [vmem:[%s1636 + $0x550] sm:$0xff]
        %v1808 = vld [vmem:[%s1636 + $0x558] sm:$0xff]
        %v1809 = vld [vmem:[%s1636 + $0x560] sm:$0xff]
        %v1810 = vld [vmem:[%s1636 + $0x568] sm:$0xff]
        %v1811 = vld [vmem:[%s1636 + $0x570] sm:$0xff]
        %v1812 = vld [vmem:[%s1636 + $0x578] sm:$0xff]
        %v1813 = vld [vmem:[%s1636 + $0x580] sm:$0xff]
        %v1814 = vld [vmem:[%s1636 + $0x588] sm:$0xff]
        %v1815 = vld [vmem:[%s1636 + $0x590] sm:$0xff]
        %v1816 = vld [vmem:[%s1636 + $0x598] sm:$0xff]
        %v1817 = vld [vmem:[%s1636 + $0x5a0] sm:$0xff]
        %v1818 = vld [vmem:[%s1636 + $0x5a8] sm:$0xff]
        %v1819 = vld [vmem:[%s1636 + $0x5b0] sm:$0xff]
        %v1820 = vld [vmem:[%s1636 + $0x5b8] sm:$0xff]
        %v1821 = vld [vmem:[%s1636 + $0x5c0] sm:$0xff]
        %v1822 = vld [vmem:[%s1636 + $0x5c8] sm:$0xff]
        %v1823 = vld [vmem:[%s1636 + $0x5d0] sm:$0xff]
        %v1824 = vld [vmem:[%s1636 + $0x5d8] sm:$0xff]
        %v1825 = vld [vmem:[%s1636 + $0x5e0] sm:$0xff]
        %v1826 = vld [vmem:[%s1636 + $0x5e8] sm:$0xff]
        %v1827 = vld [vmem:[%s1636 + $0x5f0] sm:$0xff]
        %v1828 = vld [vmem:[%s1636 + $0x5f8] sm:$0xff]
        %v1829 = vld [vmem:[%s1636 + $0x600] sm:$0xff]
        %v1830 = vld [vmem:[%s1636 + $0x608] sm:$0xff]
        %v1831 = vld [vmem:[%s1636 + $0x610] sm:$0xff]
        %v1832 = vld [vmem:[%s1636 + $0x618] sm:$0xff]
        %v1833 = vld [vmem:[%s1636 + $0x620] sm:$0xff]
        %v1834 = vld [vmem:[%s1636 + $0x628] sm:$0xff]
        %v1835 = vld [vmem:[%s1636 + $0x630] sm:$0xff]
        %v1836 = vld [vmem:[%s1636 + $0x638] sm:$0xff]
        %v1837 = vld [vmem:[%s1636 + $0x640] sm:$0xff]
        %v1838 = vld [vmem:[%s1636 + $0x648] sm:$0xff]
        %v1839 = vld [vmem:[%s1636 + $0x650] sm:$0xff]
        %v1840 = vld [vmem:[%s1636 + $0x658] sm:$0xff]
        %v1841 = vld [vmem:[%s1636 + $0x660] sm:$0xff]
        %v1842 = vld [vmem:[%s1636 + $0x668] sm:$0xff]
        %v1843 = vld [vmem:[%s1636 + $0x670] sm:$0xff]
        %v1844 = vld [vmem:[%s1636 + $0x678] sm:$0xff]
        %v1845 = vld [vmem:[%s1636 + $0x680] sm:$0xff]
        %v1846 = vld [vmem:[%s1636 + $0x688] sm:$0xff]
        %v1847 = vld [vmem:[%s1636 + $0x690] sm:$0xff]
        %v1848 = vld [vmem:[%s1636 + $0x698] sm:$0xff]
        %v1849 = vld [vmem:[%s1636 + $0x6a0] sm:$0xff]
        %v1850 = vld [vmem:[%s1636 + $0x6a8] sm:$0xff]
        %v1851 = vld [vmem:[%s1636 + $0x6b0] sm:$0xff]
        %v1852 = vld [vmem:[%s1636 + $0x6b8] sm:$0xff]
        %v1853 = vld [vmem:[%s1636 + $0x6c0] sm:$0xff]
        %v1854 = vld [vmem:[%s1636 + $0x6c8] sm:$0xff]
        %v1855 = vld [vmem:[%s1636 + $0x6d0] sm:$0xff]
        %v1856 = vld [vmem:[%s1636 + $0x6d8] sm:$0xff]
        %v1857 = vld [vmem:[%s1636 + $0x6e0] sm:$0xff]
        %v1858 = vld [vmem:[%s1636 + $0x6e8] sm:$0xff]
        %v1859 = vld [vmem:[%s1636 + $0x6f0] sm:$0xff]
        %v1860 = vld [vmem:[%s1636 + $0x6f8] sm:$0xff]
        %v1861 = vld [vmem:[%s1636 + $0x700] sm:$0xff]
        %v1862 = vld [vmem:[%s1636 + $0x708] sm:$0xff]
        %v1863 = vld [vmem:[%s1636 + $0x710] sm:$0xff]
        %v1864 = vld [vmem:[%s1636 + $0x718] sm:$0xff]
        %v1865 = vld [vmem:[%s1636 + $0x720] sm:$0xff]
        %v1866 = vld [vmem:[%s1636 + $0x728] sm:$0xff]
        %v1867 = vld [vmem:[%s1636 + $0x730] sm:$0xff]
        %v1868 = vld [vmem:[%s1636 + $0x738] sm:$0xff]
        %v1869 = vld [vmem:[%s1636 + $0x740] sm:$0xff]
        %v1870 = vld [vmem:[%s1636 + $0x748] sm:$0xff]
        %v1871 = vld [vmem:[%s1636 + $0x750] sm:$0xff]
        %v1872 = vld [vmem:[%s1636 + $0x758] sm:$0xff]
        %v1873 = vld [vmem:[%s1636 + $0x760] sm:$0xff]
        %v1874 = vld [vmem:[%s1636 + $0x768] sm:$0xff]
        %v1875 = vld [vmem:[%s1636 + $0x770] sm:$0xff]
        %v1876 = vld [vmem:[%s1636 + $0x778] sm:$0xff]
        %v1877 = vld [vmem:[%s1636 + $0x780] sm:$0xff]
        %v1878 = vld [vmem:[%s1636 + $0x788] sm:$0xff]
        %v1879 = vld [vmem:[%s1636 + $0x790] sm:$0xff]
        %v1880 = vld [vmem:[%s1636 + $0x798] sm:$0xff]
        %v1881 = vld [vmem:[%s1636 + $0x7a0] sm:$0xff]
        %v1882 = vld [vmem:[%s1636 + $0x7a8] sm:$0xff]
        %v1883 = vld [vmem:[%s1636 + $0x7b0] sm:$0xff]
        %v1884 = vld [vmem:[%s1636 + $0x7b8] sm:$0xff]
        %v1885 = vld [vmem:[%s1636 + $0x7c0] sm:$0xff]
        %v1886 = vld [vmem:[%s1636 + $0x7c8] sm:$0xff]
        %v1887 = vld [vmem:[%s1636 + $0x7d0] sm:$0xff]
        %v1888 = vld [vmem:[%s1636 + $0x7d8] sm:$0xff]
        %v1889 = vld [vmem:[%s1636 + $0x7e0] sm:$0xff]
        %v1890 = vld [vmem:[%s1636 + $0x7e8] sm:$0xff]
        %v1891 = vld [vmem:[%s1636 + $0x7f0] sm:$0xff]
        %v1892 = vld [vmem:[%s1636 + $0x7f8] sm:$0xff]
        %1893 = vmatprep.subr.mxu0 %v1638
        %1894 = vmatpush1.msra.mxu0 %v1637
        %1895 = vmatprep.subr.mxu0 %v1646
        %1896 = vmatpush1.msra.mxu0 %v1645
        %1897 = vmatprep.subr.mxu0 %v1654
        %1898 = vmatpush1.msra.mxu0 %v1653
        %1899 = vmatprep.subr.mxu0 %v1662
        %1900 = vmatpush1.msra.mxu0 %v1661
        %1901 = vmatprep.subr.mxu0 %v1670
        %1902 = vmatpush1.msra.mxu0 %v1669
        %1903 = vmatprep.subr.mxu0 %v1678
        %1904 = vmatpush1.msra.mxu0 %v1677
        %1905 = vmatprep.subr.mxu0 %v1686
        %1906 = vmatpush1.msra.mxu0 %v1685
        %1907 = vmatprep.subr.mxu0 %v1694
        %1908 = vmatpush1.msra.mxu0 %v1693
        %1909 = vmatprep.subr.mxu0 %v1702
        %1910 = vmatpush1.msra.mxu0 %v1701
        %1911 = vmatprep.subr.mxu0 %v1710
        %1912 = vmatpush1.msra.mxu0 %v1709
        %1913 = vmatprep.subr.mxu0 %v1718
        %1914 = vmatpush1.msra.mxu0 %v1717
        %1915 = vmatprep.subr.mxu0 %v1726
        %1916 = vmatpush1.msra.mxu0 %v1725
        %1917 = vmatprep.subr.mxu0 %v1734
        %1918 = vmatpush1.msra.mxu0 %v1733
        %1919 = vmatprep.subr.mxu0 %v1742
        %1920 = vmatpush1.msra.mxu0 %v1741
        %1921 = vmatprep.subr.mxu0 %v1750
        %1922 = vmatpush1.msra.mxu0 %v1749
        %1923 = vmatprep.subr.mxu0 %v1758
        %1924 = vmatpush1.msra.mxu0 %v1757
        %1925 = vmatprep.subr.mxu0 %v1766
        %1926 = vmatpush1.msra.mxu0 %v1765
        %1927 = vmatprep.subr.mxu0 %v1774
        %1928 = vmatpush1.msra.mxu0 %v1773
        %1929 = vmatprep.subr.mxu0 %v1782
        %1930 = vmatpush1.msra.mxu0 %v1781
        %1931 = vmatprep.subr.mxu0 %v1790
        %1932 = vmatpush1.msra.mxu0 %v1789
        %1933 = vmatprep.subr.mxu0 %v1798
        %1934 = vmatpush1.msra.mxu0 %v1797
        %1935 = vmatprep.subr.mxu0 %v1806
        %1936 = vmatpush1.msra.mxu0 %v1805
        %1937 = vmatprep.subr.mxu0 %v1814
        %1938 = vmatpush1.msra.mxu0 %v1813
        %1939 = vmatprep.subr.mxu0 %v1822
        %1940 = vmatpush1.msra.mxu0 %v1821
        %1941 = vmatprep.subr.mxu0 %v1830
        %1942 = vmatpush1.msra.mxu0 %v1829
        %1943 = vmatprep.subr.mxu0 %v1838
        %1944 = vmatpush1.msra.mxu0 %v1837
        %1945 = vmatprep.subr.mxu0 %v1846
        %1946 = vmatpush1.msra.mxu0 %v1845
        %1947 = vmatprep.subr.mxu0 %v1854
        %1948 = vmatpush1.msra.mxu0 %v1853
        %1949 = vmatprep.subr.mxu0 %v1862
        %1950 = vmatpush1.msra.mxu0 %v1861
        %1951 = vmatprep.subr.mxu0 %v1870
        %1952 = vmatpush1.msra.mxu0 %v1869
        %1953 = vmatprep.subr.mxu0 %v1878
        %1954 = vmatpush1.msra.mxu0 %v1877
        %1955 = vmatprep.subr.mxu0 %v1886
        %1956 = vmatpush1.msra.mxu0 %v1885
        %1957 = vmatprep.mubr.f32.mxu0 %v1635
        %1958 = vmatmul.mubr.f32.gmra.mrb[0].mxu0 %v1634
        %v1959 = vpop.f32.mrb[0].mxu0
        %v1960 = vadd.f32 0.0, %v1959
        %v1961 = vpop.f32.mrb[0].mxu0
        %v1962 = vadd.f32 0.0, %v1961
        %1963 = vdwg.mxu0
        %1964 = vmatprep.subr.mxu0 %v1640
        %1965 = vmatpush1.msra.mxu0 %v1639
        %1966 = vmatprep.subr.mxu0 %v1648
        %1967 = vmatpush1.msra.mxu0 %v1647
        %1968 = vmatprep.subr.mxu0 %v1656
        %1969 = vmatpush1.msra.mxu0 %v1655
        %1970 = vmatprep.subr.mxu0 %v1664
        %1971 = vmatpush1.msra.mxu0 %v1663
        %1972 = vmatprep.subr.mxu0 %v1672
        %1973 = vmatpush1.msra.mxu0 %v1671
        %1974 = vmatprep.subr.mxu0 %v1680
        %1975 = vmatpush1.msra.mxu0 %v1679
        %1976 = vmatprep.subr.mxu0 %v1688
        %1977 = vmatpush1.msra.mxu0 %v1687
        %1978 = vmatprep.subr.mxu0 %v1696
        %1979 = vmatpush1.msra.mxu0 %v1695
        %1980 = vmatprep.subr.mxu0 %v1704
        %1981 = vmatpush1.msra.mxu0 %v1703
        %1982 = vmatprep.subr.mxu0 %v1712
        %1983 = vmatpush1.msra.mxu0 %v1711
        %1984 = vmatprep.subr.mxu0 %v1720
        %1985 = vmatpush1.msra.mxu0 %v1719
        %1986 = vmatprep.subr.mxu0 %v1728
        %1987 = vmatpush1.msra.mxu0 %v1727
        %1988 = vmatprep.subr.mxu0 %v1736
        %1989 = vmatpush1.msra.mxu0 %v1735
        %1990 = vmatprep.subr.mxu0 %v1744
        %1991 = vmatpush1.msra.mxu0 %v1743
        %1992 = vmatprep.subr.mxu0 %v1752
        %1993 = vmatpush1.msra.mxu0 %v1751
        %1994 = vmatprep.subr.mxu0 %v1760
        %1995 = vmatpush1.msra.mxu0 %v1759
        %1996 = vmatprep.subr.mxu0 %v1768
        %1997 = vmatpush1.msra.mxu0 %v1767
        %1998 = vmatprep.subr.mxu0 %v1776
        %1999 = vmatpush1.msra.mxu0 %v1775
        %2000 = vmatprep.subr.mxu0 %v1784
        %2001 = vmatpush1.msra.mxu0 %v1783
        %2002 = vmatprep.subr.mxu0 %v1792
        %2003 = vmatpush1.msra.mxu0 %v1791
        %2004 = vmatprep.subr.mxu0 %v1800
        %2005 = vmatpush1.msra.mxu0 %v1799
        %2006 = vmatprep.subr.mxu0 %v1808
        %2007 = vmatpush1.msra.mxu0 %v1807
        %2008 = vmatprep.subr.mxu0 %v1816
        %2009 = vmatpush1.msra.mxu0 %v1815
        %2010 = vmatprep.subr.mxu0 %v1824
        %2011 = vmatpush1.msra.mxu0 %v1823
        %2012 = vmatprep.subr.mxu0 %v1832
        %2013 = vmatpush1.msra.mxu0 %v1831
        %2014 = vmatprep.subr.mxu0 %v1840
        %2015 = vmatpush1.msra.mxu0 %v1839
        %2016 = vmatprep.subr.mxu0 %v1848
        %2017 = vmatpush1.msra.mxu0 %v1847
        %2018 = vmatprep.subr.mxu0 %v1856
        %2019 = vmatpush1.msra.mxu0 %v1855
        %2020 = vmatprep.subr.mxu0 %v1864
        %2021 = vmatpush1.msra.mxu0 %v1863
        %2022 = vmatprep.subr.mxu0 %v1872
        %2023 = vmatpush1.msra.mxu0 %v1871
        %2024 = vmatprep.subr.mxu0 %v1880
        %2025 = vmatpush1.msra.mxu0 %v1879
        %2026 = vmatprep.subr.mxu0 %v1888
        %2027 = vmatpush1.msra.mxu0 %v1887
        %2028 = vmatprep.mubr.f32.mxu0 %v1635
        %2029 = vmatmul.mubr.f32.gmra.mrb[0].mxu0 %v1634
        %v2030 = vpop.f32.mrb[0].mxu0
        %v2031 = vadd.f32 0.0, %v2030
        %v2032 = vpop.f32.mrb[0].mxu0
        %v2033 = vadd.f32 0.0, %v2032
        %2034 = vdwg.mxu0
        %2035 = vmatprep.subr.mxu0 %v1642
        %2036 = vmatpush1.msra.mxu0 %v1641
        %2037 = vmatprep.subr.mxu0 %v1650
        %2038 = vmatpush1.msra.mxu0 %v1649
        %2039 = vmatprep.subr.mxu0 %v1658
        %2040 = vmatpush1.msra.mxu0 %v1657
        %2041 = vmatprep.subr.mxu0 %v1666
        %2042 = vmatpush1.msra.mxu0 %v1665
        %2043 = vmatprep.subr.mxu0 %v1674
        %2044 = vmatpush1.msra.mxu0 %v1673
        %2045 = vmatprep.subr.mxu0 %v1682
        %2046 = vmatpush1.msra.mxu0 %v1681
        %2047 = vmatprep.subr.mxu0 %v1690
        %2048 = vmatpush1.msra.mxu0 %v1689
        %2049 = vmatprep.subr.mxu0 %v1698
        %2050 = vmatpush1.msra.mxu0 %v1697
        %2051 = vmatprep.subr.mxu0 %v1706
        %2052 = vmatpush1.msra.mxu0 %v1705
        %2053 = vmatprep.subr.mxu0 %v1714
        %2054 = vmatpush1.msra.mxu0 %v1713
        %2055 = vmatprep.subr.mxu0 %v1722
        %2056 = vmatpush1.msra.mxu0 %v1721
        %2057 = vmatprep.subr.mxu0 %v1730
        %2058 = vmatpush1.msra.mxu0 %v1729
        %2059 = vmatprep.subr.mxu0 %v1738
        %2060 = vmatpush1.msra.mxu0 %v1737
        %2061 = vmatprep.subr.mxu0 %v1746
        %2062 = vmatpush1.msra.mxu0 %v1745
        %2063 = vmatprep.subr.mxu0 %v1754
        %2064 = vmatpush1.msra.mxu0 %v1753
        %2065 = vmatprep.subr.mxu0 %v1762
        %2066 = vmatpush1.msra.mxu0 %v1761
        %2067 = vmatprep.subr.mxu0 %v1770
        %2068 = vmatpush1.msra.mxu0 %v1769
        %2069 = vmatprep.subr.mxu0 %v1778
        %2070 = vmatpush1.msra.mxu0 %v1777
        %2071 = vmatprep.subr.mxu0 %v1786
        %2072 = vmatpush1.msra.mxu0 %v1785
        %2073 = vmatprep.subr.mxu0 %v1794
        %2074 = vmatpush1.msra.mxu0 %v1793
        %2075 = vmatprep.subr.mxu0 %v1802
        %2076 = vmatpush1.msra.mxu0 %v1801
        %2077 = vmatprep.subr.mxu0 %v1810
        %2078 = vmatpush1.msra.mxu0 %v1809
        %2079 = vmatprep.subr.mxu0 %v1818
        %2080 = vmatpush1.msra.mxu0 %v1817
        %2081 = vmatprep.subr.mxu0 %v1826
        %2082 = vmatpush1.msra.mxu0 %v1825
        %2083 = vmatprep.subr.mxu0 %v1834
        %2084 = vmatpush1.msra.mxu0 %v1833
        %2085 = vmatprep.subr.mxu0 %v1842
        %2086 = vmatpush1.msra.mxu0 %v1841
        %2087 = vmatprep.subr.mxu0 %v1850
        %2088 = vmatpush1.msra.mxu0 %v1849
        %2089 = vmatprep.subr.mxu0 %v1858
        %2090 = vmatpush1.msra.mxu0 %v1857
        %2091 = vmatprep.subr.mxu0 %v1866
        %2092 = vmatpush1.msra.mxu0 %v1865
        %2093 = vmatprep.subr.mxu0 %v1874
        %2094 = vmatpush1.msra.mxu0 %v1873
        %2095 = vmatprep.subr.mxu0 %v1882
        %2096 = vmatpush1.msra.mxu0 %v1881
        %2097 = vmatprep.subr.mxu0 %v1890
        %2098 = vmatpush1.msra.mxu0 %v1889
        %2099 = vmatprep.mubr.f32.mxu0 %v1635
        %2100 = vmatmul.mubr.f32.gmra.mrb[0].mxu0 %v1634
        %v2101 = vpop.f32.mrb[0].mxu0
        %v2102 = vadd.f32 0.0, %v2101
        %v2103 = vpop.f32.mrb[0].mxu0
        %v2104 = vadd.f32 0.0, %v2103
        %2105 = vdwg.mxu0
        %2106 = vmatprep.subr.mxu0 %v1644
        %2107 = vmatpush1.msra.mxu0 %v1643
        %2108 = vmatprep.subr.mxu0 %v1652
        %2109 = vmatpush1.msra.mxu0 %v1651
        %2110 = vmatprep.subr.mxu0 %v1660
        %2111 = vmatpush1.msra.mxu0 %v1659
        %2112 = vmatprep.subr.mxu0 %v1668
        %2113 = vmatpush1.msra.mxu0 %v1667
        %2114 = vmatprep.subr.mxu0 %v1676
        %2115 = vmatpush1.msra.mxu0 %v1675
        %2116 = vmatprep.subr.mxu0 %v1684
        %2117 = vmatpush1.msra.mxu0 %v1683
        %2118 = vmatprep.subr.mxu0 %v1692
        %2119 = vmatpush1.msra.mxu0 %v1691
        %2120 = vmatprep.subr.mxu0 %v1700
        %2121 = vmatpush1.msra.mxu0 %v1699
        %2122 = vmatprep.subr.mxu0 %v1708
        %2123 = vmatpush1.msra.mxu0 %v1707
        %2124 = vmatprep.subr.mxu0 %v1716
        %2125 = vmatpush1.msra.mxu0 %v1715
        %2126 = vmatprep.subr.mxu0 %v1724
        %2127 = vmatpush1.msra.mxu0 %v1723
        %2128 = vmatprep.subr.mxu0 %v1732
        %2129 = vmatpush1.msra.mxu0 %v1731
        %2130 = vmatprep.subr.mxu0 %v1740
        %2131 = vmatpush1.msra.mxu0 %v1739
        %2132 = vmatprep.subr.mxu0 %v1748
        %2133 = vmatpush1.msra.mxu0 %v1747
        %2134 = vmatprep.subr.mxu0 %v1756
        %2135 = vmatpush1.msra.mxu0 %v1755
        %2136 = vmatprep.subr.mxu0 %v1764
        %2137 = vmatpush1.msra.mxu0 %v1763
        %2138 = vmatprep.subr.mxu0 %v1772
        %2139 = vmatpush1.msra.mxu0 %v1771
        %2140 = vmatprep.subr.mxu0 %v1780
        %2141 = vmatpush1.msra.mxu0 %v1779
        %2142 = vmatprep.subr.mxu0 %v1788
        %2143 = vmatpush1.msra.mxu0 %v1787
        %2144 = vmatprep.subr.mxu0 %v1796
        %2145 = vmatpush1.msra.mxu0 %v1795
        %2146 = vmatprep.subr.mxu0 %v1804
        %2147 = vmatpush1.msra.mxu0 %v1803
        %2148 = vmatprep.subr.mxu0 %v1812
        %2149 = vmatpush1.msra.mxu0 %v1811
        %2150 = vmatprep.subr.mxu0 %v1820
        %2151 = vmatpush1.msra.mxu0 %v1819
        %2152 = vmatprep.subr.mxu0 %v1828
        %2153 = vmatpush1.msra.mxu0 %v1827
        %2154 = vmatprep.subr.mxu0 %v1836
        %2155 = vmatpush1.msra.mxu0 %v1835
        %2156 = vmatprep.subr.mxu0 %v1844
        %2157 = vmatpush1.msra.mxu0 %v1843
        %2158 = vmatprep.subr.mxu0 %v1852
        %2159 = vmatpush1.msra.mxu0 %v1851
        %2160 = vmatprep.subr.mxu0 %v1860
        %2161 = vmatpush1.msra.mxu0 %v1859
        %2162 = vmatprep.subr.mxu0 %v1868
        %2163 = vmatpush1.msra.mxu0 %v1867
        %2164 = vmatprep.subr.mxu0 %v1876
        %2165 = vmatpush1.msra.mxu0 %v1875
        %2166 = vmatprep.subr.mxu0 %v1884
        %2167 = vmatpush1.msra.mxu0 %v1883
        %2168 = vmatprep.subr.mxu0 %v1892
        %2169 = vmatpush1.msra.mxu0 %v1891
        %2170 = vmatprep.mubr.f32.mxu0 %v1635
        %2171 = vmatmul.mubr.f32.gmra.mrb[0].mxu0 %v1634
        %v2172 = vpop.f32.mrb[0].mxu0
        %v2173 = vadd.f32 0.0, %v2172
        %v2174 = vpop.f32.mrb[0].mxu0
        %v2175 = vadd.f32 0.0, %v2174
        %2176 = vdwg.mxu0
        %v2177 = vadd.f32 %v1324, %v1960
        %v2178 = vadd.f32 %v1326, %v1962
        %v2179 = vadd.f32 %v1395, %v2031
        %v2180 = vadd.f32 %v1397, %v2033
        %v2181 = vadd.f32 %v1466, %v2102
        %v2182 = vadd.f32 %v1468, %v2104
        %v2183 = vadd.f32 %v1537, %v2173
        %v2184 = vadd.f32 %v1539, %v2175
        %s2185 = scalar_lea.vmem [#allocation5], 12
        %v2186 = vld [vmem:[%s2185] sm:$0xf]
        %s2187 = scalar_lea.vmem %s2, 12
        %v2188 = vld [vmem:[%s2187] sm:$0xf]
        %2190 = vset.pattern.permute.xlu0 0
        %2191 = vperm.xlu0 %2190, %v2188
        %v2192 = vpop.permute.xlu0 %2191
        %v2195 = vsel %vm273, %v2186, 0
        %2197 = vmatprep.subr.mxu0 %v280
        %2198 = vmatpush1.msra.mxu0 %v278
        %2199 = vmatprep.subr.mxu0 0.0
        %2200 = vmatpush1.msra.mxu0 0.0
        %2201 = vmatprep.subr.mxu0 0.0
        %2202 = vmatpush1.msra.mxu0 0.0
        %2203 = vmatprep.subr.mxu0 0.0
        %2204 = vmatpush1.msra.mxu0 0.0
        %2205 = vmatprep.subr.mxu0 0.0
        %2206 = vmatpush1.msra.mxu0 0.0
        %2207 = vmatprep.subr.mxu0 0.0
        %2208 = vmatpush1.msra.mxu0 0.0
        %2209 = vmatprep.subr.mxu0 0.0
        %2210 = vmatpush1.msra.mxu0 0.0
        %2211 = vmatprep.subr.mxu0 0.0
        %2212 = vmatpush1.msra.mxu0 0.0
        %2213 = vmatprep.subr.mxu0 0.0
        %2214 = vmatpush1.msra.mxu0 0.0
        %2215 = vmatprep.subr.mxu0 0.0
        %2216 = vmatpush1.msra.mxu0 0.0
        %2217 = vmatprep.subr.mxu0 0.0
        %2218 = vmatpush1.msra.mxu0 0.0
        %2219 = vmatprep.subr.mxu0 0.0
        %2220 = vmatpush1.msra.mxu0 0.0
        %2221 = vmatprep.subr.mxu0 0.0
        %2222 = vmatpush1.msra.mxu0 0.0
        %2223 = vmatprep.subr.mxu0 0.0
        %2224 = vmatpush1.msra.mxu0 0.0
        %2225 = vmatprep.subr.mxu0 0.0
        %2226 = vmatpush1.msra.mxu0 0.0
        %2227 = vmatprep.subr.mxu0 0.0
        %2228 = vmatpush1.msra.mxu0 0.0
        %2229 = vmatprep.subr.mxu0 0.0
        %2230 = vmatpush1.msra.mxu0 0.0
        %2231 = vmatprep.subr.mxu0 0.0
        %2232 = vmatpush1.msra.mxu0 0.0
        %2233 = vmatprep.subr.mxu0 0.0
        %2234 = vmatpush1.msra.mxu0 0.0
        %2235 = vmatprep.subr.mxu0 0.0
        %2236 = vmatpush1.msra.mxu0 0.0
        %2237 = vmatprep.subr.mxu0 0.0
        %2238 = vmatpush1.msra.mxu0 0.0
        %2239 = vmatprep.subr.mxu0 0.0
        %2240 = vmatpush1.msra.mxu0 0.0
        %2241 = vmatprep.subr.mxu0 0.0
        %2242 = vmatpush1.msra.mxu0 0.0
        %2243 = vmatprep.subr.mxu0 0.0
        %2244 = vmatpush1.msra.mxu0 0.0
        %2245 = vmatprep.subr.mxu0 0.0
        %2246 = vmatpush1.msra.mxu0 0.0
        %2247 = vmatprep.subr.mxu0 0.0
        %2248 = vmatpush1.msra.mxu0 0.0
        %2249 = vmatprep.subr.mxu0 0.0
        %2250 = vmatpush1.msra.mxu0 0.0
        %2251 = vmatprep.subr.mxu0 0.0
        %2252 = vmatpush1.msra.mxu0 0.0
        %2253 = vmatprep.subr.mxu0 0.0
        %2254 = vmatpush1.msra.mxu0 0.0
        %2255 = vmatprep.subr.mxu0 0.0
        %2256 = vmatpush1.msra.mxu0 0.0
        %2257 = vmatprep.subr.mxu0 0.0
        %2258 = vmatpush1.msra.mxu0 0.0
        %2259 = vmatprep.subr.mxu0 0.0
        %2260 = vmatpush1.msra.mxu0 0.0
        %2261 = vmatprep.mubr.f32.mxu0 0.0
        %2262 = vmatmul.mubr.f32.gmra.mrb[0].mxu0 %v2195
        %v2263 = vpop.f32.mrb[0].mxu0
        %v2264 = vadd.f32 %v2192, %v2263
        %v2265 = vpop.f32.mrb[0].mxu0
        %v2266 = vadd.f32 %v2192, %v2265
        %2267 = vdwg.mxu0
        %v2268 = vsub.f32 0.0, %v2264
        %v2269 = vsub.f32 0.0, %v2266
        %v2270 = vmul.f32 %v2268, 1.442695
        %v2271 = vpow.pop %v2270
        %v2272 = vmul.f32 %v2269, 1.442695
        %v2273 = vpow.pop %v2272
        %v2274 = vadd.f32 %v2271, 1.0
        %v2275 = vadd.f32 %v2273, 1.0
        %v2276 = vrcp.pop %v2274
        %v2277 = vrcp.pop %v2275
        %v2278 = vmul.f32 %v2264, %v2276
        %v2279 = vmul.f32 %v2266, %v2277
        %s2280 = scalar_lea.vmem [#allocation7], 6144
        %v2281 = vld [vmem:[%s2280] sm:$0xff]
        %v2282 = vld [vmem:[%s2280 + $0x8] sm:$0xff]
        %v2283 = vld [vmem:[%s2280 + $0x10] sm:$0xff]
        %v2284 = vld [vmem:[%s2280 + $0x18] sm:$0xff]
        %v2285 = vld [vmem:[%s2280 + $0x20] sm:$0xff]
        %v2286 = vld [vmem:[%s2280 + $0x28] sm:$0xff]
        %v2287 = vld [vmem:[%s2280 + $0x30] sm:$0xff]
        %v2288 = vld [vmem:[%s2280 + $0x38] sm:$0xff]
        %v2289 = vld [vmem:[%s2280 + $0x40] sm:$0xff]
        %v2290 = vld [vmem:[%s2280 + $0x48] sm:$0xff]
        %v2291 = vld [vmem:[%s2280 + $0x50] sm:$0xff]
        %v2292 = vld [vmem:[%s2280 + $0x58] sm:$0xff]
        %v2293 = vld [vmem:[%s2280 + $0x60] sm:$0xff]
        %v2294 = vld [vmem:[%s2280 + $0x68] sm:$0xff]
        %v2295 = vld [vmem:[%s2280 + $0x70] sm:$0xff]
        %v2296 = vld [vmem:[%s2280 + $0x78] sm:$0xff]
        %v2297 = vld [vmem:[%s2280 + $0x80] sm:$0xff]
        %v2298 = vld [vmem:[%s2280 + $0x88] sm:$0xff]
        %v2299 = vld [vmem:[%s2280 + $0x90] sm:$0xff]
        %v2300 = vld [vmem:[%s2280 + $0x98] sm:$0xff]
        %v2301 = vld [vmem:[%s2280 + $0xa0] sm:$0xff]
        %v2302 = vld [vmem:[%s2280 + $0xa8] sm:$0xff]
        %v2303 = vld [vmem:[%s2280 + $0xb0] sm:$0xff]
        %v2304 = vld [vmem:[%s2280 + $0xb8] sm:$0xff]
        %v2305 = vld [vmem:[%s2280 + $0xc0] sm:$0xff]
        %v2306 = vld [vmem:[%s2280 + $0xc8] sm:$0xff]
        %v2307 = vld [vmem:[%s2280 + $0xd0] sm:$0xff]
        %v2308 = vld [vmem:[%s2280 + $0xd8] sm:$0xff]
        %v2309 = vld [vmem:[%s2280 + $0xe0] sm:$0xff]
        %v2310 = vld [vmem:[%s2280 + $0xe8] sm:$0xff]
        %v2311 = vld [vmem:[%s2280 + $0xf0] sm:$0xff]
        %v2312 = vld [vmem:[%s2280 + $0xf8] sm:$0xff]
        %v2313 = vld [vmem:[%s2280 + $0x100] sm:$0xff]
        %v2314 = vld [vmem:[%s2280 + $0x108] sm:$0xff]
        %v2315 = vld [vmem:[%s2280 + $0x110] sm:$0xff]
        %v2316 = vld [vmem:[%s2280 + $0x118] sm:$0xff]
        %v2317 = vld [vmem:[%s2280 + $0x120] sm:$0xff]
        %v2318 = vld [vmem:[%s2280 + $0x128] sm:$0xff]
        %v2319 = vld [vmem:[%s2280 + $0x130] sm:$0xff]
        %v2320 = vld [vmem:[%s2280 + $0x138] sm:$0xff]
        %v2321 = vld [vmem:[%s2280 + $0x140] sm:$0xff]
        %v2322 = vld [vmem:[%s2280 + $0x148] sm:$0xff]
        %v2323 = vld [vmem:[%s2280 + $0x150] sm:$0xff]
        %v2324 = vld [vmem:[%s2280 + $0x158] sm:$0xff]
        %v2325 = vld [vmem:[%s2280 + $0x160] sm:$0xff]
        %v2326 = vld [vmem:[%s2280 + $0x168] sm:$0xff]
        %v2327 = vld [vmem:[%s2280 + $0x170] sm:$0xff]
        %v2328 = vld [vmem:[%s2280 + $0x178] sm:$0xff]
        %v2329 = vld [vmem:[%s2280 + $0x180] sm:$0xff]
        %v2330 = vld [vmem:[%s2280 + $0x188] sm:$0xff]
        %v2331 = vld [vmem:[%s2280 + $0x190] sm:$0xff]
        %v2332 = vld [vmem:[%s2280 + $0x198] sm:$0xff]
        %v2333 = vld [vmem:[%s2280 + $0x1a0] sm:$0xff]
        %v2334 = vld [vmem:[%s2280 + $0x1a8] sm:$0xff]
        %v2335 = vld [vmem:[%s2280 + $0x1b0] sm:$0xff]
        %v2336 = vld [vmem:[%s2280 + $0x1b8] sm:$0xff]
        %v2337 = vld [vmem:[%s2280 + $0x1c0] sm:$0xff]
        %v2338 = vld [vmem:[%s2280 + $0x1c8] sm:$0xff]
        %v2339 = vld [vmem:[%s2280 + $0x1d0] sm:$0xff]
        %v2340 = vld [vmem:[%s2280 + $0x1d8] sm:$0xff]
        %v2341 = vld [vmem:[%s2280 + $0x1e0] sm:$0xff]
        %v2342 = vld [vmem:[%s2280 + $0x1e8] sm:$0xff]
        %v2343 = vld [vmem:[%s2280 + $0x1f0] sm:$0xff]
        %v2344 = vld [vmem:[%s2280 + $0x1f8] sm:$0xff]
        %v2345 = vld [vmem:[%s2280 + $0x200] sm:$0xff]
        %v2346 = vld [vmem:[%s2280 + $0x208] sm:$0xff]
        %v2347 = vld [vmem:[%s2280 + $0x210] sm:$0xff]
        %v2348 = vld [vmem:[%s2280 + $0x218] sm:$0xff]
        %v2349 = vld [vmem:[%s2280 + $0x220] sm:$0xff]
        %v2350 = vld [vmem:[%s2280 + $0x228] sm:$0xff]
        %v2351 = vld [vmem:[%s2280 + $0x230] sm:$0xff]
        %v2352 = vld [vmem:[%s2280 + $0x238] sm:$0xff]
        %v2353 = vld [vmem:[%s2280 + $0x240] sm:$0xff]
        %v2354 = vld [vmem:[%s2280 + $0x248] sm:$0xff]
        %v2355 = vld [vmem:[%s2280 + $0x250] sm:$0xff]
        %v2356 = vld [vmem:[%s2280 + $0x258] sm:$0xff]
        %v2357 = vld [vmem:[%s2280 + $0x260] sm:$0xff]
        %v2358 = vld [vmem:[%s2280 + $0x268] sm:$0xff]
        %v2359 = vld [vmem:[%s2280 + $0x270] sm:$0xff]
        %v2360 = vld [vmem:[%s2280 + $0x278] sm:$0xff]
        %v2361 = vld [vmem:[%s2280 + $0x280] sm:$0xff]
        %v2362 = vld [vmem:[%s2280 + $0x288] sm:$0xff]
        %v2363 = vld [vmem:[%s2280 + $0x290] sm:$0xff]
        %v2364 = vld [vmem:[%s2280 + $0x298] sm:$0xff]
        %v2365 = vld [vmem:[%s2280 + $0x2a0] sm:$0xff]
        %v2366 = vld [vmem:[%s2280 + $0x2a8] sm:$0xff]
        %v2367 = vld [vmem:[%s2280 + $0x2b0] sm:$0xff]
        %v2368 = vld [vmem:[%s2280 + $0x2b8] sm:$0xff]
        %v2369 = vld [vmem:[%s2280 + $0x2c0] sm:$0xff]
        %v2370 = vld [vmem:[%s2280 + $0x2c8] sm:$0xff]
        %v2371 = vld [vmem:[%s2280 + $0x2d0] sm:$0xff]
        %v2372 = vld [vmem:[%s2280 + $0x2d8] sm:$0xff]
        %v2373 = vld [vmem:[%s2280 + $0x2e0] sm:$0xff]
        %v2374 = vld [vmem:[%s2280 + $0x2e8] sm:$0xff]
        %v2375 = vld [vmem:[%s2280 + $0x2f0] sm:$0xff]
        %v2376 = vld [vmem:[%s2280 + $0x2f8] sm:$0xff]
        %v2377 = vld [vmem:[%s2280 + $0x300] sm:$0xff]
        %v2378 = vld [vmem:[%s2280 + $0x308] sm:$0xff]
        %v2379 = vld [vmem:[%s2280 + $0x310] sm:$0xff]
        %v2380 = vld [vmem:[%s2280 + $0x318] sm:$0xff]
        %v2381 = vld [vmem:[%s2280 + $0x320] sm:$0xff]
        %v2382 = vld [vmem:[%s2280 + $0x328] sm:$0xff]
        %v2383 = vld [vmem:[%s2280 + $0x330] sm:$0xff]
        %v2384 = vld [vmem:[%s2280 + $0x338] sm:$0xff]
        %v2385 = vld [vmem:[%s2280 + $0x340] sm:$0xff]
        %v2386 = vld [vmem:[%s2280 + $0x348] sm:$0xff]
        %v2387 = vld [vmem:[%s2280 + $0x350] sm:$0xff]
        %v2388 = vld [vmem:[%s2280 + $0x358] sm:$0xff]
        %v2389 = vld [vmem:[%s2280 + $0x360] sm:$0xff]
        %v2390 = vld [vmem:[%s2280 + $0x368] sm:$0xff]
        %v2391 = vld [vmem:[%s2280 + $0x370] sm:$0xff]
        %v2392 = vld [vmem:[%s2280 + $0x378] sm:$0xff]
        %v2393 = vld [vmem:[%s2280 + $0x380] sm:$0xff]
        %v2394 = vld [vmem:[%s2280 + $0x388] sm:$0xff]
        %v2395 = vld [vmem:[%s2280 + $0x390] sm:$0xff]
        %v2396 = vld [vmem:[%s2280 + $0x398] sm:$0xff]
        %v2397 = vld [vmem:[%s2280 + $0x3a0] sm:$0xff]
        %v2398 = vld [vmem:[%s2280 + $0x3a8] sm:$0xff]
        %v2399 = vld [vmem:[%s2280 + $0x3b0] sm:$0xff]
        %v2400 = vld [vmem:[%s2280 + $0x3b8] sm:$0xff]
        %v2401 = vld [vmem:[%s2280 + $0x3c0] sm:$0xff]
        %v2402 = vld [vmem:[%s2280 + $0x3c8] sm:$0xff]
        %v2403 = vld [vmem:[%s2280 + $0x3d0] sm:$0xff]
        %v2404 = vld [vmem:[%s2280 + $0x3d8] sm:$0xff]
        %v2405 = vld [vmem:[%s2280 + $0x3e0] sm:$0xff]
        %v2406 = vld [vmem:[%s2280 + $0x3e8] sm:$0xff]
        %v2407 = vld [vmem:[%s2280 + $0x3f0] sm:$0xff]
        %v2408 = vld [vmem:[%s2280 + $0x3f8] sm:$0xff]
        %v2409 = vld [vmem:[%s2280 + $0x400] sm:$0xff]
        %v2410 = vld [vmem:[%s2280 + $0x408] sm:$0xff]
        %v2411 = vld [vmem:[%s2280 + $0x410] sm:$0xff]
        %v2412 = vld [vmem:[%s2280 + $0x418] sm:$0xff]
        %v2413 = vld [vmem:[%s2280 + $0x420] sm:$0xff]
        %v2414 = vld [vmem:[%s2280 + $0x428] sm:$0xff]
        %v2415 = vld [vmem:[%s2280 + $0x430] sm:$0xff]
        %v2416 = vld [vmem:[%s2280 + $0x438] sm:$0xff]
        %v2417 = vld [vmem:[%s2280 + $0x440] sm:$0xff]
        %v2418 = vld [vmem:[%s2280 + $0x448] sm:$0xff]
        %v2419 = vld [vmem:[%s2280 + $0x450] sm:$0xff]
        %v2420 = vld [vmem:[%s2280 + $0x458] sm:$0xff]
        %v2421 = vld [vmem:[%s2280 + $0x460] sm:$0xff]
        %v2422 = vld [vmem:[%s2280 + $0x468] sm:$0xff]
        %v2423 = vld [vmem:[%s2280 + $0x470] sm:$0xff]
        %v2424 = vld [vmem:[%s2280 + $0x478] sm:$0xff]
        %v2425 = vld [vmem:[%s2280 + $0x480] sm:$0xff]
        %v2426 = vld [vmem:[%s2280 + $0x488] sm:$0xff]
        %v2427 = vld [vmem:[%s2280 + $0x490] sm:$0xff]
        %v2428 = vld [vmem:[%s2280 + $0x498] sm:$0xff]
        %v2429 = vld [vmem:[%s2280 + $0x4a0] sm:$0xff]
        %v2430 = vld [vmem:[%s2280 + $0x4a8] sm:$0xff]
        %v2431 = vld [vmem:[%s2280 + $0x4b0] sm:$0xff]
        %v2432 = vld [vmem:[%s2280 + $0x4b8] sm:$0xff]
        %v2433 = vld [vmem:[%s2280 + $0x4c0] sm:$0xff]
        %v2434 = vld [vmem:[%s2280 + $0x4c8] sm:$0xff]
        %v2435 = vld [vmem:[%s2280 + $0x4d0] sm:$0xff]
        %v2436 = vld [vmem:[%s2280 + $0x4d8] sm:$0xff]
        %v2437 = vld [vmem:[%s2280 + $0x4e0] sm:$0xff]
        %v2438 = vld [vmem:[%s2280 + $0x4e8] sm:$0xff]
        %v2439 = vld [vmem:[%s2280 + $0x4f0] sm:$0xff]
        %v2440 = vld [vmem:[%s2280 + $0x4f8] sm:$0xff]
        %v2441 = vld [vmem:[%s2280 + $0x500] sm:$0xff]
        %v2442 = vld [vmem:[%s2280 + $0x508] sm:$0xff]
        %v2443 = vld [vmem:[%s2280 + $0x510] sm:$0xff]
        %v2444 = vld [vmem:[%s2280 + $0x518] sm:$0xff]
        %v2445 = vld [vmem:[%s2280 + $0x520] sm:$0xff]
        %v2446 = vld [vmem:[%s2280 + $0x528] sm:$0xff]
        %v2447 = vld [vmem:[%s2280 + $0x530] sm:$0xff]
        %v2448 = vld [vmem:[%s2280 + $0x538] sm:$0xff]
        %v2449 = vld [vmem:[%s2280 + $0x540] sm:$0xff]
        %v2450 = vld [vmem:[%s2280 + $0x548] sm:$0xff]
        %v2451 = vld [vmem:[%s2280 + $0x550] sm:$0xff]
        %v2452 = vld [vmem:[%s2280 + $0x558] sm:$0xff]
        %v2453 = vld [vmem:[%s2280 + $0x560] sm:$0xff]
        %v2454 = vld [vmem:[%s2280 + $0x568] sm:$0xff]
        %v2455 = vld [vmem:[%s2280 + $0x570] sm:$0xff]
        %v2456 = vld [vmem:[%s2280 + $0x578] sm:$0xff]
        %v2457 = vld [vmem:[%s2280 + $0x580] sm:$0xff]
        %v2458 = vld [vmem:[%s2280 + $0x588] sm:$0xff]
        %v2459 = vld [vmem:[%s2280 + $0x590] sm:$0xff]
        %v2460 = vld [vmem:[%s2280 + $0x598] sm:$0xff]
        %v2461 = vld [vmem:[%s2280 + $0x5a0] sm:$0xff]
        %v2462 = vld [vmem:[%s2280 + $0x5a8] sm:$0xff]
        %v2463 = vld [vmem:[%s2280 + $0x5b0] sm:$0xff]
        %v2464 = vld [vmem:[%s2280 + $0x5b8] sm:$0xff]
        %v2465 = vld [vmem:[%s2280 + $0x5c0] sm:$0xff]
        %v2466 = vld [vmem:[%s2280 + $0x5c8] sm:$0xff]
        %v2467 = vld [vmem:[%s2280 + $0x5d0] sm:$0xff]
        %v2468 = vld [vmem:[%s2280 + $0x5d8] sm:$0xff]
        %v2469 = vld [vmem:[%s2280 + $0x5e0] sm:$0xff]
        %v2470 = vld [vmem:[%s2280 + $0x5e8] sm:$0xff]
        %v2471 = vld [vmem:[%s2280 + $0x5f0] sm:$0xff]
        %v2472 = vld [vmem:[%s2280 + $0x5f8] sm:$0xff]
        %v2473 = vld [vmem:[%s2280 + $0x600] sm:$0xff]
        %v2474 = vld [vmem:[%s2280 + $0x608] sm:$0xff]
        %v2475 = vld [vmem:[%s2280 + $0x610] sm:$0xff]
        %v2476 = vld [vmem:[%s2280 + $0x618] sm:$0xff]
        %v2477 = vld [vmem:[%s2280 + $0x620] sm:$0xff]
        %v2478 = vld [vmem:[%s2280 + $0x628] sm:$0xff]
        %v2479 = vld [vmem:[%s2280 + $0x630] sm:$0xff]
        %v2480 = vld [vmem:[%s2280 + $0x638] sm:$0xff]
        %v2481 = vld [vmem:[%s2280 + $0x640] sm:$0xff]
        %v2482 = vld [vmem:[%s2280 + $0x648] sm:$0xff]
        %v2483 = vld [vmem:[%s2280 + $0x650] sm:$0xff]
        %v2484 = vld [vmem:[%s2280 + $0x658] sm:$0xff]
        %v2485 = vld [vmem:[%s2280 + $0x660] sm:$0xff]
        %v2486 = vld [vmem:[%s2280 + $0x668] sm:$0xff]
        %v2487 = vld [vmem:[%s2280 + $0x670] sm:$0xff]
        %v2488 = vld [vmem:[%s2280 + $0x678] sm:$0xff]
        %v2489 = vld [vmem:[%s2280 + $0x680] sm:$0xff]
        %v2490 = vld [vmem:[%s2280 + $0x688] sm:$0xff]
        %v2491 = vld [vmem:[%s2280 + $0x690] sm:$0xff]
        %v2492 = vld [vmem:[%s2280 + $0x698] sm:$0xff]
        %v2493 = vld [vmem:[%s2280 + $0x6a0] sm:$0xff]
        %v2494 = vld [vmem:[%s2280 + $0x6a8] sm:$0xff]
        %v2495 = vld [vmem:[%s2280 + $0x6b0] sm:$0xff]
        %v2496 = vld [vmem:[%s2280 + $0x6b8] sm:$0xff]
        %v2497 = vld [vmem:[%s2280 + $0x6c0] sm:$0xff]
        %v2498 = vld [vmem:[%s2280 + $0x6c8] sm:$0xff]
        %v2499 = vld [vmem:[%s2280 + $0x6d0] sm:$0xff]
        %v2500 = vld [vmem:[%s2280 + $0x6d8] sm:$0xff]
        %v2501 = vld [vmem:[%s2280 + $0x6e0] sm:$0xff]
        %v2502 = vld [vmem:[%s2280 + $0x6e8] sm:$0xff]
        %v2503 = vld [vmem:[%s2280 + $0x6f0] sm:$0xff]
        %v2504 = vld [vmem:[%s2280 + $0x6f8] sm:$0xff]
        %v2505 = vld [vmem:[%s2280 + $0x700] sm:$0xff]
        %v2506 = vld [vmem:[%s2280 + $0x708] sm:$0xff]
        %v2507 = vld [vmem:[%s2280 + $0x710] sm:$0xff]
        %v2508 = vld [vmem:[%s2280 + $0x718] sm:$0xff]
        %v2509 = vld [vmem:[%s2280 + $0x720] sm:$0xff]
        %v2510 = vld [vmem:[%s2280 + $0x728] sm:$0xff]
        %v2511 = vld [vmem:[%s2280 + $0x730] sm:$0xff]
        %v2512 = vld [vmem:[%s2280 + $0x738] sm:$0xff]
        %v2513 = vld [vmem:[%s2280 + $0x740] sm:$0xff]
        %v2514 = vld [vmem:[%s2280 + $0x748] sm:$0xff]
        %v2515 = vld [vmem:[%s2280 + $0x750] sm:$0xff]
        %v2516 = vld [vmem:[%s2280 + $0x758] sm:$0xff]
        %v2517 = vld [vmem:[%s2280 + $0x760] sm:$0xff]
        %v2518 = vld [vmem:[%s2280 + $0x768] sm:$0xff]
        %v2519 = vld [vmem:[%s2280 + $0x770] sm:$0xff]
        %v2520 = vld [vmem:[%s2280 + $0x778] sm:$0xff]
        %v2521 = vld [vmem:[%s2280 + $0x780] sm:$0xff]
        %v2522 = vld [vmem:[%s2280 + $0x788] sm:$0xff]
        %v2523 = vld [vmem:[%s2280 + $0x790] sm:$0xff]
        %v2524 = vld [vmem:[%s2280 + $0x798] sm:$0xff]
        %v2525 = vld [vmem:[%s2280 + $0x7a0] sm:$0xff]
        %v2526 = vld [vmem:[%s2280 + $0x7a8] sm:$0xff]
        %v2527 = vld [vmem:[%s2280 + $0x7b0] sm:$0xff]
        %v2528 = vld [vmem:[%s2280 + $0x7b8] sm:$0xff]
        %v2529 = vld [vmem:[%s2280 + $0x7c0] sm:$0xff]
        %v2530 = vld [vmem:[%s2280 + $0x7c8] sm:$0xff]
        %v2531 = vld [vmem:[%s2280 + $0x7d0] sm:$0xff]
        %v2532 = vld [vmem:[%s2280 + $0x7d8] sm:$0xff]
        %v2533 = vld [vmem:[%s2280 + $0x7e0] sm:$0xff]
        %v2534 = vld [vmem:[%s2280 + $0x7e8] sm:$0xff]
        %v2535 = vld [vmem:[%s2280 + $0x7f0] sm:$0xff]
        %v2536 = vld [vmem:[%s2280 + $0x7f8] sm:$0xff]
        %2537 = vmatprep.subr.mxu0 %v2282
        %2538 = vmatpush1.msra.mxu0 %v2281
        %2539 = vmatprep.subr.mxu0 %v2290
        %2540 = vmatpush1.msra.mxu0 %v2289
        %2541 = vmatprep.subr.mxu0 %v2298
        %2542 = vmatpush1.msra.mxu0 %v2297
        %2543 = vmatprep.subr.mxu0 %v2306
        %2544 = vmatpush1.msra.mxu0 %v2305
        %2545 = vmatprep.subr.mxu0 %v2314
        %2546 = vmatpush1.msra.mxu0 %v2313
        %2547 = vmatprep.subr.mxu0 %v2322
        %2548 = vmatpush1.msra.mxu0 %v2321
        %2549 = vmatprep.subr.mxu0 %v2330
        %2550 = vmatpush1.msra.mxu0 %v2329
        %2551 = vmatprep.subr.mxu0 %v2338
        %2552 = vmatpush1.msra.mxu0 %v2337
        %2553 = vmatprep.subr.mxu0 %v2346
        %2554 = vmatpush1.msra.mxu0 %v2345
        %2555 = vmatprep.subr.mxu0 %v2354
        %2556 = vmatpush1.msra.mxu0 %v2353
        %2557 = vmatprep.subr.mxu0 %v2362
        %2558 = vmatpush1.msra.mxu0 %v2361
        %2559 = vmatprep.subr.mxu0 %v2370
        %2560 = vmatpush1.msra.mxu0 %v2369
        %2561 = vmatprep.subr.mxu0 %v2378
        %2562 = vmatpush1.msra.mxu0 %v2377
        %2563 = vmatprep.subr.mxu0 %v2386
        %2564 = vmatpush1.msra.mxu0 %v2385
        %2565 = vmatprep.subr.mxu0 %v2394
        %2566 = vmatpush1.msra.mxu0 %v2393
        %2567 = vmatprep.subr.mxu0 %v2402
        %2568 = vmatpush1.msra.mxu0 %v2401
        %2569 = vmatprep.subr.mxu0 %v2410
        %2570 = vmatpush1.msra.mxu0 %v2409
        %2571 = vmatprep.subr.mxu0 %v2418
        %2572 = vmatpush1.msra.mxu0 %v2417
        %2573 = vmatprep.subr.mxu0 %v2426
        %2574 = vmatpush1.msra.mxu0 %v2425
        %2575 = vmatprep.subr.mxu0 %v2434
        %2576 = vmatpush1.msra.mxu0 %v2433
        %2577 = vmatprep.subr.mxu0 %v2442
        %2578 = vmatpush1.msra.mxu0 %v2441
        %2579 = vmatprep.subr.mxu0 %v2450
        %2580 = vmatpush1.msra.mxu0 %v2449
        %2581 = vmatprep.subr.mxu0 %v2458
        %2582 = vmatpush1.msra.mxu0 %v2457
        %2583 = vmatprep.subr.mxu0 %v2466
        %2584 = vmatpush1.msra.mxu0 %v2465
        %2585 = vmatprep.subr.mxu0 %v2474
        %2586 = vmatpush1.msra.mxu0 %v2473
        %2587 = vmatprep.subr.mxu0 %v2482
        %2588 = vmatpush1.msra.mxu0 %v2481
        %2589 = vmatprep.subr.mxu0 %v2490
        %2590 = vmatpush1.msra.mxu0 %v2489
        %2591 = vmatprep.subr.mxu0 %v2498
        %2592 = vmatpush1.msra.mxu0 %v2497
        %2593 = vmatprep.subr.mxu0 %v2506
        %2594 = vmatpush1.msra.mxu0 %v2505
        %2595 = vmatprep.subr.mxu0 %v2514
        %2596 = vmatpush1.msra.mxu0 %v2513
        %2597 = vmatprep.subr.mxu0 %v2522
        %2598 = vmatpush1.msra.mxu0 %v2521
        %2599 = vmatprep.subr.mxu0 %v2530
        %2600 = vmatpush1.msra.mxu0 %v2529
        %2601 = vmatprep.mubr.f32.mxu0 %v2279
        %2602 = vmatmul.mubr.f32.gmra.mrb[0].mxu0 %v2278
        %v2603 = vpop.f32.mrb[0].mxu0
        %v2604 = vadd.f32 0.0, %v2603
        %v2605 = vpop.f32.mrb[0].mxu0
        %v2606 = vadd.f32 0.0, %v2605
        %2607 = vdwg.mxu0
        %2608 = vmatprep.subr.mxu0 %v2284
        %2609 = vmatpush1.msra.mxu0 %v2283
        %2610 = vmatprep.subr.mxu0 %v2292
        %2611 = vmatpush1.msra.mxu0 %v2291
        %2612 = vmatprep.subr.mxu0 %v2300
        %2613 = vmatpush1.msra.mxu0 %v2299
        %2614 = vmatprep.subr.mxu0 %v2308
        %2615 = vmatpush1.msra.mxu0 %v2307
        %2616 = vmatprep.subr.mxu0 %v2316
        %2617 = vmatpush1.msra.mxu0 %v2315
        %2618 = vmatprep.subr.mxu0 %v2324
        %2619 = vmatpush1.msra.mxu0 %v2323
        %2620 = vmatprep.subr.mxu0 %v2332
        %2621 = vmatpush1.msra.mxu0 %v2331
        %2622 = vmatprep.subr.mxu0 %v2340
        %2623 = vmatpush1.msra.mxu0 %v2339
        %2624 = vmatprep.subr.mxu0 %v2348
        %2625 = vmatpush1.msra.mxu0 %v2347
        %2626 = vmatprep.subr.mxu0 %v2356
        %2627 = vmatpush1.msra.mxu0 %v2355
        %2628 = vmatprep.subr.mxu0 %v2364
        %2629 = vmatpush1.msra.mxu0 %v2363
        %2630 = vmatprep.subr.mxu0 %v2372
        %2631 = vmatpush1.msra.mxu0 %v2371
        %2632 = vmatprep.subr.mxu0 %v2380
        %2633 = vmatpush1.msra.mxu0 %v2379
        %2634 = vmatprep.subr.mxu0 %v2388
        %2635 = vmatpush1.msra.mxu0 %v2387
        %2636 = vmatprep.subr.mxu0 %v2396
        %2637 = vmatpush1.msra.mxu0 %v2395
        %2638 = vmatprep.subr.mxu0 %v2404
        %2639 = vmatpush1.msra.mxu0 %v2403
        %2640 = vmatprep.subr.mxu0 %v2412
        %2641 = vmatpush1.msra.mxu0 %v2411
        %2642 = vmatprep.subr.mxu0 %v2420
        %2643 = vmatpush1.msra.mxu0 %v2419
        %2644 = vmatprep.subr.mxu0 %v2428
        %2645 = vmatpush1.msra.mxu0 %v2427
        %2646 = vmatprep.subr.mxu0 %v2436
        %2647 = vmatpush1.msra.mxu0 %v2435
        %2648 = vmatprep.subr.mxu0 %v2444
        %2649 = vmatpush1.msra.mxu0 %v2443
        %2650 = vmatprep.subr.mxu0 %v2452
        %2651 = vmatpush1.msra.mxu0 %v2451
        %2652 = vmatprep.subr.mxu0 %v2460
        %2653 = vmatpush1.msra.mxu0 %v2459
        %2654 = vmatprep.subr.mxu0 %v2468
        %2655 = vmatpush1.msra.mxu0 %v2467
        %2656 = vmatprep.subr.mxu0 %v2476
        %2657 = vmatpush1.msra.mxu0 %v2475
        %2658 = vmatprep.subr.mxu0 %v2484
        %2659 = vmatpush1.msra.mxu0 %v2483
        %2660 = vmatprep.subr.mxu0 %v2492
        %2661 = vmatpush1.msra.mxu0 %v2491
        %2662 = vmatprep.subr.mxu0 %v2500
        %2663 = vmatpush1.msra.mxu0 %v2499
        %2664 = vmatprep.subr.mxu0 %v2508
        %2665 = vmatpush1.msra.mxu0 %v2507
        %2666 = vmatprep.subr.mxu0 %v2516
        %2667 = vmatpush1.msra.mxu0 %v2515
        %2668 = vmatprep.subr.mxu0 %v2524
        %2669 = vmatpush1.msra.mxu0 %v2523
        %2670 = vmatprep.subr.mxu0 %v2532
        %2671 = vmatpush1.msra.mxu0 %v2531
        %2672 = vmatprep.mubr.f32.mxu0 %v2279
        %2673 = vmatmul.mubr.f32.gmra.mrb[0].mxu0 %v2278
        %v2674 = vpop.f32.mrb[0].mxu0
        %v2675 = vadd.f32 0.0, %v2674
        %v2676 = vpop.f32.mrb[0].mxu0
        %v2677 = vadd.f32 0.0, %v2676
        %2678 = vdwg.mxu0
        %2679 = vmatprep.subr.mxu0 %v2286
        %2680 = vmatpush1.msra.mxu0 %v2285
        %2681 = vmatprep.subr.mxu0 %v2294
        %2682 = vmatpush1.msra.mxu0 %v2293
        %2683 = vmatprep.subr.mxu0 %v2302
        %2684 = vmatpush1.msra.mxu0 %v2301
        %2685 = vmatprep.subr.mxu0 %v2310
        %2686 = vmatpush1.msra.mxu0 %v2309
        %2687 = vmatprep.subr.mxu0 %v2318
        %2688 = vmatpush1.msra.mxu0 %v2317
        %2689 = vmatprep.subr.mxu0 %v2326
        %2690 = vmatpush1.msra.mxu0 %v2325
        %2691 = vmatprep.subr.mxu0 %v2334
        %2692 = vmatpush1.msra.mxu0 %v2333
        %2693 = vmatprep.subr.mxu0 %v2342
        %2694 = vmatpush1.msra.mxu0 %v2341
        %2695 = vmatprep.subr.mxu0 %v2350
        %2696 = vmatpush1.msra.mxu0 %v2349
        %2697 = vmatprep.subr.mxu0 %v2358
        %2698 = vmatpush1.msra.mxu0 %v2357
        %2699 = vmatprep.subr.mxu0 %v2366
        %2700 = vmatpush1.msra.mxu0 %v2365
        %2701 = vmatprep.subr.mxu0 %v2374
        %2702 = vmatpush1.msra.mxu0 %v2373
        %2703 = vmatprep.subr.mxu0 %v2382
        %2704 = vmatpush1.msra.mxu0 %v2381
        %2705 = vmatprep.subr.mxu0 %v2390
        %2706 = vmatpush1.msra.mxu0 %v2389
        %2707 = vmatprep.subr.mxu0 %v2398
        %2708 = vmatpush1.msra.mxu0 %v2397
        %2709 = vmatprep.subr.mxu0 %v2406
        %2710 = vmatpush1.msra.mxu0 %v2405
        %2711 = vmatprep.subr.mxu0 %v2414
        %2712 = vmatpush1.msra.mxu0 %v2413
        %2713 = vmatprep.subr.mxu0 %v2422
        %2714 = vmatpush1.msra.mxu0 %v2421
        %2715 = vmatprep.subr.mxu0 %v2430
        %2716 = vmatpush1.msra.mxu0 %v2429
        %2717 = vmatprep.subr.mxu0 %v2438
        %2718 = vmatpush1.msra.mxu0 %v2437
        %2719 = vmatprep.subr.mxu0 %v2446
        %2720 = vmatpush1.msra.mxu0 %v2445
        %2721 = vmatprep.subr.mxu0 %v2454
        %2722 = vmatpush1.msra.mxu0 %v2453
        %2723 = vmatprep.subr.mxu0 %v2462
        %2724 = vmatpush1.msra.mxu0 %v2461
        %2725 = vmatprep.subr.mxu0 %v2470
        %2726 = vmatpush1.msra.mxu0 %v2469
        %2727 = vmatprep.subr.mxu0 %v2478
        %2728 = vmatpush1.msra.mxu0 %v2477
        %2729 = vmatprep.subr.mxu0 %v2486
        %2730 = vmatpush1.msra.mxu0 %v2485
        %2731 = vmatprep.subr.mxu0 %v2494
        %2732 = vmatpush1.msra.mxu0 %v2493
        %2733 = vmatprep.subr.mxu0 %v2502
        %2734 = vmatpush1.msra.mxu0 %v2501
        %2735 = vmatprep.subr.mxu0 %v2510
        %2736 = vmatpush1.msra.mxu0 %v2509
        %2737 = vmatprep.subr.mxu0 %v2518
        %2738 = vmatpush1.msra.mxu0 %v2517
        %2739 = vmatprep.subr.mxu0 %v2526
        %2740 = vmatpush1.msra.mxu0 %v2525
        %2741 = vmatprep.subr.mxu0 %v2534
        %2742 = vmatpush1.msra.mxu0 %v2533
        %2743 = vmatprep.mubr.f32.mxu0 %v2279
        %2744 = vmatmul.mubr.f32.gmra.mrb[0].mxu0 %v2278
        %v2745 = vpop.f32.mrb[0].mxu0
        %v2746 = vadd.f32 0.0, %v2745
        %v2747 = vpop.f32.mrb[0].mxu0
        %v2748 = vadd.f32 0.0, %v2747
        %2749 = vdwg.mxu0
        %2750 = vmatprep.subr.mxu0 %v2288
        %2751 = vmatpush1.msra.mxu0 %v2287
        %2752 = vmatprep.subr.mxu0 %v2296
        %2753 = vmatpush1.msra.mxu0 %v2295
        %2754 = vmatprep.subr.mxu0 %v2304
        %2755 = vmatpush1.msra.mxu0 %v2303
        %2756 = vmatprep.subr.mxu0 %v2312
        %2757 = vmatpush1.msra.mxu0 %v2311
        %2758 = vmatprep.subr.mxu0 %v2320
        %2759 = vmatpush1.msra.mxu0 %v2319
        %2760 = vmatprep.subr.mxu0 %v2328
        %2761 = vmatpush1.msra.mxu0 %v2327
        %2762 = vmatprep.subr.mxu0 %v2336
        %2763 = vmatpush1.msra.mxu0 %v2335
        %2764 = vmatprep.subr.mxu0 %v2344
        %2765 = vmatpush1.msra.mxu0 %v2343
        %2766 = vmatprep.subr.mxu0 %v2352
        %2767 = vmatpush1.msra.mxu0 %v2351
        %2768 = vmatprep.subr.mxu0 %v2360
        %2769 = vmatpush1.msra.mxu0 %v2359
        %2770 = vmatprep.subr.mxu0 %v2368
        %2771 = vmatpush1.msra.mxu0 %v2367
        %2772 = vmatprep.subr.mxu0 %v2376
        %2773 = vmatpush1.msra.mxu0 %v2375
        %2774 = vmatprep.subr.mxu0 %v2384
        %2775 = vmatpush1.msra.mxu0 %v2383
        %2776 = vmatprep.subr.mxu0 %v2392
        %2777 = vmatpush1.msra.mxu0 %v2391
        %2778 = vmatprep.subr.mxu0 %v2400
        %2779 = vmatpush1.msra.mxu0 %v2399
        %2780 = vmatprep.subr.mxu0 %v2408
        %2781 = vmatpush1.msra.mxu0 %v2407
        %2782 = vmatprep.subr.mxu0 %v2416
        %2783 = vmatpush1.msra.mxu0 %v2415
        %2784 = vmatprep.subr.mxu0 %v2424
        %2785 = vmatpush1.msra.mxu0 %v2423
        %2786 = vmatprep.subr.mxu0 %v2432
        %2787 = vmatpush1.msra.mxu0 %v2431
        %2788 = vmatprep.subr.mxu0 %v2440
        %2789 = vmatpush1.msra.mxu0 %v2439
        %2790 = vmatprep.subr.mxu0 %v2448
        %2791 = vmatpush1.msra.mxu0 %v2447
        %2792 = vmatprep.subr.mxu0 %v2456
        %2793 = vmatpush1.msra.mxu0 %v2455
        %2794 = vmatprep.subr.mxu0 %v2464
        %2795 = vmatpush1.msra.mxu0 %v2463
        %2796 = vmatprep.subr.mxu0 %v2472
        %2797 = vmatpush1.msra.mxu0 %v2471
        %2798 = vmatprep.subr.mxu0 %v2480
        %2799 = vmatpush1.msra.mxu0 %v2479
        %2800 = vmatprep.subr.mxu0 %v2488
        %2801 = vmatpush1.msra.mxu0 %v2487
        %2802 = vmatprep.subr.mxu0 %v2496
        %2803 = vmatpush1.msra.mxu0 %v2495
        %2804 = vmatprep.subr.mxu0 %v2504
        %2805 = vmatpush1.msra.mxu0 %v2503
        %2806 = vmatprep.subr.mxu0 %v2512
        %2807 = vmatpush1.msra.mxu0 %v2511
        %2808 = vmatprep.subr.mxu0 %v2520
        %2809 = vmatpush1.msra.mxu0 %v2519
        %2810 = vmatprep.subr.mxu0 %v2528
        %2811 = vmatpush1.msra.mxu0 %v2527
        %2812 = vmatprep.subr.mxu0 %v2536
        %2813 = vmatpush1.msra.mxu0 %v2535
        %2814 = vmatprep.mubr.f32.mxu0 %v2279
        %2815 = vmatmul.mubr.f32.gmra.mrb[0].mxu0 %v2278
        %v2816 = vpop.f32.mrb[0].mxu0
        %v2817 = vadd.f32 0.0, %v2816
        %v2818 = vpop.f32.mrb[0].mxu0
        %v2819 = vadd.f32 0.0, %v2818
        %2820 = vdwg.mxu0
        %v2821 = vadd.f32 %v2177, %v2604
        %v2822 = vadd.f32 %v2178, %v2606
        %v2823 = vadd.f32 %v2179, %v2675
        %v2824 = vadd.f32 %v2180, %v2677
        %v2825 = vadd.f32 %v2181, %v2746
        %v2826 = vadd.f32 %v2182, %v2748
        %v2827 = vadd.f32 %v2183, %v2817
        %v2828 = vadd.f32 %v2184, %v2819
        %v2837 = vcombine.low %v2821, %v2822
        %v2838 = vcombine.low %v2823, %v2824
        %v2839 = vcombine.low %v2825, %v2826
        %v2840 = vcombine.low %v2827, %v2828
        %2845 = vst [vmem:[%s260] sm:$0xff] %v2837
        %2846 = vst [vmem:[%s260 + $0x8] sm:$0xff] %v2838
        %2847 = vst [vmem:[%s260 + $0x10] sm:$0xff] %v2839
        %2848 = vst [vmem:[%s260 + $0x18] sm:$0xff] %v2840
        %s2849 = sand.u32 %s135, 1
        %s2850 = scalar_lea.sflag [#allocation4], %s2849
        %s2851 = sand.u32 %s135, 1
        %s2852 = smul.addr %s2851, 32
        %s2853 = scalar_lea.vmem [#allocation8], %s2852
        // Predicated region
        $region49: #{tpu_custom_call.1} parent=35 // pred_check
          %p2854 = pneg %p145
        $region50: #{tpu_custom_call.1} parent=35 // pred_check_branch
          %2856 = sbr.rel (%p2854) target = $region52
        $region51: #{tpu_custom_call.1} parent=35 // pred_region
          %s2857 = smul.u32 8, %s27
          %s2859 = ssub.s32 512, 512
          %2860 = vsyncadd %s2850, %s2859
          %s2861 = smul.addr %s26, 8
          %s2862 = sadd.s32 %s2857, %s2861
          %s2863 = smul.addr %s2862, 64
          %s2864 = scalar_lea.hbm %s4, %s2863
          %s2866 = sshll.u32 %s2853, 4
          %s2867 = int_to_ptr.vmem [resolvable:$true] %s2866
          %2869 = dma.vmem_to_hbm [thread:$0]  %s2867, 512, %s2864, %s2850
        $region52: #{tpu_custom_call.1} parent=35 // pred_fallthru
          _
      $region36: #{tpu_custom_call.1} parent=5 // pred_fallthru
        _
      %p2870 = scmp.le.s32.totalorder 2, %s17
      // Predicated region
      $region53: #{tpu_custom_call.1} parent=5 // pred_check
        %p2871 = pneg %p2870
      $region54: #{tpu_custom_call.1} parent=5 // pred_check_branch
        %2873 = sbr.rel (%p2871) target = $region56
      $region55: #{tpu_custom_call.1} parent=5 // pred_region
        %s2874 = ssub.s32 %s17, 2
        // Predicated region
        $region57: #{tpu_custom_call.1} parent=55 // pred_check
          %p2875 = pneg %p151
        $region58: #{tpu_custom_call.1} parent=55 // pred_check_branch
          %2877 = sbr.rel (%p2875) target = $region60
        $region59: #{tpu_custom_call.1} parent=55 // pred_region
          %s2878 = sand.u32 %s136, 1
          %s2879 = scalar_lea.sflag [#allocation4], %s2878
          %s2880 = sand.u32 %s136, 1
          %s2881 = smul.addr %s2880, 32
          %s2882 = scalar_lea.vmem [#allocation8], %s2881
          %2883 = dma.done %s2879, 512
        $region60: #{tpu_custom_call.1} parent=55 // pred_fallthru
          _
      $region56: #{tpu_custom_call.1} parent=5 // pred_fallthru
        _
    $region6: #{tpu_custom_call.1} parent=1 // loop_footer
      %s21 = sadd.s32 1, %s17
    $region7: #{tpu_custom_call.1} parent=1 // loop_footer_branch
      %16 = sbr.rel target = $region3
    $region8: #{tpu_custom_call.1} parent=1 // loop_exit
      _
    %2884 = vsyncpa [#allocation3], 1
    %s2885 = scalar_lea.sflag [#allocation3], 1
    %2886 = vsyncpa %s2885, 1
    %2887 = vsyncpa [#allocation6], 1
    %2888 = vsyncpa [#allocation4], 1
    %s2889 = scalar_lea.sflag [#allocation4], 1
    %2890 = vsyncpa %s2889, 1

</llo_original>
